<compile_context>
chip_gen: v7x
topology: tpu7x:2x2x1
jax: 0.10.0
libtpu: 0.0.40
codegen_flags: <defaults>
</compile_context>

<pallas_src>
import random

import jax
import jax.numpy as jnp
from jax.experimental import pallas as pl
from jax.experimental.pallas import tpu as pltpu


# ----------------------------- fused Pallas kernel ----------------------------

def seq2seq_kernel(tf_ref,                        # SMEM scalar-prefetch: (T,) int32 TF flips
                   src_emb_ref,                   # (L, B, E) source embeddings  (resident)
                   tgt_emb_ref,                   # (T, B, E) target embeddings  (resident)
                   ewih_ref, ewhh_ref, eb_ref,    # encoder LSTM (E,4H), (H,4H), (1,4H)
                   dwih_ref, dwhh_ref, db_ref,    # decoder LSTM (E,4H), (H,4H), (1,4H)
                   demb_ref,                      # (V, E) decoder embedding table (greedy path)
                   wfc_ref, bfc_ref,              # (H, V), (1, V) vocab projection
                   out_ref):                      # (T, B, V) logits slab (row 0 stays zero)
    L, B, E = src_emb_ref.shape
    T = tgt_emb_ref.shape[0]
    H = ewhh_ref.shape[0]
    V = wfc_ref.shape[1]

    def lstm_cell(x, h, c, wih_ref, whh_ref, b_ref):
        # Split dot (x@Wih + h@Whh) instead of concat([x,h]) @ W: MXU has huge slack here
        # and this removes the per-step lane-shuffle copy the concat materialized.
        z = (jnp.dot(x, wih_ref[...], preferred_element_type=jnp.float32)
             + jnp.dot(h, whh_ref[...], preferred_element_type=jnp.float32)
             + b_ref[...])
        ig = jax.nn.sigmoid(z[:, 0 * H:1 * H])    # PyTorch gate order: i, f, g, o
        fg = jax.nn.sigmoid(z[:, 1 * H:2 * H])
        gg = jnp.tanh(z[:, 2 * H:3 * H])
        og = jax.nn.sigmoid(z[:, 3 * H:4 * H])
        c_new = fg * c + ig * gg
        h_new = og * jnp.tanh(c_new)
        return h_new, c_new

    # ---------------------------------- encoder ----------------------------------
    h = jnp.zeros((B, H), jnp.float32)
    c = jnp.zeros((B, H), jnp.float32)
    # Static trip count -> fully-unrolled straight-line recurrence with static slab indices
    # (identical codegen to lax.fori_loop(0, L, ..., unroll=True)).
    for t in range(L):
        h, c = lstm_cell(src_emb_ref[t], h, c, ewih_ref, ewhh_ref, eb_ref)

    # ---------------------------------- decoder ----------------------------------
    out_ref[0] = jnp.zeros((B, V), jnp.float32)   # outputs[0] stays zero, as in PyTorch
    x = tgt_emb_ref[0]                            # emb[target[0]]

    for i in range(1, T):
        h, c = lstm_cell(x, h, c, dwih_ref, dwhh_ref, db_ref)
        logits = (jnp.dot(h, wfc_ref[...], preferred_element_type=jnp.float32)
                  + bfc_ref[...])                 # (B, V)
        out_ref[i] = logits                       # VMEM store; HBM writeback once at kernel exit

        if i < T - 1:                             # next input is dead work on the last step
            # Greedy token: first-argmax one-hot (exact tie-break), then one_hot @ emb on
            # the MXU -> no dynamic gather needed at toy vocab sizes.
            # TODO(synk): replace with index->SMEM->row-DMA gather for production vocab sizes.
            col = jax.lax.broadcasted_iota(jnp.int32, (B, V), 1)
            is_max = logits == jnp.max(logits, axis=-1, keepdims=True)
            amax = jnp.min(jnp.where(is_max, col, V), axis=-1, keepdims=True)   # (B, 1)
            one_hot = (col == amax).astype(jnp.float32)                          # (B, V)
            greedy_emb = jnp.dot(one_hot, demb_ref[...],
                                 preferred_element_type=jnp.float32)             # (B, E)
            teach_emb = tgt_emb_ref[i]                                            # emb[target[i]]
            tf_f = (tf_ref[i] > 0).astype(jnp.float32)                            # SMEM scalar 0/1
            x = tf_f * teach_emb + (1.0 - tf_f) * greedy_emb


# ------------------------------ pallas_call wrapper ---------------------------

def seq2seq_forward(tf_mask, src_emb, tgt_emb,
                    ewih, ewhh, eb, dwih, dwhh, db, demb, wfc, bfc):
    """Whole forward (encoder loop + decoder loop) in one kernel.  Returns (T, B, V) logits."""
    L, B, E = src_emb.shape
    T = tgt_emb.shape[0]
    V = wfc.shape[1]

    def full(shp):
        # Whole-array resident VMEM block; constant index_map (single grid step).
        return pl.BlockSpec(shp, lambda i, tf: (0,) * len(shp))

    grid_spec = pltpu.PrefetchScalarGridSpec(
        num_scalar_prefetch=1,                    # tf_mask -> SMEM
        grid=(1,),                                # one grid step; recurrence is in-kernel
        in_specs=[full(src_emb.shape), full(tgt_emb.shape),
                  full(ewih.shape), full(ewhh.shape), full(eb.shape),
                  full(dwih.shape), full(dwhh.shape), full(db.shape),
                  full(demb.shape), full(wfc.shape), full(bfc.shape)],
        out_specs=full((T, B, V)),
    )
    return pl.pallas_call(
        seq2seq_kernel,
        out_shape=jax.ShapeDtypeStruct((T, B, V), jnp.float32),
        grid_spec=grid_spec,
        compiler_params=pltpu.CompilerParams(dimension_semantics=("arbitrary",)),
    )(tf_mask, src_emb, tgt_emb, ewih, ewhh, eb, dwih, dwhh, db, demb, wfc, bfc)


# --------------------------- Encoder / Decoder / Seq2Seq -----------------------

class EncoderLSTM:
    """embedding -> single-layer LSTM; parameters only, the loop lives in the fused kernel."""

    def __init__(self, key, vocab_size, emb_dim, hidden):
        k = jax.random.split(key, 4)
        u = lambda kk, shp: jax.random.uniform(kk, shp, jnp.float32, -0.1, 0.1)
        self.emb = u(k[0], (vocab_size, emb_dim))
        self.wih = u(k[1], (emb_dim, 4 * hidden))   # (in, out): x @ Wih on the MXU
        self.whh = u(k[2], (hidden, 4 * hidden))
        self.b = u(k[3], (1, 4 * hidden))           # == PyTorch b_ih + b_hh
        self.hidden = hidden


class DecoderLSTM:
    """embedding -> LSTM cell -> Linear(hidden, vocab); parameters only."""

    def __init__(self, key, vocab_size, emb_dim, hidden):
        k = jax.random.split(key, 6)
        u = lambda kk, shp: jax.random.uniform(kk, shp, jnp.float32, -0.1, 0.1)
        self.emb = u(k[0], (vocab_size, emb_dim))
        self.wih = u(k[1], (emb_dim, 4 * hidden))
        self.whh = u(k[2], (hidden, 4 * hidden))
        self.b = u(k[3], (1, 4 * hidden))
        self.wfc = u(k[4], (hidden, vocab_size))
        self.bfc = u(k[5], (1, vocab_size))
        self.hidden = hidden


class Seq2Seq:
    def __init__(self, encoder, decoder):
        self.Encoder_LSTM = encoder
        self.Decoder_LSTM = decoder
        self._fwd = jax.jit(self._device_forward)

    def _device_forward(self, source, target, tf_mask):
        enc, dec = self.Encoder_LSTM, self.Decoder_LSTM
        # Embedding lookups of *known* tokens hoisted to two batched gathers
        # (one XLA op each, not one per timestep).
        src_emb = enc.emb[source]                    # (L, B, E)
        tgt_emb = dec.emb[target]                    # (T, B, E)
        return seq2seq_forward(tf_mask, src_emb, tgt_emb,
                               enc.wih, enc.whh, enc.b,
                               dec.wih, dec.whh, dec.b,
                               dec.emb, dec.wfc, dec.bfc)

    def forward(self, source, target, question_vocab_size, tfr=0.5):
        target_len = target.shape[0]
        # Host-side teacher-forcing coin flips (same call order as the PyTorch loop),
        # precomputed ONCE per call so there is no per-step host<->device sync.
        tf_mask = jnp.asarray(
            [0] + [1 if random.random() < tfr else 0 for _ in range(1, target_len)],
            dtype=jnp.int32)
        return self._fwd(source, target, tf_mask)


# ------------------------------------ main -------------------------------------

if __name__ == "__main__":
    random.seed(0)

    B = 8            # batch
    E = 32           # embedding dim
    H = 32           # hidden size (4H = 128 -> lane-dense fused gate pre-activations)
    SRC_VOCAB = 64
    TGT_VOCAB = 32   # question_vocab_size
    SRC_LEN = 6
    TGT_LEN = 8

    root = jax.random.PRNGKey(0)
    k_enc, k_dec, k_src, k_tgt = jax.random.split(root, 4)

    encoder = EncoderLSTM(k_enc, SRC_VOCAB, E, H)
    decoder = DecoderLSTM(k_dec, TGT_VOCAB, E, H)
    model = Seq2Seq(encoder, decoder)

    source = jax.random.randint(k_src, (SRC_LEN, B), 0, SRC_VOCAB, dtype=jnp.int32)
    target = jax.random.randint(k_tgt, (TGT_LEN, B), 0, TGT_VOCAB, dtype=jnp.int32)

    outputs = model.forward(source, target, TGT_VOCAB, tfr=0.5)
    outputs = jax.block_until_ready(outputs)
    assert outputs.shape == (TGT_LEN, B, TGT_VOCAB)
    assert bool(jnp.all(outputs[0] == 0.0))          # matches torch.zeros row 0
    assert bool(jnp.all(jnp.isfinite(outputs)))
    print("KERNEL_OK")
</pallas_src>

<mosaic_0001>
module attributes {stable_mosaic.version = 11 : i64} {
  func.func @seq2seq_kernel(%arg0: i32, %arg1: memref<8xi32, #tpu.memory_space<smem>>, %arg2: memref<6x8x32xf32, #tpu.memory_space<vmem>>, %arg3: memref<8x8x32xf32, #tpu.memory_space<vmem>>, %arg4: memref<32x128xf32, #tpu.memory_space<vmem>>, %arg5: memref<32x128xf32, #tpu.memory_space<vmem>>, %arg6: memref<1x128xf32, #tpu.memory_space<vmem>>, %arg7: memref<32x128xf32, #tpu.memory_space<vmem>>, %arg8: memref<32x128xf32, #tpu.memory_space<vmem>>, %arg9: memref<1x128xf32, #tpu.memory_space<vmem>>, %arg10: memref<32x32xf32, #tpu.memory_space<vmem>>, %arg11: memref<32x32xf32, #tpu.memory_space<vmem>>, %arg12: memref<1x32xf32, #tpu.memory_space<vmem>>, %arg13: memref<8x8x32xf32, #tpu.memory_space<vmem>>) attributes {dimension_semantics = [#tpu.dimension_semantics<arbitrary>], iteration_bounds = array<i64: 1>, scalar_prefetch = 1 : i64, scratch_operands = 0 : i64, tpu.core_type = #tpu.core_type<tc>, window_params = [{pipeline_mode = #tpu.pipeline_mode<synchronous>, transform_indices = @transform_0, window_bounds = array<i64: 6, 8, 32>}, {pipeline_mode = #tpu.pipeline_mode<synchronous>, transform_indices = @transform_1, window_bounds = array<i64: 8, 8, 32>}, {pipeline_mode = #tpu.pipeline_mode<synchronous>, transform_indices = @transform_2, window_bounds = array<i64: 32, 128>}, {pipeline_mode = #tpu.pipeline_mode<synchronous>, transform_indices = @transform_3, window_bounds = array<i64: 32, 128>}, {pipeline_mode = #tpu.pipeline_mode<synchronous>, transform_indices = @transform_4, window_bounds = array<i64: 1, 128>}, {pipeline_mode = #tpu.pipeline_mode<synchronous>, transform_indices = @transform_5, window_bounds = array<i64: 32, 128>}, {pipeline_mode = #tpu.pipeline_mode<synchronous>, transform_indices = @transform_6, window_bounds = array<i64: 32, 128>}, {pipeline_mode = #tpu.pipeline_mode<synchronous>, transform_indices = @transform_7, window_bounds = array<i64: 1, 128>}, {pipeline_mode = #tpu.pipeline_mode<synchronous>, transform_indices = @transform_8, window_bounds = array<i64: 32, 32>}, {pipeline_mode = #tpu.pipeline_mode<synchronous>, transform_indices = @transform_9, window_bounds = array<i64: 32, 32>}, {pipeline_mode = #tpu.pipeline_mode<synchronous>, transform_indices = @transform_10, window_bounds = array<i64: 1, 32>}, {pipeline_mode = #tpu.pipeline_mode<synchronous>, transform_indices = @transform_11, window_bounds = array<i64: 8, 8, 32>}]} {
    %cst = arith.constant 0.000000e+00 : f32
    %0 = vector.broadcast %cst : f32 to vector<8x32xf32>
    %cst_0 = arith.constant 0.000000e+00 : f32
    %1 = vector.broadcast %cst_0 : f32 to vector<8x32xf32>
    %c0 = arith.constant 0 : index
    %c0_1 = arith.constant 0 : index
    %c0_2 = arith.constant 0 : index
    %2 = vector.load %arg2[%c0, %c0_1, %c0_2] : memref<6x8x32xf32, #tpu.memory_space<vmem>>, vector<1x8x32xf32>
    %3 = vector.shape_cast %2 : vector<1x8x32xf32> to vector<8x32xf32>
    %c0_3 = arith.constant 0 : index
    %c0_4 = arith.constant 0 : index
    %4 = vector.load %arg4[%c0_3, %c0_4] : memref<32x128xf32, #tpu.memory_space<vmem>>, vector<32x128xf32>
    %cst_5 = arith.constant dense<0.000000e+00> : vector<8x128xf32>
    %5 = tpu.matmul %3, %4, %cst_5 {dimension_numbers = #tpu.dot_dimension_numbers<[1], [0], [0], [1], [0, 0, 1, 1], [], []>} : vector<8x32xf32>, vector<32x128xf32>, vector<8x128xf32> -> vector<8x128xf32>
    %c0_6 = arith.constant 0 : index
    %c0_7 = arith.constant 0 : index
    %6 = vector.load %arg5[%c0_6, %c0_7] : memref<32x128xf32, #tpu.memory_space<vmem>>, vector<32x128xf32>
    %cst_8 = arith.constant dense<0.000000e+00> : vector<8x128xf32>
    %7 = tpu.matmul %0, %6, %cst_8 {dimension_numbers = #tpu.dot_dimension_numbers<[1], [0], [0], [1], [0, 0, 1, 1], [], []>} : vector<8x32xf32>, vector<32x128xf32>, vector<8x128xf32> -> vector<8x128xf32>
    %8 = arith.addf %5, %7 : vector<8x128xf32>
    %c0_9 = arith.constant 0 : index
    %c0_10 = arith.constant 0 : index
    %9 = vector.load %arg6[%c0_9, %c0_10] : memref<1x128xf32, #tpu.memory_space<vmem>>, vector<1x128xf32>
    %10 = vector.broadcast %9 : vector<1x128xf32> to vector<8x128xf32>
    %11 = arith.addf %8, %10 : vector<8x128xf32>
    %12 = vector.extract_strided_slice %11 {offsets = [0, 0], sizes = [8, 32], strides = [1, 1]} : vector<8x128xf32> to vector<8x32xf32>
    %13 = arith.negf %12 : vector<8x32xf32>
    %14 = math.exp %13 : vector<8x32xf32>
    %cst_11 = arith.constant 1.000000e+00 : f32
    %15 = vector.broadcast %cst_11 : f32 to vector<8x32xf32>
    %16 = arith.addf %15, %14 : vector<8x32xf32>
    %17 = arith.divf %15, %16 : vector<8x32xf32>
    %18 = vector.extract_strided_slice %11 {offsets = [0, 32], sizes = [8, 32], strides = [1, 1]} : vector<8x128xf32> to vector<8x32xf32>
    %19 = arith.negf %18 : vector<8x32xf32>
    %20 = math.exp %19 : vector<8x32xf32>
    %cst_12 = arith.constant 1.000000e+00 : f32
    %21 = vector.broadcast %cst_12 : f32 to vector<8x32xf32>
    %22 = arith.addf %21, %20 : vector<8x32xf32>
    %23 = arith.divf %21, %22 : vector<8x32xf32>
    %24 = vector.extract_strided_slice %11 {offsets = [0, 64], sizes = [8, 32], strides = [1, 1]} : vector<8x128xf32> to vector<8x32xf32>
    %25 = math.tanh %24 : vector<8x32xf32>
    %26 = vector.extract_strided_slice %11 {offsets = [0, 96], sizes = [8, 32], strides = [1, 1]} : vector<8x128xf32> to vector<8x32xf32>
    %27 = arith.negf %26 : vector<8x32xf32>
    %28 = math.exp %27 : vector<8x32xf32>
    %cst_13 = arith.constant 1.000000e+00 : f32
    %29 = vector.broadcast %cst_13 : f32 to vector<8x32xf32>
    %30 = arith.addf %29, %28 : vector<8x32xf32>
    %31 = arith.divf %29, %30 : vector<8x32xf32>
    %32 = arith.mulf %23, %1 : vector<8x32xf32>
    %33 = arith.mulf %17, %25 : vector<8x32xf32>
    %34 = arith.addf %32, %33 : vector<8x32xf32>
    %35 = math.tanh %34 : vector<8x32xf32>
    %36 = arith.mulf %31, %35 : vector<8x32xf32>
    %c1 = arith.constant 1 : index
    %c0_14 = arith.constant 0 : index
    %c0_15 = arith.constant 0 : index
    %37 = vector.load %arg2[%c1, %c0_14, %c0_15] : memref<6x8x32xf32, #tpu.memory_space<vmem>>, vector<1x8x32xf32>
    %38 = vector.shape_cast %37 : vector<1x8x32xf32> to vector<8x32xf32>
    %c0_16 = arith.constant 0 : index
    %c0_17 = arith.constant 0 : index
    %39 = vector.load %arg4[%c0_16, %c0_17] : memref<32x128xf32, #tpu.memory_space<vmem>>, vector<32x128xf32>
    %cst_18 = arith.constant dense<0.000000e+00> : vector<8x128xf32>
    %40 = tpu.matmul %38, %39, %cst_18 {dimension_numbers = #tpu.dot_dimension_numbers<[1], [0], [0], [1], [0, 0, 1, 1], [], []>} : vector<8x32xf32>, vector<32x128xf32>, vector<8x128xf32> -> vector<8x128xf32>
    %c0_19 = arith.constant 0 : index
    %c0_20 = arith.constant 0 : index
    %41 = vector.load %arg5[%c0_19, %c0_20] : memref<32x128xf32, #tpu.memory_space<vmem>>, vector<32x128xf32>
    %cst_21 = arith.constant dense<0.000000e+00> : vector<8x128xf32>
    %42 = tpu.matmul %36, %41, %cst_21 {dimension_numbers = #tpu.dot_dimension_numbers<[1], [0], [0], [1], [0, 0, 1, 1], [], []>} : vector<8x32xf32>, vector<32x128xf32>, vector<8x128xf32> -> vector<8x128xf32>
    %43 = arith.addf %40, %42 : vector<8x128xf32>
    %c0_22 = arith.constant 0 : index
    %c0_23 = arith.constant 0 : index
    %44 = vector.load %arg6[%c0_22, %c0_23] : memref<1x128xf32, #tpu.memory_space<vmem>>, vector<1x128xf32>
    %45 = vector.broadcast %44 : vector<1x128xf32> to vector<8x128xf32>
    %46 = arith.addf %43, %45 : vector<8x128xf32>
    %47 = vector.extract_strided_slice %46 {offsets = [0, 0], sizes = [8, 32], strides = [1, 1]} : vector<8x128xf32> to vector<8x32xf32>
    %48 = arith.negf %47 : vector<8x32xf32>
    %49 = math.exp %48 : vector<8x32xf32>
    %cst_24 = arith.constant 1.000000e+00 : f32
    %50 = vector.broadcast %cst_24 : f32 to vector<8x32xf32>
    %51 = arith.addf %50, %49 : vector<8x32xf32>
    %52 = arith.divf %50, %51 : vector<8x32xf32>
    %53 = vector.extract_strided_slice %46 {offsets = [0, 32], sizes = [8, 32], strides = [1, 1]} : vector<8x128xf32> to vector<8x32xf32>
    %54 = arith.negf %53 : vector<8x32xf32>
    %55 = math.exp %54 : vector<8x32xf32>
    %cst_25 = arith.constant 1.000000e+00 : f32
    %56 = vector.broadcast %cst_25 : f32 to vector<8x32xf32>
    %57 = arith.addf %56, %55 : vector<8x32xf32>
    %58 = arith.divf %56, %57 : vector<8x32xf32>
    %59 = vector.extract_strided_slice %46 {offsets = [0, 64], sizes = [8, 32], strides = [1, 1]} : vector<8x128xf32> to vector<8x32xf32>
    %60 = math.tanh %59 : vector<8x32xf32>
    %61 = vector.extract_strided_slice %46 {offsets = [0, 96], sizes = [8, 32], strides = [1, 1]} : vector<8x128xf32> to vector<8x32xf32>
    %62 = arith.negf %61 : vector<8x32xf32>
    %63 = math.exp %62 : vector<8x32xf32>
    %cst_26 = arith.constant 1.000000e+00 : f32
    %64 = vector.broadcast %cst_26 : f32 to vector<8x32xf32>
    %65 = arith.addf %64, %63 : vector<8x32xf32>
    %66 = arith.divf %64, %65 : vector<8x32xf32>
    %67 = arith.mulf %58, %34 : vector<8x32xf32>
    %68 = arith.mulf %52, %60 : vector<8x32xf32>
    %69 = arith.addf %67, %68 : vector<8x32xf32>
    %70 = math.tanh %69 : vector<8x32xf32>
    %71 = arith.mulf %66, %70 : vector<8x32xf32>
    %c2 = arith.constant 2 : index
    %c0_27 = arith.constant 0 : index
    %c0_28 = arith.constant 0 : index
    %72 = vector.load %arg2[%c2, %c0_27, %c0_28] : memref<6x8x32xf32, #tpu.memory_space<vmem>>, vector<1x8x32xf32>
    %73 = vector.shape_cast %72 : vector<1x8x32xf32> to vector<8x32xf32>
    %c0_29 = arith.constant 0 : index
    %c0_30 = arith.constant 0 : index
    %74 = vector.load %arg4[%c0_29, %c0_30] : memref<32x128xf32, #tpu.memory_space<vmem>>, vector<32x128xf32>
    %cst_31 = arith.constant dense<0.000000e+00> : vector<8x128xf32>
    %75 = tpu.matmul %73, %74, %cst_31 {dimension_numbers = #tpu.dot_dimension_numbers<[1], [0], [0], [1], [0, 0, 1, 1], [], []>} : vector<8x32xf32>, vector<32x128xf32>, vector<8x128xf32> -> vector<8x128xf32>
    %c0_32 = arith.constant 0 : index
    %c0_33 = arith.constant 0 : index
    %76 = vector.load %arg5[%c0_32, %c0_33] : memref<32x128xf32, #tpu.memory_space<vmem>>, vector<32x128xf32>
    %cst_34 = arith.constant dense<0.000000e+00> : vector<8x128xf32>
    %77 = tpu.matmul %71, %76, %cst_34 {dimension_numbers = #tpu.dot_dimension_numbers<[1], [0], [0], [1], [0, 0, 1, 1], [], []>} : vector<8x32xf32>, vector<32x128xf32>, vector<8x128xf32> -> vector<8x128xf32>
    %78 = arith.addf %75, %77 : vector<8x128xf32>
    %c0_35 = arith.constant 0 : index
    %c0_36 = arith.constant 0 : index
    %79 = vector.load %arg6[%c0_35, %c0_36] : memref<1x128xf32, #tpu.memory_space<vmem>>, vector<1x128xf32>
    %80 = vector.broadcast %79 : vector<1x128xf32> to vector<8x128xf32>
    %81 = arith.addf %78, %80 : vector<8x128xf32>
    %82 = vector.extract_strided_slice %81 {offsets = [0, 0], sizes = [8, 32], strides = [1, 1]} : vector<8x128xf32> to vector<8x32xf32>
    %83 = arith.negf %82 : vector<8x32xf32>
    %84 = math.exp %83 : vector<8x32xf32>
    %cst_37 = arith.constant 1.000000e+00 : f32
    %85 = vector.broadcast %cst_37 : f32 to vector<8x32xf32>
    %86 = arith.addf %85, %84 : vector<8x32xf32>
    %87 = arith.divf %85, %86 : vector<8x32xf32>
    %88 = vector.extract_strided_slice %81 {offsets = [0, 32], sizes = [8, 32], strides = [1, 1]} : vector<8x128xf32> to vector<8x32xf32>
    %89 = arith.negf %88 : vector<8x32xf32>
    %90 = math.exp %89 : vector<8x32xf32>
    %cst_38 = arith.constant 1.000000e+00 : f32
    %91 = vector.broadcast %cst_38 : f32 to vector<8x32xf32>
    %92 = arith.addf %91, %90 : vector<8x32xf32>
    %93 = arith.divf %91, %92 : vector<8x32xf32>
    %94 = vector.extract_strided_slice %81 {offsets = [0, 64], sizes = [8, 32], strides = [1, 1]} : vector<8x128xf32> to vector<8x32xf32>
    %95 = math.tanh %94 : vector<8x32xf32>
    %96 = vector.extract_strided_slice %81 {offsets = [0, 96], sizes = [8, 32], strides = [1, 1]} : vector<8x128xf32> to vector<8x32xf32>
    %97 = arith.negf %96 : vector<8x32xf32>
    %98 = math.exp %97 : vector<8x32xf32>
    %cst_39 = arith.constant 1.000000e+00 : f32
    %99 = vector.broadcast %cst_39 : f32 to vector<8x32xf32>
    %100 = arith.addf %99, %98 : vector<8x32xf32>
    %101 = arith.divf %99, %100 : vector<8x32xf32>
    %102 = arith.mulf %93, %69 : vector<8x32xf32>
    %103 = arith.mulf %87, %95 : vector<8x32xf32>
    %104 = arith.addf %102, %103 : vector<8x32xf32>
    %105 = math.tanh %104 : vector<8x32xf32>
    %106 = arith.mulf %101, %105 : vector<8x32xf32>
    %c3 = arith.constant 3 : index
    %c0_40 = arith.constant 0 : index
    %c0_41 = arith.constant 0 : index
    %107 = vector.load %arg2[%c3, %c0_40, %c0_41] : memref<6x8x32xf32, #tpu.memory_space<vmem>>, vector<1x8x32xf32>
    %108 = vector.shape_cast %107 : vector<1x8x32xf32> to vector<8x32xf32>
    %c0_42 = arith.constant 0 : index
    %c0_43 = arith.constant 0 : index
    %109 = vector.load %arg4[%c0_42, %c0_43] : memref<32x128xf32, #tpu.memory_space<vmem>>, vector<32x128xf32>
    %cst_44 = arith.constant dense<0.000000e+00> : vector<8x128xf32>
    %110 = tpu.matmul %108, %109, %cst_44 {dimension_numbers = #tpu.dot_dimension_numbers<[1], [0], [0], [1], [0, 0, 1, 1], [], []>} : vector<8x32xf32>, vector<32x128xf32>, vector<8x128xf32> -> vector<8x128xf32>
    %c0_45 = arith.constant 0 : index
    %c0_46 = arith.constant 0 : index
    %111 = vector.load %arg5[%c0_45, %c0_46] : memref<32x128xf32, #tpu.memory_space<vmem>>, vector<32x128xf32>
    %cst_47 = arith.constant dense<0.000000e+00> : vector<8x128xf32>
    %112 = tpu.matmul %106, %111, %cst_47 {dimension_numbers = #tpu.dot_dimension_numbers<[1], [0], [0], [1], [0, 0, 1, 1], [], []>} : vector<8x32xf32>, vector<32x128xf32>, vector<8x128xf32> -> vector<8x128xf32>
    %113 = arith.addf %110, %112 : vector<8x128xf32>
    %c0_48 = arith.constant 0 : index
    %c0_49 = arith.constant 0 : index
    %114 = vector.load %arg6[%c0_48, %c0_49] : memref<1x128xf32, #tpu.memory_space<vmem>>, vector<1x128xf32>
    %115 = vector.broadcast %114 : vector<1x128xf32> to vector<8x128xf32>
    %116 = arith.addf %113, %115 : vector<8x128xf32>
    %117 = vector.extract_strided_slice %116 {offsets = [0, 0], sizes = [8, 32], strides = [1, 1]} : vector<8x128xf32> to vector<8x32xf32>
    %118 = arith.negf %117 : vector<8x32xf32>
    %119 = math.exp %118 : vector<8x32xf32>
    %cst_50 = arith.constant 1.000000e+00 : f32
    %120 = vector.broadcast %cst_50 : f32 to vector<8x32xf32>
    %121 = arith.addf %120, %119 : vector<8x32xf32>
    %122 = arith.divf %120, %121 : vector<8x32xf32>
    %123 = vector.extract_strided_slice %116 {offsets = [0, 32], sizes = [8, 32], strides = [1, 1]} : vector<8x128xf32> to vector<8x32xf32>
    %124 = arith.negf %123 : vector<8x32xf32>
    %125 = math.exp %124 : vector<8x32xf32>
    %cst_51 = arith.constant 1.000000e+00 : f32
    %126 = vector.broadcast %cst_51 : f32 to vector<8x32xf32>
    %127 = arith.addf %126, %125 : vector<8x32xf32>
    %128 = arith.divf %126, %127 : vector<8x32xf32>
    %129 = vector.extract_strided_slice %116 {offsets = [0, 64], sizes = [8, 32], strides = [1, 1]} : vector<8x128xf32> to vector<8x32xf32>
    %130 = math.tanh %129 : vector<8x32xf32>
    %131 = vector.extract_strided_slice %116 {offsets = [0, 96], sizes = [8, 32], strides = [1, 1]} : vector<8x128xf32> to vector<8x32xf32>
    %132 = arith.negf %131 : vector<8x32xf32>
    %133 = math.exp %132 : vector<8x32xf32>
    %cst_52 = arith.constant 1.000000e+00 : f32
    %134 = vector.broadcast %cst_52 : f32 to vector<8x32xf32>
    %135 = arith.addf %134, %133 : vector<8x32xf32>
    %136 = arith.divf %134, %135 : vector<8x32xf32>
    %137 = arith.mulf %128, %104 : vector<8x32xf32>
    %138 = arith.mulf %122, %130 : vector<8x32xf32>
    %139 = arith.addf %137, %138 : vector<8x32xf32>
    %140 = math.tanh %139 : vector<8x32xf32>
    %141 = arith.mulf %136, %140 : vector<8x32xf32>
    %c4 = arith.constant 4 : index
    %c0_53 = arith.constant 0 : index
    %c0_54 = arith.constant 0 : index
    %142 = vector.load %arg2[%c4, %c0_53, %c0_54] : memref<6x8x32xf32, #tpu.memory_space<vmem>>, vector<1x8x32xf32>
    %143 = vector.shape_cast %142 : vector<1x8x32xf32> to vector<8x32xf32>
    %c0_55 = arith.constant 0 : index
    %c0_56 = arith.constant 0 : index
    %144 = vector.load %arg4[%c0_55, %c0_56] : memref<32x128xf32, #tpu.memory_space<vmem>>, vector<32x128xf32>
    %cst_57 = arith.constant dense<0.000000e+00> : vector<8x128xf32>
    %145 = tpu.matmul %143, %144, %cst_57 {dimension_numbers = #tpu.dot_dimension_numbers<[1], [0], [0], [1], [0, 0, 1, 1], [], []>} : vector<8x32xf32>, vector<32x128xf32>, vector<8x128xf32> -> vector<8x128xf32>
    %c0_58 = arith.constant 0 : index
    %c0_59 = arith.constant 0 : index
    %146 = vector.load %arg5[%c0_58, %c0_59] : memref<32x128xf32, #tpu.memory_space<vmem>>, vector<32x128xf32>
    %cst_60 = arith.constant dense<0.000000e+00> : vector<8x128xf32>
    %147 = tpu.matmul %141, %146, %cst_60 {dimension_numbers = #tpu.dot_dimension_numbers<[1], [0], [0], [1], [0, 0, 1, 1], [], []>} : vector<8x32xf32>, vector<32x128xf32>, vector<8x128xf32> -> vector<8x128xf32>
    %148 = arith.addf %145, %147 : vector<8x128xf32>
    %c0_61 = arith.constant 0 : index
    %c0_62 = arith.constant 0 : index
    %149 = vector.load %arg6[%c0_61, %c0_62] : memref<1x128xf32, #tpu.memory_space<vmem>>, vector<1x128xf32>
    %150 = vector.broadcast %149 : vector<1x128xf32> to vector<8x128xf32>
    %151 = arith.addf %148, %150 : vector<8x128xf32>
    %152 = vector.extract_strided_slice %151 {offsets = [0, 0], sizes = [8, 32], strides = [1, 1]} : vector<8x128xf32> to vector<8x32xf32>
    %153 = arith.negf %152 : vector<8x32xf32>
    %154 = math.exp %153 : vector<8x32xf32>
    %cst_63 = arith.constant 1.000000e+00 : f32
    %155 = vector.broadcast %cst_63 : f32 to vector<8x32xf32>
    %156 = arith.addf %155, %154 : vector<8x32xf32>
    %157 = arith.divf %155, %156 : vector<8x32xf32>
    %158 = vector.extract_strided_slice %151 {offsets = [0, 32], sizes = [8, 32], strides = [1, 1]} : vector<8x128xf32> to vector<8x32xf32>
    %159 = arith.negf %158 : vector<8x32xf32>
    %160 = math.exp %159 : vector<8x32xf32>
    %cst_64 = arith.constant 1.000000e+00 : f32
    %161 = vector.broadcast %cst_64 : f32 to vector<8x32xf32>
    %162 = arith.addf %161, %160 : vector<8x32xf32>
    %163 = arith.divf %161, %162 : vector<8x32xf32>
    %164 = vector.extract_strided_slice %151 {offsets = [0, 64], sizes = [8, 32], strides = [1, 1]} : vector<8x128xf32> to vector<8x32xf32>
    %165 = math.tanh %164 : vector<8x32xf32>
    %166 = vector.extract_strided_slice %151 {offsets = [0, 96], sizes = [8, 32], strides = [1, 1]} : vector<8x128xf32> to vector<8x32xf32>
    %167 = arith.negf %166 : vector<8x32xf32>
    %168 = math.exp %167 : vector<8x32xf32>
    %cst_65 = arith.constant 1.000000e+00 : f32
    %169 = vector.broadcast %cst_65 : f32 to vector<8x32xf32>
    %170 = arith.addf %169, %168 : vector<8x32xf32>
    %171 = arith.divf %169, %170 : vector<8x32xf32>
    %172 = arith.mulf %163, %139 : vector<8x32xf32>
    %173 = arith.mulf %157, %165 : vector<8x32xf32>
    %174 = arith.addf %172, %173 : vector<8x32xf32>
    %175 = math.tanh %174 : vector<8x32xf32>
    %176 = arith.mulf %171, %175 : vector<8x32xf32>
    %c5 = arith.constant 5 : index
    %c0_66 = arith.constant 0 : index
    %c0_67 = arith.constant 0 : index
    %177 = vector.load %arg2[%c5, %c0_66, %c0_67] : memref<6x8x32xf32, #tpu.memory_space<vmem>>, vector<1x8x32xf32>
    %178 = vector.shape_cast %177 : vector<1x8x32xf32> to vector<8x32xf32>
    %c0_68 = arith.constant 0 : index
    %c0_69 = arith.constant 0 : index
    %179 = vector.load %arg4[%c0_68, %c0_69] : memref<32x128xf32, #tpu.memory_space<vmem>>, vector<32x128xf32>
    %cst_70 = arith.constant dense<0.000000e+00> : vector<8x128xf32>
    %180 = tpu.matmul %178, %179, %cst_70 {dimension_numbers = #tpu.dot_dimension_numbers<[1], [0], [0], [1], [0, 0, 1, 1], [], []>} : vector<8x32xf32>, vector<32x128xf32>, vector<8x128xf32> -> vector<8x128xf32>
    %c0_71 = arith.constant 0 : index
    %c0_72 = arith.constant 0 : index
    %181 = vector.load %arg5[%c0_71, %c0_72] : memref<32x128xf32, #tpu.memory_space<vmem>>, vector<32x128xf32>
    %cst_73 = arith.constant dense<0.000000e+00> : vector<8x128xf32>
    %182 = tpu.matmul %176, %181, %cst_73 {dimension_numbers = #tpu.dot_dimension_numbers<[1], [0], [0], [1], [0, 0, 1, 1], [], []>} : vector<8x32xf32>, vector<32x128xf32>, vector<8x128xf32> -> vector<8x128xf32>
    %183 = arith.addf %180, %182 : vector<8x128xf32>
    %c0_74 = arith.constant 0 : index
    %c0_75 = arith.constant 0 : index
    %184 = vector.load %arg6[%c0_74, %c0_75] : memref<1x128xf32, #tpu.memory_space<vmem>>, vector<1x128xf32>
    %185 = vector.broadcast %184 : vector<1x128xf32> to vector<8x128xf32>
    %186 = arith.addf %183, %185 : vector<8x128xf32>
    %187 = vector.extract_strided_slice %186 {offsets = [0, 0], sizes = [8, 32], strides = [1, 1]} : vector<8x128xf32> to vector<8x32xf32>
    %188 = arith.negf %187 : vector<8x32xf32>
    %189 = math.exp %188 : vector<8x32xf32>
    %cst_76 = arith.constant 1.000000e+00 : f32
    %190 = vector.broadcast %cst_76 : f32 to vector<8x32xf32>
    %191 = arith.addf %190, %189 : vector<8x32xf32>
    %192 = arith.divf %190, %191 : vector<8x32xf32>
    %193 = vector.extract_strided_slice %186 {offsets = [0, 32], sizes = [8, 32], strides = [1, 1]} : vector<8x128xf32> to vector<8x32xf32>
    %194 = arith.negf %193 : vector<8x32xf32>
    %195 = math.exp %194 : vector<8x32xf32>
    %cst_77 = arith.constant 1.000000e+00 : f32
    %196 = vector.broadcast %cst_77 : f32 to vector<8x32xf32>
    %197 = arith.addf %196, %195 : vector<8x32xf32>
    %198 = arith.divf %196, %197 : vector<8x32xf32>
    %199 = vector.extract_strided_slice %186 {offsets = [0, 64], sizes = [8, 32], strides = [1, 1]} : vector<8x128xf32> to vector<8x32xf32>
    %200 = math.tanh %199 : vector<8x32xf32>
    %201 = vector.extract_strided_slice %186 {offsets = [0, 96], sizes = [8, 32], strides = [1, 1]} : vector<8x128xf32> to vector<8x32xf32>
    %202 = arith.negf %201 : vector<8x32xf32>
    %203 = math.exp %202 : vector<8x32xf32>
    %cst_78 = arith.constant 1.000000e+00 : f32
    %204 = vector.broadcast %cst_78 : f32 to vector<8x32xf32>
    %205 = arith.addf %204, %203 : vector<8x32xf32>
    %206 = arith.divf %204, %205 : vector<8x32xf32>
    %207 = arith.mulf %198, %174 : vector<8x32xf32>
    %208 = arith.mulf %192, %200 : vector<8x32xf32>
    %209 = arith.addf %207, %208 : vector<8x32xf32>
    %210 = math.tanh %209 : vector<8x32xf32>
    %211 = arith.mulf %206, %210 : vector<8x32xf32>
    %cst_79 = arith.constant 0.000000e+00 : f32
    %212 = vector.broadcast %cst_79 : f32 to vector<8x32xf32>
    %c0_80 = arith.constant 0 : index
    %c0_81 = arith.constant 0 : index
    %c0_82 = arith.constant 0 : index
    %213 = vector.load %arg13[%c0_80, %c0_81, %c0_82] : memref<8x8x32xf32, #tpu.memory_space<vmem>>, vector<1x8x32xf32>
    %214 = vector.shape_cast %213 : vector<1x8x32xf32> to vector<8x32xf32>
    %215 = vector.shape_cast %212 : vector<8x32xf32> to vector<1x8x32xf32>
    tpu.vector_store %arg13[%c0_80, %c0_81, %c0_82], %215 {strides = array<i32>} : memref<8x8x32xf32, #tpu.memory_space<vmem>>, vector<1x8x32xf32>,
    %c0_83 = arith.constant 0 : index
    %c0_84 = arith.constant 0 : index
    %c0_85 = arith.constant 0 : index
    %216 = vector.load %arg3[%c0_83, %c0_84, %c0_85] : memref<8x8x32xf32, #tpu.memory_space<vmem>>, vector<1x8x32xf32>
    %217 = vector.shape_cast %216 : vector<1x8x32xf32> to vector<8x32xf32>
    %c0_86 = arith.constant 0 : index
    %c0_87 = arith.constant 0 : index
    %218 = vector.load %arg7[%c0_86, %c0_87] : memref<32x128xf32, #tpu.memory_space<vmem>>, vector<32x128xf32>
    %cst_88 = arith.constant dense<0.000000e+00> : vector<8x128xf32>
    %219 = tpu.matmul %217, %218, %cst_88 {dimension_numbers = #tpu.dot_dimension_numbers<[1], [0], [0], [1], [0, 0, 1, 1], [], []>} : vector<8x32xf32>, vector<32x128xf32>, vector<8x128xf32> -> vector<8x128xf32>
    %c0_89 = arith.constant 0 : index
    %c0_90 = arith.constant 0 : index
    %220 = vector.load %arg8[%c0_89, %c0_90] : memref<32x128xf32, #tpu.memory_space<vmem>>, vector<32x128xf32>
    %cst_91 = arith.constant dense<0.000000e+00> : vector<8x128xf32>
    %221 = tpu.matmul %211, %220, %cst_91 {dimension_numbers = #tpu.dot_dimension_numbers<[1], [0], [0], [1], [0, 0, 1, 1], [], []>} : vector<8x32xf32>, vector<32x128xf32>, vector<8x128xf32> -> vector<8x128xf32>
    %222 = arith.addf %219, %221 : vector<8x128xf32>
    %c0_92 = arith.constant 0 : index
    %c0_93 = arith.constant 0 : index
    %223 = vector.load %arg9[%c0_92, %c0_93] : memref<1x128xf32, #tpu.memory_space<vmem>>, vector<1x128xf32>
    %224 = vector.broadcast %223 : vector<1x128xf32> to vector<8x128xf32>
    %225 = arith.addf %222, %224 : vector<8x128xf32>
    %226 = vector.extract_strided_slice %225 {offsets = [0, 0], sizes = [8, 32], strides = [1, 1]} : vector<8x128xf32> to vector<8x32xf32>
    %227 = arith.negf %226 : vector<8x32xf32>
    %228 = math.exp %227 : vector<8x32xf32>
    %cst_94 = arith.constant 1.000000e+00 : f32
    %229 = vector.broadcast %cst_94 : f32 to vector<8x32xf32>
    %230 = arith.addf %229, %228 : vector<8x32xf32>
    %231 = arith.divf %229, %230 : vector<8x32xf32>
    %232 = vector.extract_strided_slice %225 {offsets = [0, 32], sizes = [8, 32], strides = [1, 1]} : vector<8x128xf32> to vector<8x32xf32>
    %233 = arith.negf %232 : vector<8x32xf32>
    %234 = math.exp %233 : vector<8x32xf32>
    %cst_95 = arith.constant 1.000000e+00 : f32
    %235 = vector.broadcast %cst_95 : f32 to vector<8x32xf32>
    %236 = arith.addf %235, %234 : vector<8x32xf32>
    %237 = arith.divf %235, %236 : vector<8x32xf32>
    %238 = vector.extract_strided_slice %225 {offsets = [0, 64], sizes = [8, 32], strides = [1, 1]} : vector<8x128xf32> to vector<8x32xf32>
    %239 = math.tanh %238 : vector<8x32xf32>
    %240 = vector.extract_strided_slice %225 {offsets = [0, 96], sizes = [8, 32], strides = [1, 1]} : vector<8x128xf32> to vector<8x32xf32>
    %241 = arith.negf %240 : vector<8x32xf32>
    %242 = math.exp %241 : vector<8x32xf32>
    %cst_96 = arith.constant 1.000000e+00 : f32
    %243 = vector.broadcast %cst_96 : f32 to vector<8x32xf32>
    %244 = arith.addf %243, %242 : vector<8x32xf32>
    %245 = arith.divf %243, %244 : vector<8x32xf32>
    %246 = arith.mulf %237, %209 : vector<8x32xf32>
    %247 = arith.mulf %231, %239 : vector<8x32xf32>
    %248 = arith.addf %246, %247 : vector<8x32xf32>
    %249 = math.tanh %248 : vector<8x32xf32>
    %250 = arith.mulf %245, %249 : vector<8x32xf32>
    %c0_97 = arith.constant 0 : index
    %c0_98 = arith.constant 0 : index
    %251 = vector.load %arg11[%c0_97, %c0_98] : memref<32x32xf32, #tpu.memory_space<vmem>>, vector<32x32xf32>
    %cst_99 = arith.constant dense<0.000000e+00> : vector<8x32xf32>
    %252 = tpu.matmul %250, %251, %cst_99 {dimension_numbers = #tpu.dot_dimension_numbers<[1], [0], [0], [1], [0, 0, 1, 1], [], []>} : vector<8x32xf32>, vector<32x32xf32>, vector<8x32xf32> -> vector<8x32xf32>
    %c0_100 = arith.constant 0 : index
    %c0_101 = arith.constant 0 : index
    %253 = vector.load %arg12[%c0_100, %c0_101] : memref<1x32xf32, #tpu.memory_space<vmem>>, vector<1x32xf32>
    %254 = vector.broadcast %253 : vector<1x32xf32> to vector<8x32xf32>
    %255 = arith.addf %252, %254 : vector<8x32xf32>
    %c1_102 = arith.constant 1 : index
    %c0_103 = arith.constant 0 : index
    %c0_104 = arith.constant 0 : index
    %256 = vector.load %arg13[%c1_102, %c0_103, %c0_104] : memref<8x8x32xf32, #tpu.memory_space<vmem>>, vector<1x8x32xf32>
    %257 = vector.shape_cast %256 : vector<1x8x32xf32> to vector<8x32xf32>
    %258 = vector.shape_cast %255 : vector<8x32xf32> to vector<1x8x32xf32>
    tpu.vector_store %arg13[%c1_102, %c0_103, %c0_104], %258 {strides = array<i32>} : memref<8x8x32xf32, #tpu.memory_space<vmem>>, vector<1x8x32xf32>,
    %259 = tpu.iota {dimensions = array<i32: 1>} : vector<8x32xi32>
    %cst_105 = arith.constant dense<0xFF800000> : vector<8xf32>
    %260 = vector.multi_reduction <maximumf>, %255, %cst_105 [1] : vector<8x32xf32> to vector<8xf32>
    %261 = vector.shape_cast %260 : vector<8xf32> to vector<8x1xf32>
    %262 = vector.broadcast %261 : vector<8x1xf32> to vector<8x32xf32>
    %263 = arith.cmpf oeq, %255, %262 : vector<8x32xf32>
    %c32_i32 = arith.constant 32 : i32
    %264 = vector.broadcast %c32_i32 : i32 to vector<8x32xi32>
    %265 = arith.select %263, %259, %264 : vector<8x32xi1>, vector<8x32xi32>
    %cst_106 = arith.constant dense<2147483647> : vector<8xi32>
    %266 = vector.multi_reduction <minsi>, %265, %cst_106 [1] : vector<8x32xi32> to vector<8xi32>
    %267 = vector.shape_cast %266 : vector<8xi32> to vector<8x1xi32>
    %268 = vector.broadcast %267 : vector<8x1xi32> to vector<8x32xi32>
    %269 = arith.cmpi eq, %259, %268 : vector<8x32xi32>
    %270 = arith.extui %269 : vector<8x32xi1> to vector<8x32xi32>
    %271 = arith.sitofp %270 : vector<8x32xi32> to vector<8x32xf32>
    %c0_107 = arith.constant 0 : index
    %c0_108 = arith.constant 0 : index
    %272 = vector.load %arg10[%c0_107, %c0_108] : memref<32x32xf32, #tpu.memory_space<vmem>>, vector<32x32xf32>
    %cst_109 = arith.constant dense<0.000000e+00> : vector<8x32xf32>
    %273 = tpu.matmul %271, %272, %cst_109 {dimension_numbers = #tpu.dot_dimension_numbers<[1], [0], [0], [1], [0, 0, 1, 1], [], []>} : vector<8x32xf32>, vector<32x32xf32>, vector<8x32xf32> -> vector<8x32xf32>
    %c1_110 = arith.constant 1 : index
    %c0_111 = arith.constant 0 : index
    %c0_112 = arith.constant 0 : index
    %274 = vector.load %arg3[%c1_110, %c0_111, %c0_112] : memref<8x8x32xf32, #tpu.memory_space<vmem>>, vector<1x8x32xf32>
    %275 = vector.shape_cast %274 : vector<1x8x32xf32> to vector<8x32xf32>
    %c1_113 = arith.constant 1 : index
    %276 = memref.load %arg1[%c1_113] : memref<8xi32, #tpu.memory_space<smem>>
    %c0_i32 = arith.constant 0 : i32
    %277 = arith.cmpi sgt, %276, %c0_i32 : i32
    %278 = arith.extui %277 : i1 to i32
    %279 = arith.sitofp %278 : i32 to f32
    %280 = vector.broadcast %279 : f32 to vector<8x32xf32>
    %281 = arith.mulf %280, %275 : vector<8x32xf32>
    %cst_114 = arith.constant 1.000000e+00 : f32
    %282 = arith.subf %cst_114, %279 : f32
    %283 = vector.broadcast %282 : f32 to vector<8x32xf32>
    %284 = arith.mulf %283, %273 : vector<8x32xf32>
    %285 = arith.addf %281, %284 : vector<8x32xf32>
    %c0_115 = arith.constant 0 : index
    %c0_116 = arith.constant 0 : index
    %286 = vector.load %arg7[%c0_115, %c0_116] : memref<32x128xf32, #tpu.memory_space<vmem>>, vector<32x128xf32>
    %cst_117 = arith.constant dense<0.000000e+00> : vector<8x128xf32>
    %287 = tpu.matmul %285, %286, %cst_117 {dimension_numbers = #tpu.dot_dimension_numbers<[1], [0], [0], [1], [0, 0, 1, 1], [], []>} : vector<8x32xf32>, vector<32x128xf32>, vector<8x128xf32> -> vector<8x128xf32>
    %c0_118 = arith.constant 0 : index
    %c0_119 = arith.constant 0 : index
    %288 = vector.load %arg8[%c0_118, %c0_119] : memref<32x128xf32, #tpu.memory_space<vmem>>, vector<32x128xf32>
    %cst_120 = arith.constant dense<0.000000e+00> : vector<8x128xf32>
    %289 = tpu.matmul %250, %288, %cst_120 {dimension_numbers = #tpu.dot_dimension_numbers<[1], [0], [0], [1], [0, 0, 1, 1], [], []>} : vector<8x32xf32>, vector<32x128xf32>, vector<8x128xf32> -> vector<8x128xf32>
    %290 = arith.addf %287, %289 : vector<8x128xf32>
    %c0_121 = arith.constant 0 : index
    %c0_122 = arith.constant 0 : index
    %291 = vector.load %arg9[%c0_121, %c0_122] : memref<1x128xf32, #tpu.memory_space<vmem>>, vector<1x128xf32>
    %292 = vector.broadcast %291 : vector<1x128xf32> to vector<8x128xf32>
    %293 = arith.addf %290, %292 : vector<8x128xf32>
    %294 = vector.extract_strided_slice %293 {offsets = [0, 0], sizes = [8, 32], strides = [1, 1]} : vector<8x128xf32> to vector<8x32xf32>
    %295 = arith.negf %294 : vector<8x32xf32>
    %296 = math.exp %295 : vector<8x32xf32>
    %cst_123 = arith.constant 1.000000e+00 : f32
    %297 = vector.broadcast %cst_123 : f32 to vector<8x32xf32>
    %298 = arith.addf %297, %296 : vector<8x32xf32>
    %299 = arith.divf %297, %298 : vector<8x32xf32>
    %300 = vector.extract_strided_slice %293 {offsets = [0, 32], sizes = [8, 32], strides = [1, 1]} : vector<8x128xf32> to vector<8x32xf32>
    %301 = arith.negf %300 : vector<8x32xf32>
    %302 = math.exp %301 : vector<8x32xf32>
    %cst_124 = arith.constant 1.000000e+00 : f32
    %303 = vector.broadcast %cst_124 : f32 to vector<8x32xf32>
    %304 = arith.addf %303, %302 : vector<8x32xf32>
    %305 = arith.divf %303, %304 : vector<8x32xf32>
    %306 = vector.extract_strided_slice %293 {offsets = [0, 64], sizes = [8, 32], strides = [1, 1]} : vector<8x128xf32> to vector<8x32xf32>
    %307 = math.tanh %306 : vector<8x32xf32>
    %308 = vector.extract_strided_slice %293 {offsets = [0, 96], sizes = [8, 32], strides = [1, 1]} : vector<8x128xf32> to vector<8x32xf32>
    %309 = arith.negf %308 : vector<8x32xf32>
    %310 = math.exp %309 : vector<8x32xf32>
    %cst_125 = arith.constant 1.000000e+00 : f32
    %311 = vector.broadcast %cst_125 : f32 to vector<8x32xf32>
    %312 = arith.addf %311, %310 : vector<8x32xf32>
    %313 = arith.divf %311, %312 : vector<8x32xf32>
    %314 = arith.mulf %305, %248 : vector<8x32xf32>
    %315 = arith.mulf %299, %307 : vector<8x32xf32>
    %316 = arith.addf %314, %315 : vector<8x32xf32>
    %317 = math.tanh %316 : vector<8x32xf32>
    %318 = arith.mulf %313, %317 : vector<8x32xf32>
    %c0_126 = arith.constant 0 : index
    %c0_127 = arith.constant 0 : index
    %319 = vector.load %arg11[%c0_126, %c0_127] : memref<32x32xf32, #tpu.memory_space<vmem>>, vector<32x32xf32>
    %cst_128 = arith.constant dense<0.000000e+00> : vector<8x32xf32>
    %320 = tpu.matmul %318, %319, %cst_128 {dimension_numbers = #tpu.dot_dimension_numbers<[1], [0], [0], [1], [0, 0, 1, 1], [], []>} : vector<8x32xf32>, vector<32x32xf32>, vector<8x32xf32> -> vector<8x32xf32>
    %c0_129 = arith.constant 0 : index
    %c0_130 = arith.constant 0 : index
    %321 = vector.load %arg12[%c0_129, %c0_130] : memref<1x32xf32, #tpu.memory_space<vmem>>, vector<1x32xf32>
    %322 = vector.broadcast %321 : vector<1x32xf32> to vector<8x32xf32>
    %323 = arith.addf %320, %322 : vector<8x32xf32>
    %c2_131 = arith.constant 2 : index
    %c0_132 = arith.constant 0 : index
    %c0_133 = arith.constant 0 : index
    %324 = vector.load %arg13[%c2_131, %c0_132, %c0_133] : memref<8x8x32xf32, #tpu.memory_space<vmem>>, vector<1x8x32xf32>
    %325 = vector.shape_cast %324 : vector<1x8x32xf32> to vector<8x32xf32>
    %326 = vector.shape_cast %323 : vector<8x32xf32> to vector<1x8x32xf32>
    tpu.vector_store %arg13[%c2_131, %c0_132, %c0_133], %326 {strides = array<i32>} : memref<8x8x32xf32, #tpu.memory_space<vmem>>, vector<1x8x32xf32>,
    %327 = tpu.iota {dimensions = array<i32: 1>} : vector<8x32xi32>
    %cst_134 = arith.constant dense<0xFF800000> : vector<8xf32>
    %328 = vector.multi_reduction <maximumf>, %323, %cst_134 [1] : vector<8x32xf32> to vector<8xf32>
    %329 = vector.shape_cast %328 : vector<8xf32> to vector<8x1xf32>
    %330 = vector.broadcast %329 : vector<8x1xf32> to vector<8x32xf32>
    %331 = arith.cmpf oeq, %323, %330 : vector<8x32xf32>
    %c32_i32_135 = arith.constant 32 : i32
    %332 = vector.broadcast %c32_i32_135 : i32 to vector<8x32xi32>
    %333 = arith.select %331, %327, %332 : vector<8x32xi1>, vector<8x32xi32>
    %cst_136 = arith.constant dense<2147483647> : vector<8xi32>
    %334 = vector.multi_reduction <minsi>, %333, %cst_136 [1] : vector<8x32xi32> to vector<8xi32>
    %335 = vector.shape_cast %334 : vector<8xi32> to vector<8x1xi32>
    %336 = vector.broadcast %335 : vector<8x1xi32> to vector<8x32xi32>
    %337 = arith.cmpi eq, %327, %336 : vector<8x32xi32>
    %338 = arith.extui %337 : vector<8x32xi1> to vector<8x32xi32>
    %339 = arith.sitofp %338 : vector<8x32xi32> to vector<8x32xf32>
    %c0_137 = arith.constant 0 : index
    %c0_138 = arith.constant 0 : index
    %340 = vector.load %arg10[%c0_137, %c0_138] : memref<32x32xf32, #tpu.memory_space<vmem>>, vector<32x32xf32>
    %cst_139 = arith.constant dense<0.000000e+00> : vector<8x32xf32>
    %341 = tpu.matmul %339, %340, %cst_139 {dimension_numbers = #tpu.dot_dimension_numbers<[1], [0], [0], [1], [0, 0, 1, 1], [], []>} : vector<8x32xf32>, vector<32x32xf32>, vector<8x32xf32> -> vector<8x32xf32>
    %c2_140 = arith.constant 2 : index
    %c0_141 = arith.constant 0 : index
    %c0_142 = arith.constant 0 : index
    %342 = vector.load %arg3[%c2_140, %c0_141, %c0_142] : memref<8x8x32xf32, #tpu.memory_space<vmem>>, vector<1x8x32xf32>
    %343 = vector.shape_cast %342 : vector<1x8x32xf32> to vector<8x32xf32>
    %c2_143 = arith.constant 2 : index
    %344 = memref.load %arg1[%c2_143] : memref<8xi32, #tpu.memory_space<smem>>
    %c0_i32_144 = arith.constant 0 : i32
    %345 = arith.cmpi sgt, %344, %c0_i32_144 : i32
    %346 = arith.extui %345 : i1 to i32
    %347 = arith.sitofp %346 : i32 to f32
    %348 = vector.broadcast %347 : f32 to vector<8x32xf32>
    %349 = arith.mulf %348, %343 : vector<8x32xf32>
    %cst_145 = arith.constant 1.000000e+00 : f32
    %350 = arith.subf %cst_145, %347 : f32
    %351 = vector.broadcast %350 : f32 to vector<8x32xf32>
    %352 = arith.mulf %351, %341 : vector<8x32xf32>
    %353 = arith.addf %349, %352 : vector<8x32xf32>
    %c0_146 = arith.constant 0 : index
    %c0_147 = arith.constant 0 : index
    %354 = vector.load %arg7[%c0_146, %c0_147] : memref<32x128xf32, #tpu.memory_space<vmem>>, vector<32x128xf32>
    %cst_148 = arith.constant dense<0.000000e+00> : vector<8x128xf32>
    %355 = tpu.matmul %353, %354, %cst_148 {dimension_numbers = #tpu.dot_dimension_numbers<[1], [0], [0], [1], [0, 0, 1, 1], [], []>} : vector<8x32xf32>, vector<32x128xf32>, vector<8x128xf32> -> vector<8x128xf32>
    %c0_149 = arith.constant 0 : index
    %c0_150 = arith.constant 0 : index
    %356 = vector.load %arg8[%c0_149, %c0_150] : memref<32x128xf32, #tpu.memory_space<vmem>>, vector<32x128xf32>
    %cst_151 = arith.constant dense<0.000000e+00> : vector<8x128xf32>
    %357 = tpu.matmul %318, %356, %cst_151 {dimension_numbers = #tpu.dot_dimension_numbers<[1], [0], [0], [1], [0, 0, 1, 1], [], []>} : vector<8x32xf32>, vector<32x128xf32>, vector<8x128xf32> -> vector<8x128xf32>
    %358 = arith.addf %355, %357 : vector<8x128xf32>
    %c0_152 = arith.constant 0 : index
    %c0_153 = arith.constant 0 : index
    %359 = vector.load %arg9[%c0_152, %c0_153] : memref<1x128xf32, #tpu.memory_space<vmem>>, vector<1x128xf32>
    %360 = vector.broadcast %359 : vector<1x128xf32> to vector<8x128xf32>
    %361 = arith.addf %358, %360 : vector<8x128xf32>
    %362 = vector.extract_strided_slice %361 {offsets = [0, 0], sizes = [8, 32], strides = [1, 1]} : vector<8x128xf32> to vector<8x32xf32>
    %363 = arith.negf %362 : vector<8x32xf32>
    %364 = math.exp %363 : vector<8x32xf32>
    %cst_154 = arith.constant 1.000000e+00 : f32
    %365 = vector.broadcast %cst_154 : f32 to vector<8x32xf32>
    %366 = arith.addf %365, %364 : vector<8x32xf32>
    %367 = arith.divf %365, %366 : vector<8x32xf32>
    %368 = vector.extract_strided_slice %361 {offsets = [0, 32], sizes = [8, 32], strides = [1, 1]} : vector<8x128xf32> to vector<8x32xf32>
    %369 = arith.negf %368 : vector<8x32xf32>
    %370 = math.exp %369 : vector<8x32xf32>
    %cst_155 = arith.constant 1.000000e+00 : f32
    %371 = vector.broadcast %cst_155 : f32 to vector<8x32xf32>
    %372 = arith.addf %371, %370 : vector<8x32xf32>
    %373 = arith.divf %371, %372 : vector<8x32xf32>
    %374 = vector.extract_strided_slice %361 {offsets = [0, 64], sizes = [8, 32], strides = [1, 1]} : vector<8x128xf32> to vector<8x32xf32>
    %375 = math.tanh %374 : vector<8x32xf32>
    %376 = vector.extract_strided_slice %361 {offsets = [0, 96], sizes = [8, 32], strides = [1, 1]} : vector<8x128xf32> to vector<8x32xf32>
    %377 = arith.negf %376 : vector<8x32xf32>
    %378 = math.exp %377 : vector<8x32xf32>
    %cst_156 = arith.constant 1.000000e+00 : f32
    %379 = vector.broadcast %cst_156 : f32 to vector<8x32xf32>
    %380 = arith.addf %379, %378 : vector<8x32xf32>
    %381 = arith.divf %379, %380 : vector<8x32xf32>
    %382 = arith.mulf %373, %316 : vector<8x32xf32>
    %383 = arith.mulf %367, %375 : vector<8x32xf32>
    %384 = arith.addf %382, %383 : vector<8x32xf32>
    %385 = math.tanh %384 : vector<8x32xf32>
    %386 = arith.mulf %381, %385 : vector<8x32xf32>
    %c0_157 = arith.constant 0 : index
    %c0_158 = arith.constant 0 : index
    %387 = vector.load %arg11[%c0_157, %c0_158] : memref<32x32xf32, #tpu.memory_space<vmem>>, vector<32x32xf32>
    %cst_159 = arith.constant dense<0.000000e+00> : vector<8x32xf32>
    %388 = tpu.matmul %386, %387, %cst_159 {dimension_numbers = #tpu.dot_dimension_numbers<[1], [0], [0], [1], [0, 0, 1, 1], [], []>} : vector<8x32xf32>, vector<32x32xf32>, vector<8x32xf32> -> vector<8x32xf32>
    %c0_160 = arith.constant 0 : index
    %c0_161 = arith.constant 0 : index
    %389 = vector.load %arg12[%c0_160, %c0_161] : memref<1x32xf32, #tpu.memory_space<vmem>>, vector<1x32xf32>
    %390 = vector.broadcast %389 : vector<1x32xf32> to vector<8x32xf32>
    %391 = arith.addf %388, %390 : vector<8x32xf32>
    %c3_162 = arith.constant 3 : index
    %c0_163 = arith.constant 0 : index
    %c0_164 = arith.constant 0 : index
    %392 = vector.load %arg13[%c3_162, %c0_163, %c0_164] : memref<8x8x32xf32, #tpu.memory_space<vmem>>, vector<1x8x32xf32>
    %393 = vector.shape_cast %392 : vector<1x8x32xf32> to vector<8x32xf32>
    %394 = vector.shape_cast %391 : vector<8x32xf32> to vector<1x8x32xf32>
    tpu.vector_store %arg13[%c3_162, %c0_163, %c0_164], %394 {strides = array<i32>} : memref<8x8x32xf32, #tpu.memory_space<vmem>>, vector<1x8x32xf32>,
    %395 = tpu.iota {dimensions = array<i32: 1>} : vector<8x32xi32>
    %cst_165 = arith.constant dense<0xFF800000> : vector<8xf32>
    %396 = vector.multi_reduction <maximumf>, %391, %cst_165 [1] : vector<8x32xf32> to vector<8xf32>
    %397 = vector.shape_cast %396 : vector<8xf32> to vector<8x1xf32>
    %398 = vector.broadcast %397 : vector<8x1xf32> to vector<8x32xf32>
    %399 = arith.cmpf oeq, %391, %398 : vector<8x32xf32>
    %c32_i32_166 = arith.constant 32 : i32
    %400 = vector.broadcast %c32_i32_166 : i32 to vector<8x32xi32>
    %401 = arith.select %399, %395, %400 : vector<8x32xi1>, vector<8x32xi32>
    %cst_167 = arith.constant dense<2147483647> : vector<8xi32>
    %402 = vector.multi_reduction <minsi>, %401, %cst_167 [1] : vector<8x32xi32> to vector<8xi32>
    %403 = vector.shape_cast %402 : vector<8xi32> to vector<8x1xi32>
    %404 = vector.broadcast %403 : vector<8x1xi32> to vector<8x32xi32>
    %405 = arith.cmpi eq, %395, %404 : vector<8x32xi32>
    %406 = arith.extui %405 : vector<8x32xi1> to vector<8x32xi32>
    %407 = arith.sitofp %406 : vector<8x32xi32> to vector<8x32xf32>
    %c0_168 = arith.constant 0 : index
    %c0_169 = arith.constant 0 : index
    %408 = vector.load %arg10[%c0_168, %c0_169] : memref<32x32xf32, #tpu.memory_space<vmem>>, vector<32x32xf32>
    %cst_170 = arith.constant dense<0.000000e+00> : vector<8x32xf32>
    %409 = tpu.matmul %407, %408, %cst_170 {dimension_numbers = #tpu.dot_dimension_numbers<[1], [0], [0], [1], [0, 0, 1, 1], [], []>} : vector<8x32xf32>, vector<32x32xf32>, vector<8x32xf32> -> vector<8x32xf32>
    %c3_171 = arith.constant 3 : index
    %c0_172 = arith.constant 0 : index
    %c0_173 = arith.constant 0 : index
    %410 = vector.load %arg3[%c3_171, %c0_172, %c0_173] : memref<8x8x32xf32, #tpu.memory_space<vmem>>, vector<1x8x32xf32>
    %411 = vector.shape_cast %410 : vector<1x8x32xf32> to vector<8x32xf32>
    %c3_174 = arith.constant 3 : index
    %412 = memref.load %arg1[%c3_174] : memref<8xi32, #tpu.memory_space<smem>>
    %c0_i32_175 = arith.constant 0 : i32
    %413 = arith.cmpi sgt, %412, %c0_i32_175 : i32
    %414 = arith.extui %413 : i1 to i32
    %415 = arith.sitofp %414 : i32 to f32
    %416 = vector.broadcast %415 : f32 to vector<8x32xf32>
    %417 = arith.mulf %416, %411 : vector<8x32xf32>
    %cst_176 = arith.constant 1.000000e+00 : f32
    %418 = arith.subf %cst_176, %415 : f32
    %419 = vector.broadcast %418 : f32 to vector<8x32xf32>
    %420 = arith.mulf %419, %409 : vector<8x32xf32>
    %421 = arith.addf %417, %420 : vector<8x32xf32>
    %c0_177 = arith.constant 0 : index
    %c0_178 = arith.constant 0 : index
    %422 = vector.load %arg7[%c0_177, %c0_178] : memref<32x128xf32, #tpu.memory_space<vmem>>, vector<32x128xf32>
    %cst_179 = arith.constant dense<0.000000e+00> : vector<8x128xf32>
    %423 = tpu.matmul %421, %422, %cst_179 {dimension_numbers = #tpu.dot_dimension_numbers<[1], [0], [0], [1], [0, 0, 1, 1], [], []>} : vector<8x32xf32>, vector<32x128xf32>, vector<8x128xf32> -> vector<8x128xf32>
    %c0_180 = arith.constant 0 : index
    %c0_181 = arith.constant 0 : index
    %424 = vector.load %arg8[%c0_180, %c0_181] : memref<32x128xf32, #tpu.memory_space<vmem>>, vector<32x128xf32>
    %cst_182 = arith.constant dense<0.000000e+00> : vector<8x128xf32>
    %425 = tpu.matmul %386, %424, %cst_182 {dimension_numbers = #tpu.dot_dimension_numbers<[1], [0], [0], [1], [0, 0, 1, 1], [], []>} : vector<8x32xf32>, vector<32x128xf32>, vector<8x128xf32> -> vector<8x128xf32>
    %426 = arith.addf %423, %425 : vector<8x128xf32>
    %c0_183 = arith.constant 0 : index
    %c0_184 = arith.constant 0 : index
    %427 = vector.load %arg9[%c0_183, %c0_184] : memref<1x128xf32, #tpu.memory_space<vmem>>, vector<1x128xf32>
    %428 = vector.broadcast %427 : vector<1x128xf32> to vector<8x128xf32>
    %429 = arith.addf %426, %428 : vector<8x128xf32>
    %430 = vector.extract_strided_slice %429 {offsets = [0, 0], sizes = [8, 32], strides = [1, 1]} : vector<8x128xf32> to vector<8x32xf32>
    %431 = arith.negf %430 : vector<8x32xf32>
    %432 = math.exp %431 : vector<8x32xf32>
    %cst_185 = arith.constant 1.000000e+00 : f32
    %433 = vector.broadcast %cst_185 : f32 to vector<8x32xf32>
    %434 = arith.addf %433, %432 : vector<8x32xf32>
    %435 = arith.divf %433, %434 : vector<8x32xf32>
    %436 = vector.extract_strided_slice %429 {offsets = [0, 32], sizes = [8, 32], strides = [1, 1]} : vector<8x128xf32> to vector<8x32xf32>
    %437 = arith.negf %436 : vector<8x32xf32>
    %438 = math.exp %437 : vector<8x32xf32>
    %cst_186 = arith.constant 1.000000e+00 : f32
    %439 = vector.broadcast %cst_186 : f32 to vector<8x32xf32>
    %440 = arith.addf %439, %438 : vector<8x32xf32>
    %441 = arith.divf %439, %440 : vector<8x32xf32>
    %442 = vector.extract_strided_slice %429 {offsets = [0, 64], sizes = [8, 32], strides = [1, 1]} : vector<8x128xf32> to vector<8x32xf32>
    %443 = math.tanh %442 : vector<8x32xf32>
    %444 = vector.extract_strided_slice %429 {offsets = [0, 96], sizes = [8, 32], strides = [1, 1]} : vector<8x128xf32> to vector<8x32xf32>
    %445 = arith.negf %444 : vector<8x32xf32>
    %446 = math.exp %445 : vector<8x32xf32>
    %cst_187 = arith.constant 1.000000e+00 : f32
    %447 = vector.broadcast %cst_187 : f32 to vector<8x32xf32>
    %448 = arith.addf %447, %446 : vector<8x32xf32>
    %449 = arith.divf %447, %448 : vector<8x32xf32>
    %450 = arith.mulf %441, %384 : vector<8x32xf32>
    %451 = arith.mulf %435, %443 : vector<8x32xf32>
    %452 = arith.addf %450, %451 : vector<8x32xf32>
    %453 = math.tanh %452 : vector<8x32xf32>
    %454 = arith.mulf %449, %453 : vector<8x32xf32>
    %c0_188 = arith.constant 0 : index
    %c0_189 = arith.constant 0 : index
    %455 = vector.load %arg11[%c0_188, %c0_189] : memref<32x32xf32, #tpu.memory_space<vmem>>, vector<32x32xf32>
    %cst_190 = arith.constant dense<0.000000e+00> : vector<8x32xf32>
    %456 = tpu.matmul %454, %455, %cst_190 {dimension_numbers = #tpu.dot_dimension_numbers<[1], [0], [0], [1], [0, 0, 1, 1], [], []>} : vector<8x32xf32>, vector<32x32xf32>, vector<8x32xf32> -> vector<8x32xf32>
    %c0_191 = arith.constant 0 : index
    %c0_192 = arith.constant 0 : index
    %457 = vector.load %arg12[%c0_191, %c0_192] : memref<1x32xf32, #tpu.memory_space<vmem>>, vector<1x32xf32>
    %458 = vector.broadcast %457 : vector<1x32xf32> to vector<8x32xf32>
    %459 = arith.addf %456, %458 : vector<8x32xf32>
    %c4_193 = arith.constant 4 : index
    %c0_194 = arith.constant 0 : index
    %c0_195 = arith.constant 0 : index
    %460 = vector.load %arg13[%c4_193, %c0_194, %c0_195] : memref<8x8x32xf32, #tpu.memory_space<vmem>>, vector<1x8x32xf32>
    %461 = vector.shape_cast %460 : vector<1x8x32xf32> to vector<8x32xf32>
    %462 = vector.shape_cast %459 : vector<8x32xf32> to vector<1x8x32xf32>
    tpu.vector_store %arg13[%c4_193, %c0_194, %c0_195], %462 {strides = array<i32>} : memref<8x8x32xf32, #tpu.memory_space<vmem>>, vector<1x8x32xf32>,
    %463 = tpu.iota {dimensions = array<i32: 1>} : vector<8x32xi32>
    %cst_196 = arith.constant dense<0xFF800000> : vector<8xf32>
    %464 = vector.multi_reduction <maximumf>, %459, %cst_196 [1] : vector<8x32xf32> to vector<8xf32>
    %465 = vector.shape_cast %464 : vector<8xf32> to vector<8x1xf32>
    %466 = vector.broadcast %465 : vector<8x1xf32> to vector<8x32xf32>
    %467 = arith.cmpf oeq, %459, %466 : vector<8x32xf32>
    %c32_i32_197 = arith.constant 32 : i32
    %468 = vector.broadcast %c32_i32_197 : i32 to vector<8x32xi32>
    %469 = arith.select %467, %463, %468 : vector<8x32xi1>, vector<8x32xi32>
    %cst_198 = arith.constant dense<2147483647> : vector<8xi32>
    %470 = vector.multi_reduction <minsi>, %469, %cst_198 [1] : vector<8x32xi32> to vector<8xi32>
    %471 = vector.shape_cast %470 : vector<8xi32> to vector<8x1xi32>
    %472 = vector.broadcast %471 : vector<8x1xi32> to vector<8x32xi32>
    %473 = arith.cmpi eq, %463, %472 : vector<8x32xi32>
    %474 = arith.extui %473 : vector<8x32xi1> to vector<8x32xi32>
    %475 = arith.sitofp %474 : vector<8x32xi32> to vector<8x32xf32>
    %c0_199 = arith.constant 0 : index
    %c0_200 = arith.constant 0 : index
    %476 = vector.load %arg10[%c0_199, %c0_200] : memref<32x32xf32, #tpu.memory_space<vmem>>, vector<32x32xf32>
    %cst_201 = arith.constant dense<0.000000e+00> : vector<8x32xf32>
    %477 = tpu.matmul %475, %476, %cst_201 {dimension_numbers = #tpu.dot_dimension_numbers<[1], [0], [0], [1], [0, 0, 1, 1], [], []>} : vector<8x32xf32>, vector<32x32xf32>, vector<8x32xf32> -> vector<8x32xf32>
    %c4_202 = arith.constant 4 : index
    %c0_203 = arith.constant 0 : index
    %c0_204 = arith.constant 0 : index
    %478 = vector.load %arg3[%c4_202, %c0_203, %c0_204] : memref<8x8x32xf32, #tpu.memory_space<vmem>>, vector<1x8x32xf32>
    %479 = vector.shape_cast %478 : vector<1x8x32xf32> to vector<8x32xf32>
    %c4_205 = arith.constant 4 : index
    %480 = memref.load %arg1[%c4_205] : memref<8xi32, #tpu.memory_space<smem>>
    %c0_i32_206 = arith.constant 0 : i32
    %481 = arith.cmpi sgt, %480, %c0_i32_206 : i32
    %482 = arith.extui %481 : i1 to i32
    %483 = arith.sitofp %482 : i32 to f32
    %484 = vector.broadcast %483 : f32 to vector<8x32xf32>
    %485 = arith.mulf %484, %479 : vector<8x32xf32>
    %cst_207 = arith.constant 1.000000e+00 : f32
    %486 = arith.subf %cst_207, %483 : f32
    %487 = vector.broadcast %486 : f32 to vector<8x32xf32>
    %488 = arith.mulf %487, %477 : vector<8x32xf32>
    %489 = arith.addf %485, %488 : vector<8x32xf32>
    %c0_208 = arith.constant 0 : index
    %c0_209 = arith.constant 0 : index
    %490 = vector.load %arg7[%c0_208, %c0_209] : memref<32x128xf32, #tpu.memory_space<vmem>>, vector<32x128xf32>
    %cst_210 = arith.constant dense<0.000000e+00> : vector<8x128xf32>
    %491 = tpu.matmul %489, %490, %cst_210 {dimension_numbers = #tpu.dot_dimension_numbers<[1], [0], [0], [1], [0, 0, 1, 1], [], []>} : vector<8x32xf32>, vector<32x128xf32>, vector<8x128xf32> -> vector<8x128xf32>
    %c0_211 = arith.constant 0 : index
    %c0_212 = arith.constant 0 : index
    %492 = vector.load %arg8[%c0_211, %c0_212] : memref<32x128xf32, #tpu.memory_space<vmem>>, vector<32x128xf32>
    %cst_213 = arith.constant dense<0.000000e+00> : vector<8x128xf32>
    %493 = tpu.matmul %454, %492, %cst_213 {dimension_numbers = #tpu.dot_dimension_numbers<[1], [0], [0], [1], [0, 0, 1, 1], [], []>} : vector<8x32xf32>, vector<32x128xf32>, vector<8x128xf32> -> vector<8x128xf32>
    %494 = arith.addf %491, %493 : vector<8x128xf32>
    %c0_214 = arith.constant 0 : index
    %c0_215 = arith.constant 0 : index
    %495 = vector.load %arg9[%c0_214, %c0_215] : memref<1x128xf32, #tpu.memory_space<vmem>>, vector<1x128xf32>
    %496 = vector.broadcast %495 : vector<1x128xf32> to vector<8x128xf32>
    %497 = arith.addf %494, %496 : vector<8x128xf32>
    %498 = vector.extract_strided_slice %497 {offsets = [0, 0], sizes = [8, 32], strides = [1, 1]} : vector<8x128xf32> to vector<8x32xf32>
    %499 = arith.negf %498 : vector<8x32xf32>
    %500 = math.exp %499 : vector<8x32xf32>
    %cst_216 = arith.constant 1.000000e+00 : f32
    %501 = vector.broadcast %cst_216 : f32 to vector<8x32xf32>
    %502 = arith.addf %501, %500 : vector<8x32xf32>
    %503 = arith.divf %501, %502 : vector<8x32xf32>
    %504 = vector.extract_strided_slice %497 {offsets = [0, 32], sizes = [8, 32], strides = [1, 1]} : vector<8x128xf32> to vector<8x32xf32>
    %505 = arith.negf %504 : vector<8x32xf32>
    %506 = math.exp %505 : vector<8x32xf32>
    %cst_217 = arith.constant 1.000000e+00 : f32
    %507 = vector.broadcast %cst_217 : f32 to vector<8x32xf32>
    %508 = arith.addf %507, %506 : vector<8x32xf32>
    %509 = arith.divf %507, %508 : vector<8x32xf32>
    %510 = vector.extract_strided_slice %497 {offsets = [0, 64], sizes = [8, 32], strides = [1, 1]} : vector<8x128xf32> to vector<8x32xf32>
    %511 = math.tanh %510 : vector<8x32xf32>
    %512 = vector.extract_strided_slice %497 {offsets = [0, 96], sizes = [8, 32], strides = [1, 1]} : vector<8x128xf32> to vector<8x32xf32>
    %513 = arith.negf %512 : vector<8x32xf32>
    %514 = math.exp %513 : vector<8x32xf32>
    %cst_218 = arith.constant 1.000000e+00 : f32
    %515 = vector.broadcast %cst_218 : f32 to vector<8x32xf32>
    %516 = arith.addf %515, %514 : vector<8x32xf32>
    %517 = arith.divf %515, %516 : vector<8x32xf32>
    %518 = arith.mulf %509, %452 : vector<8x32xf32>
    %519 = arith.mulf %503, %511 : vector<8x32xf32>
    %520 = arith.addf %518, %519 : vector<8x32xf32>
    %521 = math.tanh %520 : vector<8x32xf32>
    %522 = arith.mulf %517, %521 : vector<8x32xf32>
    %c0_219 = arith.constant 0 : index
    %c0_220 = arith.constant 0 : index
    %523 = vector.load %arg11[%c0_219, %c0_220] : memref<32x32xf32, #tpu.memory_space<vmem>>, vector<32x32xf32>
    %cst_221 = arith.constant dense<0.000000e+00> : vector<8x32xf32>
    %524 = tpu.matmul %522, %523, %cst_221 {dimension_numbers = #tpu.dot_dimension_numbers<[1], [0], [0], [1], [0, 0, 1, 1], [], []>} : vector<8x32xf32>, vector<32x32xf32>, vector<8x32xf32> -> vector<8x32xf32>
    %c0_222 = arith.constant 0 : index
    %c0_223 = arith.constant 0 : index
    %525 = vector.load %arg12[%c0_222, %c0_223] : memref<1x32xf32, #tpu.memory_space<vmem>>, vector<1x32xf32>
    %526 = vector.broadcast %525 : vector<1x32xf32> to vector<8x32xf32>
    %527 = arith.addf %524, %526 : vector<8x32xf32>
    %c5_224 = arith.constant 5 : index
    %c0_225 = arith.constant 0 : index
    %c0_226 = arith.constant 0 : index
    %528 = vector.load %arg13[%c5_224, %c0_225, %c0_226] : memref<8x8x32xf32, #tpu.memory_space<vmem>>, vector<1x8x32xf32>
    %529 = vector.shape_cast %528 : vector<1x8x32xf32> to vector<8x32xf32>
    %530 = vector.shape_cast %527 : vector<8x32xf32> to vector<1x8x32xf32>
    tpu.vector_store %arg13[%c5_224, %c0_225, %c0_226], %530 {strides = array<i32>} : memref<8x8x32xf32, #tpu.memory_space<vmem>>, vector<1x8x32xf32>,
    %531 = tpu.iota {dimensions = array<i32: 1>} : vector<8x32xi32>
    %cst_227 = arith.constant dense<0xFF800000> : vector<8xf32>
    %532 = vector.multi_reduction <maximumf>, %527, %cst_227 [1] : vector<8x32xf32> to vector<8xf32>
    %533 = vector.shape_cast %532 : vector<8xf32> to vector<8x1xf32>
    %534 = vector.broadcast %533 : vector<8x1xf32> to vector<8x32xf32>
    %535 = arith.cmpf oeq, %527, %534 : vector<8x32xf32>
    %c32_i32_228 = arith.constant 32 : i32
    %536 = vector.broadcast %c32_i32_228 : i32 to vector<8x32xi32>
    %537 = arith.select %535, %531, %536 : vector<8x32xi1>, vector<8x32xi32>
    %cst_229 = arith.constant dense<2147483647> : vector<8xi32>
    %538 = vector.multi_reduction <minsi>, %537, %cst_229 [1] : vector<8x32xi32> to vector<8xi32>
    %539 = vector.shape_cast %538 : vector<8xi32> to vector<8x1xi32>
    %540 = vector.broadcast %539 : vector<8x1xi32> to vector<8x32xi32>
    %541 = arith.cmpi eq, %531, %540 : vector<8x32xi32>
    %542 = arith.extui %541 : vector<8x32xi1> to vector<8x32xi32>
    %543 = arith.sitofp %542 : vector<8x32xi32> to vector<8x32xf32>
    %c0_230 = arith.constant 0 : index
    %c0_231 = arith.constant 0 : index
    %544 = vector.load %arg10[%c0_230, %c0_231] : memref<32x32xf32, #tpu.memory_space<vmem>>, vector<32x32xf32>
    %cst_232 = arith.constant dense<0.000000e+00> : vector<8x32xf32>
    %545 = tpu.matmul %543, %544, %cst_232 {dimension_numbers = #tpu.dot_dimension_numbers<[1], [0], [0], [1], [0, 0, 1, 1], [], []>} : vector<8x32xf32>, vector<32x32xf32>, vector<8x32xf32> -> vector<8x32xf32>
    %c5_233 = arith.constant 5 : index
    %c0_234 = arith.constant 0 : index
    %c0_235 = arith.constant 0 : index
    %546 = vector.load %arg3[%c5_233, %c0_234, %c0_235] : memref<8x8x32xf32, #tpu.memory_space<vmem>>, vector<1x8x32xf32>
    %547 = vector.shape_cast %546 : vector<1x8x32xf32> to vector<8x32xf32>
    %c5_236 = arith.constant 5 : index
    %548 = memref.load %arg1[%c5_236] : memref<8xi32, #tpu.memory_space<smem>>
    %c0_i32_237 = arith.constant 0 : i32
    %549 = arith.cmpi sgt, %548, %c0_i32_237 : i32
    %550 = arith.extui %549 : i1 to i32
    %551 = arith.sitofp %550 : i32 to f32
    %552 = vector.broadcast %551 : f32 to vector<8x32xf32>
    %553 = arith.mulf %552, %547 : vector<8x32xf32>
    %cst_238 = arith.constant 1.000000e+00 : f32
    %554 = arith.subf %cst_238, %551 : f32
    %555 = vector.broadcast %554 : f32 to vector<8x32xf32>
    %556 = arith.mulf %555, %545 : vector<8x32xf32>
    %557 = arith.addf %553, %556 : vector<8x32xf32>
    %c0_239 = arith.constant 0 : index
    %c0_240 = arith.constant 0 : index
    %558 = vector.load %arg7[%c0_239, %c0_240] : memref<32x128xf32, #tpu.memory_space<vmem>>, vector<32x128xf32>
    %cst_241 = arith.constant dense<0.000000e+00> : vector<8x128xf32>
    %559 = tpu.matmul %557, %558, %cst_241 {dimension_numbers = #tpu.dot_dimension_numbers<[1], [0], [0], [1], [0, 0, 1, 1], [], []>} : vector<8x32xf32>, vector<32x128xf32>, vector<8x128xf32> -> vector<8x128xf32>
    %c0_242 = arith.constant 0 : index
    %c0_243 = arith.constant 0 : index
    %560 = vector.load %arg8[%c0_242, %c0_243] : memref<32x128xf32, #tpu.memory_space<vmem>>, vector<32x128xf32>
    %cst_244 = arith.constant dense<0.000000e+00> : vector<8x128xf32>
    %561 = tpu.matmul %522, %560, %cst_244 {dimension_numbers = #tpu.dot_dimension_numbers<[1], [0], [0], [1], [0, 0, 1, 1], [], []>} : vector<8x32xf32>, vector<32x128xf32>, vector<8x128xf32> -> vector<8x128xf32>
    %562 = arith.addf %559, %561 : vector<8x128xf32>
    %c0_245 = arith.constant 0 : index
    %c0_246 = arith.constant 0 : index
    %563 = vector.load %arg9[%c0_245, %c0_246] : memref<1x128xf32, #tpu.memory_space<vmem>>, vector<1x128xf32>
    %564 = vector.broadcast %563 : vector<1x128xf32> to vector<8x128xf32>
    %565 = arith.addf %562, %564 : vector<8x128xf32>
    %566 = vector.extract_strided_slice %565 {offsets = [0, 0], sizes = [8, 32], strides = [1, 1]} : vector<8x128xf32> to vector<8x32xf32>
    %567 = arith.negf %566 : vector<8x32xf32>
    %568 = math.exp %567 : vector<8x32xf32>
    %cst_247 = arith.constant 1.000000e+00 : f32
    %569 = vector.broadcast %cst_247 : f32 to vector<8x32xf32>
    %570 = arith.addf %569, %568 : vector<8x32xf32>
    %571 = arith.divf %569, %570 : vector<8x32xf32>
    %572 = vector.extract_strided_slice %565 {offsets = [0, 32], sizes = [8, 32], strides = [1, 1]} : vector<8x128xf32> to vector<8x32xf32>
    %573 = arith.negf %572 : vector<8x32xf32>
    %574 = math.exp %573 : vector<8x32xf32>
    %cst_248 = arith.constant 1.000000e+00 : f32
    %575 = vector.broadcast %cst_248 : f32 to vector<8x32xf32>
    %576 = arith.addf %575, %574 : vector<8x32xf32>
    %577 = arith.divf %575, %576 : vector<8x32xf32>
    %578 = vector.extract_strided_slice %565 {offsets = [0, 64], sizes = [8, 32], strides = [1, 1]} : vector<8x128xf32> to vector<8x32xf32>
    %579 = math.tanh %578 : vector<8x32xf32>
    %580 = vector.extract_strided_slice %565 {offsets = [0, 96], sizes = [8, 32], strides = [1, 1]} : vector<8x128xf32> to vector<8x32xf32>
    %581 = arith.negf %580 : vector<8x32xf32>
    %582 = math.exp %581 : vector<8x32xf32>
    %cst_249 = arith.constant 1.000000e+00 : f32
    %583 = vector.broadcast %cst_249 : f32 to vector<8x32xf32>
    %584 = arith.addf %583, %582 : vector<8x32xf32>
    %585 = arith.divf %583, %584 : vector<8x32xf32>
    %586 = arith.mulf %577, %520 : vector<8x32xf32>
    %587 = arith.mulf %571, %579 : vector<8x32xf32>
    %588 = arith.addf %586, %587 : vector<8x32xf32>
    %589 = math.tanh %588 : vector<8x32xf32>
    %590 = arith.mulf %585, %589 : vector<8x32xf32>
    %c0_250 = arith.constant 0 : index
    %c0_251 = arith.constant 0 : index
    %591 = vector.load %arg11[%c0_250, %c0_251] : memref<32x32xf32, #tpu.memory_space<vmem>>, vector<32x32xf32>
    %cst_252 = arith.constant dense<0.000000e+00> : vector<8x32xf32>
    %592 = tpu.matmul %590, %591, %cst_252 {dimension_numbers = #tpu.dot_dimension_numbers<[1], [0], [0], [1], [0, 0, 1, 1], [], []>} : vector<8x32xf32>, vector<32x32xf32>, vector<8x32xf32> -> vector<8x32xf32>
    %c0_253 = arith.constant 0 : index
    %c0_254 = arith.constant 0 : index
    %593 = vector.load %arg12[%c0_253, %c0_254] : memref<1x32xf32, #tpu.memory_space<vmem>>, vector<1x32xf32>
    %594 = vector.broadcast %593 : vector<1x32xf32> to vector<8x32xf32>
    %595 = arith.addf %592, %594 : vector<8x32xf32>
    %c6 = arith.constant 6 : index
    %c0_255 = arith.constant 0 : index
    %c0_256 = arith.constant 0 : index
    %596 = vector.load %arg13[%c6, %c0_255, %c0_256] : memref<8x8x32xf32, #tpu.memory_space<vmem>>, vector<1x8x32xf32>
    %597 = vector.shape_cast %596 : vector<1x8x32xf32> to vector<8x32xf32>
    %598 = vector.shape_cast %595 : vector<8x32xf32> to vector<1x8x32xf32>
    tpu.vector_store %arg13[%c6, %c0_255, %c0_256], %598 {strides = array<i32>} : memref<8x8x32xf32, #tpu.memory_space<vmem>>, vector<1x8x32xf32>,
    %599 = tpu.iota {dimensions = array<i32: 1>} : vector<8x32xi32>
    %cst_257 = arith.constant dense<0xFF800000> : vector<8xf32>
    %600 = vector.multi_reduction <maximumf>, %595, %cst_257 [1] : vector<8x32xf32> to vector<8xf32>
    %601 = vector.shape_cast %600 : vector<8xf32> to vector<8x1xf32>
    %602 = vector.broadcast %601 : vector<8x1xf32> to vector<8x32xf32>
    %603 = arith.cmpf oeq, %595, %602 : vector<8x32xf32>
    %c32_i32_258 = arith.constant 32 : i32
    %604 = vector.broadcast %c32_i32_258 : i32 to vector<8x32xi32>
    %605 = arith.select %603, %599, %604 : vector<8x32xi1>, vector<8x32xi32>
    %cst_259 = arith.constant dense<2147483647> : vector<8xi32>
    %606 = vector.multi_reduction <minsi>, %605, %cst_259 [1] : vector<8x32xi32> to vector<8xi32>
    %607 = vector.shape_cast %606 : vector<8xi32> to vector<8x1xi32>
    %608 = vector.broadcast %607 : vector<8x1xi32> to vector<8x32xi32>
    %609 = arith.cmpi eq, %599, %608 : vector<8x32xi32>
    %610 = arith.extui %609 : vector<8x32xi1> to vector<8x32xi32>
    %611 = arith.sitofp %610 : vector<8x32xi32> to vector<8x32xf32>
    %c0_260 = arith.constant 0 : index
    %c0_261 = arith.constant 0 : index
    %612 = vector.load %arg10[%c0_260, %c0_261] : memref<32x32xf32, #tpu.memory_space<vmem>>, vector<32x32xf32>
    %cst_262 = arith.constant dense<0.000000e+00> : vector<8x32xf32>
    %613 = tpu.matmul %611, %612, %cst_262 {dimension_numbers = #tpu.dot_dimension_numbers<[1], [0], [0], [1], [0, 0, 1, 1], [], []>} : vector<8x32xf32>, vector<32x32xf32>, vector<8x32xf32> -> vector<8x32xf32>
    %c6_263 = arith.constant 6 : index
    %c0_264 = arith.constant 0 : index
    %c0_265 = arith.constant 0 : index
    %614 = vector.load %arg3[%c6_263, %c0_264, %c0_265] : memref<8x8x32xf32, #tpu.memory_space<vmem>>, vector<1x8x32xf32>
    %615 = vector.shape_cast %614 : vector<1x8x32xf32> to vector<8x32xf32>
    %c6_266 = arith.constant 6 : index
    %616 = memref.load %arg1[%c6_266] : memref<8xi32, #tpu.memory_space<smem>>
    %c0_i32_267 = arith.constant 0 : i32
    %617 = arith.cmpi sgt, %616, %c0_i32_267 : i32
    %618 = arith.extui %617 : i1 to i32
    %619 = arith.sitofp %618 : i32 to f32
    %620 = vector.broadcast %619 : f32 to vector<8x32xf32>
    %621 = arith.mulf %620, %615 : vector<8x32xf32>
    %cst_268 = arith.constant 1.000000e+00 : f32
    %622 = arith.subf %cst_268, %619 : f32
    %623 = vector.broadcast %622 : f32 to vector<8x32xf32>
    %624 = arith.mulf %623, %613 : vector<8x32xf32>
    %625 = arith.addf %621, %624 : vector<8x32xf32>
    %c0_269 = arith.constant 0 : index
    %c0_270 = arith.constant 0 : index
    %626 = vector.load %arg7[%c0_269, %c0_270] : memref<32x128xf32, #tpu.memory_space<vmem>>, vector<32x128xf32>
    %cst_271 = arith.constant dense<0.000000e+00> : vector<8x128xf32>
    %627 = tpu.matmul %625, %626, %cst_271 {dimension_numbers = #tpu.dot_dimension_numbers<[1], [0], [0], [1], [0, 0, 1, 1], [], []>} : vector<8x32xf32>, vector<32x128xf32>, vector<8x128xf32> -> vector<8x128xf32>
    %c0_272 = arith.constant 0 : index
    %c0_273 = arith.constant 0 : index
    %628 = vector.load %arg8[%c0_272, %c0_273] : memref<32x128xf32, #tpu.memory_space<vmem>>, vector<32x128xf32>
    %cst_274 = arith.constant dense<0.000000e+00> : vector<8x128xf32>
    %629 = tpu.matmul %590, %628, %cst_274 {dimension_numbers = #tpu.dot_dimension_numbers<[1], [0], [0], [1], [0, 0, 1, 1], [], []>} : vector<8x32xf32>, vector<32x128xf32>, vector<8x128xf32> -> vector<8x128xf32>
    %630 = arith.addf %627, %629 : vector<8x128xf32>
    %c0_275 = arith.constant 0 : index
    %c0_276 = arith.constant 0 : index
    %631 = vector.load %arg9[%c0_275, %c0_276] : memref<1x128xf32, #tpu.memory_space<vmem>>, vector<1x128xf32>
    %632 = vector.broadcast %631 : vector<1x128xf32> to vector<8x128xf32>
    %633 = arith.addf %630, %632 : vector<8x128xf32>
    %634 = vector.extract_strided_slice %633 {offsets = [0, 0], sizes = [8, 32], strides = [1, 1]} : vector<8x128xf32> to vector<8x32xf32>
    %635 = arith.negf %634 : vector<8x32xf32>
    %636 = math.exp %635 : vector<8x32xf32>
    %cst_277 = arith.constant 1.000000e+00 : f32
    %637 = vector.broadcast %cst_277 : f32 to vector<8x32xf32>
    %638 = arith.addf %637, %636 : vector<8x32xf32>
    %639 = arith.divf %637, %638 : vector<8x32xf32>
    %640 = vector.extract_strided_slice %633 {offsets = [0, 32], sizes = [8, 32], strides = [1, 1]} : vector<8x128xf32> to vector<8x32xf32>
    %641 = arith.negf %640 : vector<8x32xf32>
    %642 = math.exp %641 : vector<8x32xf32>
    %cst_278 = arith.constant 1.000000e+00 : f32
    %643 = vector.broadcast %cst_278 : f32 to vector<8x32xf32>
    %644 = arith.addf %643, %642 : vector<8x32xf32>
    %645 = arith.divf %643, %644 : vector<8x32xf32>
    %646 = vector.extract_strided_slice %633 {offsets = [0, 64], sizes = [8, 32], strides = [1, 1]} : vector<8x128xf32> to vector<8x32xf32>
    %647 = math.tanh %646 : vector<8x32xf32>
    %648 = vector.extract_strided_slice %633 {offsets = [0, 96], sizes = [8, 32], strides = [1, 1]} : vector<8x128xf32> to vector<8x32xf32>
    %649 = arith.negf %648 : vector<8x32xf32>
    %650 = math.exp %649 : vector<8x32xf32>
    %cst_279 = arith.constant 1.000000e+00 : f32
    %651 = vector.broadcast %cst_279 : f32 to vector<8x32xf32>
    %652 = arith.addf %651, %650 : vector<8x32xf32>
    %653 = arith.divf %651, %652 : vector<8x32xf32>
    %654 = arith.mulf %645, %588 : vector<8x32xf32>
    %655 = arith.mulf %639, %647 : vector<8x32xf32>
    %656 = arith.addf %654, %655 : vector<8x32xf32>
    %657 = math.tanh %656 : vector<8x32xf32>
    %658 = arith.mulf %653, %657 : vector<8x32xf32>
    %c0_280 = arith.constant 0 : index
    %c0_281 = arith.constant 0 : index
    %659 = vector.load %arg11[%c0_280, %c0_281] : memref<32x32xf32, #tpu.memory_space<vmem>>, vector<32x32xf32>
    %cst_282 = arith.constant dense<0.000000e+00> : vector<8x32xf32>
    %660 = tpu.matmul %658, %659, %cst_282 {dimension_numbers = #tpu.dot_dimension_numbers<[1], [0], [0], [1], [0, 0, 1, 1], [], []>} : vector<8x32xf32>, vector<32x32xf32>, vector<8x32xf32> -> vector<8x32xf32>
    %c0_283 = arith.constant 0 : index
    %c0_284 = arith.constant 0 : index
    %661 = vector.load %arg12[%c0_283, %c0_284] : memref<1x32xf32, #tpu.memory_space<vmem>>, vector<1x32xf32>
    %662 = vector.broadcast %661 : vector<1x32xf32> to vector<8x32xf32>
    %663 = arith.addf %660, %662 : vector<8x32xf32>
    %c7 = arith.constant 7 : index
    %c0_285 = arith.constant 0 : index
    %c0_286 = arith.constant 0 : index
    %664 = vector.load %arg13[%c7, %c0_285, %c0_286] : memref<8x8x32xf32, #tpu.memory_space<vmem>>, vector<1x8x32xf32>
    %665 = vector.shape_cast %664 : vector<1x8x32xf32> to vector<8x32xf32>
    %666 = vector.shape_cast %663 : vector<8x32xf32> to vector<1x8x32xf32>
    tpu.vector_store %arg13[%c7, %c0_285, %c0_286], %666 {strides = array<i32>} : memref<8x8x32xf32, #tpu.memory_space<vmem>>, vector<1x8x32xf32>,
    return
  }
  func.func @transform_0(%arg0: i32, %arg1: memref<8xi32, #tpu.memory_space<smem>>) -> (i32, i32, i32) {
    %c0_i32 = arith.constant 0 : i32
    %c0_i32_0 = arith.constant 0 : i32
    %c0_i32_1 = arith.constant 0 : i32
    %c0_i32_2 = arith.constant 0 : i32
    return %c0_i32, %c0_i32_0, %c0_i32_1 : i32, i32, i32
  }
  func.func @transform_1(%arg0: i32, %arg1: memref<8xi32, #tpu.memory_space<smem>>) -> (i32, i32, i32) {
    %c0_i32 = arith.constant 0 : i32
    %c0_i32_0 = arith.constant 0 : i32
    %c0_i32_1 = arith.constant 0 : i32
    %c0_i32_2 = arith.constant 0 : i32
    return %c0_i32, %c0_i32_0, %c0_i32_1 : i32, i32, i32
  }
  func.func @transform_2(%arg0: i32, %arg1: memref<8xi32, #tpu.memory_space<smem>>) -> (i32, i32) {
    %c0_i32 = arith.constant 0 : i32
    %c0_i32_0 = arith.constant 0 : i32
    %c0_i32_1 = arith.constant 0 : i32
    return %c0_i32, %c0_i32_0 : i32, i32
  }
  func.func @transform_3(%arg0: i32, %arg1: memref<8xi32, #tpu.memory_space<smem>>) -> (i32, i32) {
    %c0_i32 = arith.constant 0 : i32
    %c0_i32_0 = arith.constant 0 : i32
    %c0_i32_1 = arith.constant 0 : i32
    return %c0_i32, %c0_i32_0 : i32, i32
  }
  func.func @transform_4(%arg0: i32, %arg1: memref<8xi32, #tpu.memory_space<smem>>) -> (i32, i32) {
    %c0_i32 = arith.constant 0 : i32
    %c0_i32_0 = arith.constant 0 : i32
    %c0_i32_1 = arith.constant 0 : i32
    return %c0_i32, %c0_i32_0 : i32, i32
  }
  func.func @transform_5(%arg0: i32, %arg1: memref<8xi32, #tpu.memory_space<smem>>) -> (i32, i32) {
    %c0_i32 = arith.constant 0 : i32
    %c0_i32_0 = arith.constant 0 : i32
    %c0_i32_1 = arith.constant 0 : i32
    return %c0_i32, %c0_i32_0 : i32, i32
  }
  func.func @transform_6(%arg0: i32, %arg1: memref<8xi32, #tpu.memory_space<smem>>) -> (i32, i32) {
    %c0_i32 = arith.constant 0 : i32
    %c0_i32_0 = arith.constant 0 : i32
    %c0_i32_1 = arith.constant 0 : i32
    return %c0_i32, %c0_i32_0 : i32, i32
  }
  func.func @transform_7(%arg0: i32, %arg1: memref<8xi32, #tpu.memory_space<smem>>) -> (i32, i32) {
    %c0_i32 = arith.constant 0 : i32
    %c0_i32_0 = arith.constant 0 : i32
    %c0_i32_1 = arith.constant 0 : i32
    return %c0_i32, %c0_i32_0 : i32, i32
  }
  func.func @transform_8(%arg0: i32, %arg1: memref<8xi32, #tpu.memory_space<smem>>) -> (i32, i32) {
    %c0_i32 = arith.constant 0 : i32
    %c0_i32_0 = arith.constant 0 : i32
    %c0_i32_1 = arith.constant 0 : i32
    return %c0_i32, %c0_i32_0 : i32, i32
  }
  func.func @transform_9(%arg0: i32, %arg1: memref<8xi32, #tpu.memory_space<smem>>) -> (i32, i32) {
    %c0_i32 = arith.constant 0 : i32
    %c0_i32_0 = arith.constant 0 : i32
    %c0_i32_1 = arith.constant 0 : i32
    return %c0_i32, %c0_i32_0 : i32, i32
  }
  func.func @transform_10(%arg0: i32, %arg1: memref<8xi32, #tpu.memory_space<smem>>) -> (i32, i32) {
    %c0_i32 = arith.constant 0 : i32
    %c0_i32_0 = arith.constant 0 : i32
    %c0_i32_1 = arith.constant 0 : i32
    return %c0_i32, %c0_i32_0 : i32, i32
  }
  func.func @transform_11(%arg0: i32, %arg1: memref<8xi32, #tpu.memory_space<smem>>) -> (i32, i32, i32) {
    %c0_i32 = arith.constant 0 : i32
    %c0_i32_0 = arith.constant 0 : i32
    %c0_i32_1 = arith.constant 0 : i32
    %c0_i32_2 = arith.constant 0 : i32
    return %c0_i32, %c0_i32_0, %c0_i32_1 : i32, i32, i32
  }
}

</mosaic_0001>

<llo_original>
// kernel: _device_forward.1
$region0: #{_device_forward.1}
  #allocation0 [shape = 'u32[]', space=smem, size = 0x4, offset = 0x4, fixed_abs, tag = 'smem constant byte address 0x4 - core index']
  #allocation1 [shape = 'u32[144,128]{1,0:T(1,128)}', space=vmem, size = 0x12000, scoped, tag = 'internal scratch']
  #allocation2 [shape = 's32[1]{0}', space=sflag, size = 0x4, scoped, tag = 'scoped memory for _device_forward.1']
  #allocation3 [shape = 'u8[512]{0}', space=smem, size = 0x200, scoped, tag = 'prefetched SMEM operand 0']
  %s0 = inlined_call_operand.vmem [shape: s32[8], index: 0, kind: input, shape index: {}]
  %s1 = inlined_call_operand.vmem [shape: f32[6,8,32], index: 1, kind: input, shape index: {}]
  %s2 = inlined_call_operand.vmem [shape: f32[8,8,32], index: 2, kind: input, shape index: {}]
  %s3 = inlined_call_operand.vmem [shape: f32[32,128], index: 3, kind: input, shape index: {}]
  %s4 = inlined_call_operand.vmem [shape: f32[32,128], index: 4, kind: input, shape index: {}]
  %s5 = inlined_call_operand.vmem [shape: f32[1,128], index: 5, kind: input, shape index: {}]
  %s6 = inlined_call_operand.vmem [shape: f32[32,128], index: 6, kind: input, shape index: {}]
  %s7 = inlined_call_operand.vmem [shape: f32[32,128], index: 7, kind: input, shape index: {}]
  %s8 = inlined_call_operand.vmem [shape: f32[1,128], index: 8, kind: input, shape index: {}]
  %s9 = inlined_call_operand.vmem [shape: f32[32,32], index: 9, kind: input, shape index: {}]
  %s10 = inlined_call_operand.vmem [shape: f32[32,32], index: 10, kind: input, shape index: {}]
  %s11 = inlined_call_operand.vmem [shape: f32[1,32], index: 11, kind: input, shape index: {}]
  %s12 = inlined_call_operand.hbm [shape: f32[8,8,32], index: 12, kind: output, shape index: {}]
  %s13 = sld [smem:[#allocation0]]
  $region54: #{_device_forward.1} parent=0
    _
  %s15 = ssub.s32 1, %s13
  %s16 = scalar_select 0, %s15, %s13
  %s17 = sshll.u32 %s0, 4
  %s18 = int_to_ptr.vmem [resolvable:$true] %s17
  %20 = dma.vmem_to_smem %s18, 16, [#allocation3], [#allocation2]
  %21 = dma.done [#allocation2], 16
  %22 = sfence
  $region1: #{_device_forward.1} parent=0
    #allocation4 [shape = 'u8[32768]{0}', space=vmem, size = 0x8000, scoped, tag = 'output window, operand 0, single buffered']
    #allocation5 [shape = 's32[1]{0}', space=sflag, size = 0x4, scoped, tag = 'scoped memory for _device_forward.1']
    %23 = vsyncpa [#allocation5], 0
    // Predicated region
    $region2: #{_device_forward.1} parent=1 // pred_check
      _
    $region3: #{_device_forward.1} parent=1 // pred_check_branch
      %25 = sbr.rel (0) target = $region5
    $region4: #{_device_forward.1} parent=1 // pred_region
      _
    $region5: #{_device_forward.1} parent=1 // pred_fallthru
      _
    // Predicated region
    $region6: #{_device_forward.1} parent=1 // pred_check
      _
    $region7: #{_device_forward.1} parent=1 // pred_check_branch
      %27 = sbr.rel (0) target = $region9
    $region8: #{_device_forward.1} parent=1 // pred_region
      _
    $region9: #{_device_forward.1} parent=1 // pred_fallthru
      _
    // Predicated region
    $region10: #{_device_forward.1} parent=1 // pred_check
      _
    $region11: #{_device_forward.1} parent=1 // pred_check_branch
      %29 = sbr.rel (0) target = $region13
    $region12: #{_device_forward.1} parent=1 // pred_region
      _
    $region13: #{_device_forward.1} parent=1 // pred_fallthru
      _
    // Predicated region
    $region14: #{_device_forward.1} parent=1 // pred_check
      _
    $region15: #{_device_forward.1} parent=1 // pred_check_branch
      %31 = sbr.rel (0) target = $region17
    $region16: #{_device_forward.1} parent=1 // pred_region
      _
    $region17: #{_device_forward.1} parent=1 // pred_fallthru
      _
    // Predicated region
    $region18: #{_device_forward.1} parent=1 // pred_check
      _
    $region19: #{_device_forward.1} parent=1 // pred_check_branch
      %33 = sbr.rel (0) target = $region21
    $region20: #{_device_forward.1} parent=1 // pred_region
      _
    $region21: #{_device_forward.1} parent=1 // pred_fallthru
      _
    // Predicated region
    $region22: #{_device_forward.1} parent=1 // pred_check
      _
    $region23: #{_device_forward.1} parent=1 // pred_check_branch
      %35 = sbr.rel (0) target = $region25
    $region24: #{_device_forward.1} parent=1 // pred_region
      _
    $region25: #{_device_forward.1} parent=1 // pred_fallthru
      _
    // Predicated region
    $region26: #{_device_forward.1} parent=1 // pred_check
      _
    $region27: #{_device_forward.1} parent=1 // pred_check_branch
      %37 = sbr.rel (0) target = $region29
    $region28: #{_device_forward.1} parent=1 // pred_region
      _
    $region29: #{_device_forward.1} parent=1 // pred_fallthru
      _
    // Predicated region
    $region30: #{_device_forward.1} parent=1 // pred_check
      _
    $region31: #{_device_forward.1} parent=1 // pred_check_branch
      %39 = sbr.rel (0) target = $region33
    $region32: #{_device_forward.1} parent=1 // pred_region
      _
    $region33: #{_device_forward.1} parent=1 // pred_fallthru
      _
    // Predicated region
    $region34: #{_device_forward.1} parent=1 // pred_check
      _
    $region35: #{_device_forward.1} parent=1 // pred_check_branch
      %41 = sbr.rel (0) target = $region37
    $region36: #{_device_forward.1} parent=1 // pred_region
      _
    $region37: #{_device_forward.1} parent=1 // pred_fallthru
      _
    // Predicated region
    $region38: #{_device_forward.1} parent=1 // pred_check
      _
    $region39: #{_device_forward.1} parent=1 // pred_check_branch
      %43 = sbr.rel (0) target = $region41
    $region40: #{_device_forward.1} parent=1 // pred_region
      _
    $region41: #{_device_forward.1} parent=1 // pred_fallthru
      _
    // Predicated region
    $region42: #{_device_forward.1} parent=1 // pred_check
      _
    $region43: #{_device_forward.1} parent=1 // pred_check_branch
      %45 = sbr.rel (0) target = $region45
    $region44: #{_device_forward.1} parent=1 // pred_region
      _
    $region45: #{_device_forward.1} parent=1 // pred_fallthru
      _
    %v46 = vld [vmem:[%s1] sm:$0xff]
    %v47 = vld [vmem:[%s3] sm:$0xff]
    %v48 = vld [vmem:[%s3 + $0x8] sm:$0xff]
    %v49 = vld [vmem:[%s3 + $0x10] sm:$0xff]
    %v50 = vld [vmem:[%s3 + $0x18] sm:$0xff]
    %v51 = vld [vmem:[%s4] sm:$0xff]
    %v52 = vld [vmem:[%s4 + $0x8] sm:$0xff]
    %v53 = vld [vmem:[%s4 + $0x10] sm:$0xff]
    %v54 = vld [vmem:[%s4 + $0x18] sm:$0xff]
    %vm55 = vcmask 261120
    %v57 = vsel %vm55, 0.0, 0
    %59 = vmatprep.subr.mxu0 0.0
    %60 = vmatpush1.msra.mxu0 %v51
    %61 = vmatprep.subr.mxu0 0.0
    %62 = vmatpush1.msra.mxu0 %v52
    %63 = vmatprep.subr.mxu0 0.0
    %64 = vmatpush1.msra.mxu0 %v53
    %65 = vmatprep.subr.mxu0 0.0
    %66 = vmatpush1.msra.mxu0 %v54
    %67 = vmatprep.subr.mxu0 0.0
    %68 = vmatpush1.msra.mxu0 0.0
    %69 = vmatprep.subr.mxu0 0.0
    %70 = vmatpush1.msra.mxu0 0.0
    %71 = vmatprep.subr.mxu0 0.0
    %72 = vmatpush1.msra.mxu0 0.0
    %73 = vmatprep.subr.mxu0 0.0
    %74 = vmatpush1.msra.mxu0 0.0
    %75 = vmatprep.subr.mxu0 0.0
    %76 = vmatpush1.msra.mxu0 0.0
    %77 = vmatprep.subr.mxu0 0.0
    %78 = vmatpush1.msra.mxu0 0.0
    %79 = vmatprep.subr.mxu0 0.0
    %80 = vmatpush1.msra.mxu0 0.0
    %81 = vmatprep.subr.mxu0 0.0
    %82 = vmatpush1.msra.mxu0 0.0
    %83 = vmatprep.subr.mxu0 0.0
    %84 = vmatpush1.msra.mxu0 0.0
    %85 = vmatprep.subr.mxu0 0.0
    %86 = vmatpush1.msra.mxu0 0.0
    %87 = vmatprep.subr.mxu0 0.0
    %88 = vmatpush1.msra.mxu0 0.0
    %89 = vmatprep.subr.mxu0 0.0
    %90 = vmatpush1.msra.mxu0 0.0
    %91 = vmatprep.subr.mxu0 0.0
    %92 = vmatpush1.msra.mxu0 0.0
    %93 = vmatprep.subr.mxu0 0.0
    %94 = vmatpush1.msra.mxu0 0.0
    %95 = vmatprep.subr.mxu0 0.0
    %96 = vmatpush1.msra.mxu0 0.0
    %97 = vmatprep.subr.mxu0 0.0
    %98 = vmatpush1.msra.mxu0 0.0
    %99 = vmatprep.subr.mxu0 0.0
    %100 = vmatpush1.msra.mxu0 0.0
    %101 = vmatprep.subr.mxu0 0.0
    %102 = vmatpush1.msra.mxu0 0.0
    %103 = vmatprep.subr.mxu0 0.0
    %104 = vmatpush1.msra.mxu0 0.0
    %105 = vmatprep.subr.mxu0 0.0
    %106 = vmatpush1.msra.mxu0 0.0
    %107 = vmatprep.subr.mxu0 0.0
    %108 = vmatpush1.msra.mxu0 0.0
    %109 = vmatprep.subr.mxu0 0.0
    %110 = vmatpush1.msra.mxu0 0.0
    %111 = vmatprep.subr.mxu0 0.0
    %112 = vmatpush1.msra.mxu0 0.0
    %113 = vmatprep.subr.mxu0 0.0
    %114 = vmatpush1.msra.mxu0 0.0
    %115 = vmatprep.subr.mxu0 0.0
    %116 = vmatpush1.msra.mxu0 0.0
    %117 = vmatprep.subr.mxu0 0.0
    %118 = vmatpush1.msra.mxu0 0.0
    %119 = vmatprep.subr.mxu0 0.0
    %120 = vmatpush1.msra.mxu0 0.0
    %121 = vmatprep.subr.mxu0 0.0
    %122 = vmatpush1.msra.mxu0 0.0
    %123 = vmatprep.mubr.f32.mxu0 0.0
    %124 = vmatmul.mubr.f32.gmra.mrb[0].mxu0 %v57
    %v125 = vpop.f32.mrb[0].mxu0
    %v126 = vadd.f32 0.0, %v125
    %v127 = vpop.f32.mrb[0].mxu0
    %128 = vdwg.mxu0
    %v130 = vsel %vm55, %v46, 0
    %132 = vmatprep.subr.mxu0 0.0
    %133 = vmatpush1.msra.mxu0 %v47
    %134 = vmatprep.subr.mxu0 0.0
    %135 = vmatpush1.msra.mxu0 %v48
    %136 = vmatprep.subr.mxu0 0.0
    %137 = vmatpush1.msra.mxu0 %v49
    %138 = vmatprep.subr.mxu0 0.0
    %139 = vmatpush1.msra.mxu0 %v50
    %140 = vmatprep.subr.mxu0 0.0
    %141 = vmatpush1.msra.mxu0 0.0
    %142 = vmatprep.subr.mxu0 0.0
    %143 = vmatpush1.msra.mxu0 0.0
    %144 = vmatprep.subr.mxu0 0.0
    %145 = vmatpush1.msra.mxu0 0.0
    %146 = vmatprep.subr.mxu0 0.0
    %147 = vmatpush1.msra.mxu0 0.0
    %148 = vmatprep.subr.mxu0 0.0
    %149 = vmatpush1.msra.mxu0 0.0
    %150 = vmatprep.subr.mxu0 0.0
    %151 = vmatpush1.msra.mxu0 0.0
    %152 = vmatprep.subr.mxu0 0.0
    %153 = vmatpush1.msra.mxu0 0.0
    %154 = vmatprep.subr.mxu0 0.0
    %155 = vmatpush1.msra.mxu0 0.0
    %156 = vmatprep.subr.mxu0 0.0
    %157 = vmatpush1.msra.mxu0 0.0
    %158 = vmatprep.subr.mxu0 0.0
    %159 = vmatpush1.msra.mxu0 0.0
    %160 = vmatprep.subr.mxu0 0.0
    %161 = vmatpush1.msra.mxu0 0.0
    %162 = vmatprep.subr.mxu0 0.0
    %163 = vmatpush1.msra.mxu0 0.0
    %164 = vmatprep.subr.mxu0 0.0
    %165 = vmatpush1.msra.mxu0 0.0
    %166 = vmatprep.subr.mxu0 0.0
    %167 = vmatpush1.msra.mxu0 0.0
    %168 = vmatprep.subr.mxu0 0.0
    %169 = vmatpush1.msra.mxu0 0.0
    %170 = vmatprep.subr.mxu0 0.0
    %171 = vmatpush1.msra.mxu0 0.0
    %172 = vmatprep.subr.mxu0 0.0
    %173 = vmatpush1.msra.mxu0 0.0
    %174 = vmatprep.subr.mxu0 0.0
    %175 = vmatpush1.msra.mxu0 0.0
    %176 = vmatprep.subr.mxu0 0.0
    %177 = vmatpush1.msra.mxu0 0.0
    %178 = vmatprep.subr.mxu0 0.0
    %179 = vmatpush1.msra.mxu0 0.0
    %180 = vmatprep.subr.mxu0 0.0
    %181 = vmatpush1.msra.mxu0 0.0
    %182 = vmatprep.subr.mxu0 0.0
    %183 = vmatpush1.msra.mxu0 0.0
    %184 = vmatprep.subr.mxu0 0.0
    %185 = vmatpush1.msra.mxu0 0.0
    %186 = vmatprep.subr.mxu0 0.0
    %187 = vmatpush1.msra.mxu0 0.0
    %188 = vmatprep.subr.mxu0 0.0
    %189 = vmatpush1.msra.mxu0 0.0
    %190 = vmatprep.subr.mxu0 0.0
    %191 = vmatpush1.msra.mxu0 0.0
    %192 = vmatprep.subr.mxu0 0.0
    %193 = vmatpush1.msra.mxu0 0.0
    %194 = vmatprep.subr.mxu0 0.0
    %195 = vmatpush1.msra.mxu0 0.0
    %196 = vmatprep.mubr.f32.mxu0 0.0
    %197 = vmatmul.mubr.f32.gmra.mrb[0].mxu0 %v130
    %v198 = vpop.f32.mrb[0].mxu0
    %v199 = vadd.f32 %v126, %v198
    %v200 = vpop.f32.mrb[0].mxu0
    %201 = vdwg.mxu0
    %v202 = vld [vmem:[%s5] sm:$0x1]
    %v204 = vlaneseq
    %v205 = vshrl.u32 %v204, 7
    %v206 = vsub.s32 0, %v205
    %v207 = vrot.slane %v202, %v206
    %v209 = vadd.f32 %v199, %v207
    %v210 = vxor.u32 %v209, 2147483648
    %v211 = vmul.f32 %v210, 1.442695
    %v212 = vpow.pop %v211
    %v213 = vadd.f32 %v212, 1.0
    %v214 = vrcp.pop %v213
    %v215 = vmul.f32 1.0, %v214
    %v216 = vtanh.pop %v209
    %v217 = vmul.f32 %v215, 0.0
    %219 = vrot.lane.b32.xlu0 %v216, 64
    %v220 = vpop.permute.xlu0 %219
    %v222 = vmul.f32 %v215, %v220
    %224 = vrot.lane.b32.xlu0 %v222, 32
    %v225 = vpop.permute.xlu0 %224
    %v227 = vadd.f32 %v217, %v225
    %v228 = vtanh.pop %v227
    %230 = vrot.lane.b32.xlu0 %v228, 64
    %v231 = vpop.permute.xlu0 %230
    %v233 = vmul.f32 %v215, %v231
    %s234 = scalar_lea.vmem %s1, 8
    %v235 = vld [vmem:[%s234] sm:$0xff]
    %237 = vrot.lane.b32.xlu0 %v233, 32
    %v238 = vpop.permute.xlu0 %237
    %v239 = vsel %vm55, %v238, 0
    %241 = vmatprep.subr.mxu0 0.0
    %242 = vmatpush1.msra.mxu0 %v51
    %243 = vmatprep.subr.mxu0 0.0
    %244 = vmatpush1.msra.mxu0 %v52
    %245 = vmatprep.subr.mxu0 0.0
    %246 = vmatpush1.msra.mxu0 %v53
    %247 = vmatprep.subr.mxu0 0.0
    %248 = vmatpush1.msra.mxu0 %v54
    %249 = vmatprep.subr.mxu0 0.0
    %250 = vmatpush1.msra.mxu0 0.0
    %251 = vmatprep.subr.mxu0 0.0
    %252 = vmatpush1.msra.mxu0 0.0
    %253 = vmatprep.subr.mxu0 0.0
    %254 = vmatpush1.msra.mxu0 0.0
    %255 = vmatprep.subr.mxu0 0.0
    %256 = vmatpush1.msra.mxu0 0.0
    %257 = vmatprep.subr.mxu0 0.0
    %258 = vmatpush1.msra.mxu0 0.0
    %259 = vmatprep.subr.mxu0 0.0
    %260 = vmatpush1.msra.mxu0 0.0
    %261 = vmatprep.subr.mxu0 0.0
    %262 = vmatpush1.msra.mxu0 0.0
    %263 = vmatprep.subr.mxu0 0.0
    %264 = vmatpush1.msra.mxu0 0.0
    %265 = vmatprep.subr.mxu0 0.0
    %266 = vmatpush1.msra.mxu0 0.0
    %267 = vmatprep.subr.mxu0 0.0
    %268 = vmatpush1.msra.mxu0 0.0
    %269 = vmatprep.subr.mxu0 0.0
    %270 = vmatpush1.msra.mxu0 0.0
    %271 = vmatprep.subr.mxu0 0.0
    %272 = vmatpush1.msra.mxu0 0.0
    %273 = vmatprep.subr.mxu0 0.0
    %274 = vmatpush1.msra.mxu0 0.0
    %275 = vmatprep.subr.mxu0 0.0
    %276 = vmatpush1.msra.mxu0 0.0
    %277 = vmatprep.subr.mxu0 0.0
    %278 = vmatpush1.msra.mxu0 0.0
    %279 = vmatprep.subr.mxu0 0.0
    %280 = vmatpush1.msra.mxu0 0.0
    %281 = vmatprep.subr.mxu0 0.0
    %282 = vmatpush1.msra.mxu0 0.0
    %283 = vmatprep.subr.mxu0 0.0
    %284 = vmatpush1.msra.mxu0 0.0
    %285 = vmatprep.subr.mxu0 0.0
    %286 = vmatpush1.msra.mxu0 0.0
    %287 = vmatprep.subr.mxu0 0.0
    %288 = vmatpush1.msra.mxu0 0.0
    %289 = vmatprep.subr.mxu0 0.0
    %290 = vmatpush1.msra.mxu0 0.0
    %291 = vmatprep.subr.mxu0 0.0
    %292 = vmatpush1.msra.mxu0 0.0
    %293 = vmatprep.subr.mxu0 0.0
    %294 = vmatpush1.msra.mxu0 0.0
    %295 = vmatprep.subr.mxu0 0.0
    %296 = vmatpush1.msra.mxu0 0.0
    %297 = vmatprep.subr.mxu0 0.0
    %298 = vmatpush1.msra.mxu0 0.0
    %299 = vmatprep.subr.mxu0 0.0
    %300 = vmatpush1.msra.mxu0 0.0
    %301 = vmatprep.subr.mxu0 0.0
    %302 = vmatpush1.msra.mxu0 0.0
    %303 = vmatprep.subr.mxu0 0.0
    %304 = vmatpush1.msra.mxu0 0.0
    %305 = vmatprep.mubr.f32.mxu0 0.0
    %306 = vmatmul.mubr.f32.gmra.mrb[0].mxu0 %v239
    %v307 = vpop.f32.mrb[0].mxu0
    %v308 = vadd.f32 0.0, %v307
    %v309 = vpop.f32.mrb[0].mxu0
    %310 = vdwg.mxu0
    %v312 = vsel %vm55, %v235, 0
    %314 = vmatprep.subr.mxu0 0.0
    %315 = vmatpush1.msra.mxu0 %v47
    %316 = vmatprep.subr.mxu0 0.0
    %317 = vmatpush1.msra.mxu0 %v48
    %318 = vmatprep.subr.mxu0 0.0
    %319 = vmatpush1.msra.mxu0 %v49
    %320 = vmatprep.subr.mxu0 0.0
    %321 = vmatpush1.msra.mxu0 %v50
    %322 = vmatprep.subr.mxu0 0.0
    %323 = vmatpush1.msra.mxu0 0.0
    %324 = vmatprep.subr.mxu0 0.0
    %325 = vmatpush1.msra.mxu0 0.0
    %326 = vmatprep.subr.mxu0 0.0
    %327 = vmatpush1.msra.mxu0 0.0
    %328 = vmatprep.subr.mxu0 0.0
    %329 = vmatpush1.msra.mxu0 0.0
    %330 = vmatprep.subr.mxu0 0.0
    %331 = vmatpush1.msra.mxu0 0.0
    %332 = vmatprep.subr.mxu0 0.0
    %333 = vmatpush1.msra.mxu0 0.0
    %334 = vmatprep.subr.mxu0 0.0
    %335 = vmatpush1.msra.mxu0 0.0
    %336 = vmatprep.subr.mxu0 0.0
    %337 = vmatpush1.msra.mxu0 0.0
    %338 = vmatprep.subr.mxu0 0.0
    %339 = vmatpush1.msra.mxu0 0.0
    %340 = vmatprep.subr.mxu0 0.0
    %341 = vmatpush1.msra.mxu0 0.0
    %342 = vmatprep.subr.mxu0 0.0
    %343 = vmatpush1.msra.mxu0 0.0
    %344 = vmatprep.subr.mxu0 0.0
    %345 = vmatpush1.msra.mxu0 0.0
    %346 = vmatprep.subr.mxu0 0.0
    %347 = vmatpush1.msra.mxu0 0.0
    %348 = vmatprep.subr.mxu0 0.0
    %349 = vmatpush1.msra.mxu0 0.0
    %350 = vmatprep.subr.mxu0 0.0
    %351 = vmatpush1.msra.mxu0 0.0
    %352 = vmatprep.subr.mxu0 0.0
    %353 = vmatpush1.msra.mxu0 0.0
    %354 = vmatprep.subr.mxu0 0.0
    %355 = vmatpush1.msra.mxu0 0.0
    %356 = vmatprep.subr.mxu0 0.0
    %357 = vmatpush1.msra.mxu0 0.0
    %358 = vmatprep.subr.mxu0 0.0
    %359 = vmatpush1.msra.mxu0 0.0
    %360 = vmatprep.subr.mxu0 0.0
    %361 = vmatpush1.msra.mxu0 0.0
    %362 = vmatprep.subr.mxu0 0.0
    %363 = vmatpush1.msra.mxu0 0.0
    %364 = vmatprep.subr.mxu0 0.0
    %365 = vmatpush1.msra.mxu0 0.0
    %366 = vmatprep.subr.mxu0 0.0
    %367 = vmatpush1.msra.mxu0 0.0
    %368 = vmatprep.subr.mxu0 0.0
    %369 = vmatpush1.msra.mxu0 0.0
    %370 = vmatprep.subr.mxu0 0.0
    %371 = vmatpush1.msra.mxu0 0.0
    %372 = vmatprep.subr.mxu0 0.0
    %373 = vmatpush1.msra.mxu0 0.0
    %374 = vmatprep.subr.mxu0 0.0
    %375 = vmatpush1.msra.mxu0 0.0
    %376 = vmatprep.subr.mxu0 0.0
    %377 = vmatpush1.msra.mxu0 0.0
    %378 = vmatprep.mubr.f32.mxu0 0.0
    %379 = vmatmul.mubr.f32.gmra.mrb[0].mxu0 %v312
    %v380 = vpop.f32.mrb[0].mxu0
    %v381 = vadd.f32 %v308, %v380
    %v382 = vpop.f32.mrb[0].mxu0
    %383 = vdwg.mxu0
    %v384 = vadd.f32 %v381, %v207
    %v385 = vxor.u32 %v384, 2147483648
    %v386 = vmul.f32 %v385, 1.442695
    %v387 = vpow.pop %v386
    %v388 = vadd.f32 %v387, 1.0
    %v389 = vrcp.pop %v388
    %v390 = vmul.f32 1.0, %v389
    %v391 = vtanh.pop %v384
    %v392 = vmul.f32 %v390, %v227
    %394 = vrot.lane.b32.xlu0 %v391, 64
    %v395 = vpop.permute.xlu0 %394
    %v397 = vmul.f32 %v390, %v395
    %399 = vrot.lane.b32.xlu0 %v397, 32
    %v400 = vpop.permute.xlu0 %399
    %v402 = vadd.f32 %v392, %v400
    %v403 = vtanh.pop %v402
    %405 = vrot.lane.b32.xlu0 %v403, 64
    %v406 = vpop.permute.xlu0 %405
    %v408 = vmul.f32 %v390, %v406
    %s409 = scalar_lea.vmem %s1, 16
    %v410 = vld [vmem:[%s409] sm:$0xff]
    %412 = vrot.lane.b32.xlu0 %v408, 32
    %v413 = vpop.permute.xlu0 %412
    %v414 = vsel %vm55, %v413, 0
    %416 = vmatprep.subr.mxu0 0.0
    %417 = vmatpush1.msra.mxu0 %v51
    %418 = vmatprep.subr.mxu0 0.0
    %419 = vmatpush1.msra.mxu0 %v52
    %420 = vmatprep.subr.mxu0 0.0
    %421 = vmatpush1.msra.mxu0 %v53
    %422 = vmatprep.subr.mxu0 0.0
    %423 = vmatpush1.msra.mxu0 %v54
    %424 = vmatprep.subr.mxu0 0.0
    %425 = vmatpush1.msra.mxu0 0.0
    %426 = vmatprep.subr.mxu0 0.0
    %427 = vmatpush1.msra.mxu0 0.0
    %428 = vmatprep.subr.mxu0 0.0
    %429 = vmatpush1.msra.mxu0 0.0
    %430 = vmatprep.subr.mxu0 0.0
    %431 = vmatpush1.msra.mxu0 0.0
    %432 = vmatprep.subr.mxu0 0.0
    %433 = vmatpush1.msra.mxu0 0.0
    %434 = vmatprep.subr.mxu0 0.0
    %435 = vmatpush1.msra.mxu0 0.0
    %436 = vmatprep.subr.mxu0 0.0
    %437 = vmatpush1.msra.mxu0 0.0
    %438 = vmatprep.subr.mxu0 0.0
    %439 = vmatpush1.msra.mxu0 0.0
    %440 = vmatprep.subr.mxu0 0.0
    %441 = vmatpush1.msra.mxu0 0.0
    %442 = vmatprep.subr.mxu0 0.0
    %443 = vmatpush1.msra.mxu0 0.0
    %444 = vmatprep.subr.mxu0 0.0
    %445 = vmatpush1.msra.mxu0 0.0
    %446 = vmatprep.subr.mxu0 0.0
    %447 = vmatpush1.msra.mxu0 0.0
    %448 = vmatprep.subr.mxu0 0.0
    %449 = vmatpush1.msra.mxu0 0.0
    %450 = vmatprep.subr.mxu0 0.0
    %451 = vmatpush1.msra.mxu0 0.0
    %452 = vmatprep.subr.mxu0 0.0
    %453 = vmatpush1.msra.mxu0 0.0
    %454 = vmatprep.subr.mxu0 0.0
    %455 = vmatpush1.msra.mxu0 0.0
    %456 = vmatprep.subr.mxu0 0.0
    %457 = vmatpush1.msra.mxu0 0.0
    %458 = vmatprep.subr.mxu0 0.0
    %459 = vmatpush1.msra.mxu0 0.0
    %460 = vmatprep.subr.mxu0 0.0
    %461 = vmatpush1.msra.mxu0 0.0
    %462 = vmatprep.subr.mxu0 0.0
    %463 = vmatpush1.msra.mxu0 0.0
    %464 = vmatprep.subr.mxu0 0.0
    %465 = vmatpush1.msra.mxu0 0.0
    %466 = vmatprep.subr.mxu0 0.0
    %467 = vmatpush1.msra.mxu0 0.0
    %468 = vmatprep.subr.mxu0 0.0
    %469 = vmatpush1.msra.mxu0 0.0
    %470 = vmatprep.subr.mxu0 0.0
    %471 = vmatpush1.msra.mxu0 0.0
    %472 = vmatprep.subr.mxu0 0.0
    %473 = vmatpush1.msra.mxu0 0.0
    %474 = vmatprep.subr.mxu0 0.0
    %475 = vmatpush1.msra.mxu0 0.0
    %476 = vmatprep.subr.mxu0 0.0
    %477 = vmatpush1.msra.mxu0 0.0
    %478 = vmatprep.subr.mxu0 0.0
    %479 = vmatpush1.msra.mxu0 0.0
    %480 = vmatprep.mubr.f32.mxu0 0.0
    %481 = vmatmul.mubr.f32.gmra.mrb[0].mxu0 %v414
    %v482 = vpop.f32.mrb[0].mxu0
    %v483 = vadd.f32 0.0, %v482
    %v484 = vpop.f32.mrb[0].mxu0
    %485 = vdwg.mxu0
    %v487 = vsel %vm55, %v410, 0
    %489 = vmatprep.subr.mxu0 0.0
    %490 = vmatpush1.msra.mxu0 %v47
    %491 = vmatprep.subr.mxu0 0.0
    %492 = vmatpush1.msra.mxu0 %v48
    %493 = vmatprep.subr.mxu0 0.0
    %494 = vmatpush1.msra.mxu0 %v49
    %495 = vmatprep.subr.mxu0 0.0
    %496 = vmatpush1.msra.mxu0 %v50
    %497 = vmatprep.subr.mxu0 0.0
    %498 = vmatpush1.msra.mxu0 0.0
    %499 = vmatprep.subr.mxu0 0.0
    %500 = vmatpush1.msra.mxu0 0.0
    %501 = vmatprep.subr.mxu0 0.0
    %502 = vmatpush1.msra.mxu0 0.0
    %503 = vmatprep.subr.mxu0 0.0
    %504 = vmatpush1.msra.mxu0 0.0
    %505 = vmatprep.subr.mxu0 0.0
    %506 = vmatpush1.msra.mxu0 0.0
    %507 = vmatprep.subr.mxu0 0.0
    %508 = vmatpush1.msra.mxu0 0.0
    %509 = vmatprep.subr.mxu0 0.0
    %510 = vmatpush1.msra.mxu0 0.0
    %511 = vmatprep.subr.mxu0 0.0
    %512 = vmatpush1.msra.mxu0 0.0
    %513 = vmatprep.subr.mxu0 0.0
    %514 = vmatpush1.msra.mxu0 0.0
    %515 = vmatprep.subr.mxu0 0.0
    %516 = vmatpush1.msra.mxu0 0.0
    %517 = vmatprep.subr.mxu0 0.0
    %518 = vmatpush1.msra.mxu0 0.0
    %519 = vmatprep.subr.mxu0 0.0
    %520 = vmatpush1.msra.mxu0 0.0
    %521 = vmatprep.subr.mxu0 0.0
    %522 = vmatpush1.msra.mxu0 0.0
    %523 = vmatprep.subr.mxu0 0.0
    %524 = vmatpush1.msra.mxu0 0.0
    %525 = vmatprep.subr.mxu0 0.0
    %526 = vmatpush1.msra.mxu0 0.0
    %527 = vmatprep.subr.mxu0 0.0
    %528 = vmatpush1.msra.mxu0 0.0
    %529 = vmatprep.subr.mxu0 0.0
    %530 = vmatpush1.msra.mxu0 0.0
    %531 = vmatprep.subr.mxu0 0.0
    %532 = vmatpush1.msra.mxu0 0.0
    %533 = vmatprep.subr.mxu0 0.0
    %534 = vmatpush1.msra.mxu0 0.0
    %535 = vmatprep.subr.mxu0 0.0
    %536 = vmatpush1.msra.mxu0 0.0
    %537 = vmatprep.subr.mxu0 0.0
    %538 = vmatpush1.msra.mxu0 0.0
    %539 = vmatprep.subr.mxu0 0.0
    %540 = vmatpush1.msra.mxu0 0.0
    %541 = vmatprep.subr.mxu0 0.0
    %542 = vmatpush1.msra.mxu0 0.0
    %543 = vmatprep.subr.mxu0 0.0
    %544 = vmatpush1.msra.mxu0 0.0
    %545 = vmatprep.subr.mxu0 0.0
    %546 = vmatpush1.msra.mxu0 0.0
    %547 = vmatprep.subr.mxu0 0.0
    %548 = vmatpush1.msra.mxu0 0.0
    %549 = vmatprep.subr.mxu0 0.0
    %550 = vmatpush1.msra.mxu0 0.0
    %551 = vmatprep.subr.mxu0 0.0
    %552 = vmatpush1.msra.mxu0 0.0
    %553 = vmatprep.mubr.f32.mxu0 0.0
    %554 = vmatmul.mubr.f32.gmra.mrb[0].mxu0 %v487
    %v555 = vpop.f32.mrb[0].mxu0
    %v556 = vadd.f32 %v483, %v555
    %v557 = vpop.f32.mrb[0].mxu0
    %558 = vdwg.mxu0
    %v559 = vadd.f32 %v556, %v207
    %v560 = vxor.u32 %v559, 2147483648
    %v561 = vmul.f32 %v560, 1.442695
    %v562 = vpow.pop %v561
    %v563 = vadd.f32 %v562, 1.0
    %v564 = vrcp.pop %v563
    %v565 = vmul.f32 1.0, %v564
    %v566 = vtanh.pop %v559
    %v567 = vmul.f32 %v565, %v402
    %569 = vrot.lane.b32.xlu0 %v566, 64
    %v570 = vpop.permute.xlu0 %569
    %v572 = vmul.f32 %v565, %v570
    %574 = vrot.lane.b32.xlu0 %v572, 32
    %v575 = vpop.permute.xlu0 %574
    %v577 = vadd.f32 %v567, %v575
    %v578 = vtanh.pop %v577
    %580 = vrot.lane.b32.xlu0 %v578, 64
    %v581 = vpop.permute.xlu0 %580
    %v583 = vmul.f32 %v565, %v581
    %s584 = scalar_lea.vmem %s1, 24
    %v585 = vld [vmem:[%s584] sm:$0xff]
    %587 = vrot.lane.b32.xlu0 %v583, 32
    %v588 = vpop.permute.xlu0 %587
    %v589 = vsel %vm55, %v588, 0
    %591 = vmatprep.subr.mxu0 0.0
    %592 = vmatpush1.msra.mxu0 %v51
    %593 = vmatprep.subr.mxu0 0.0
    %594 = vmatpush1.msra.mxu0 %v52
    %595 = vmatprep.subr.mxu0 0.0
    %596 = vmatpush1.msra.mxu0 %v53
    %597 = vmatprep.subr.mxu0 0.0
    %598 = vmatpush1.msra.mxu0 %v54
    %599 = vmatprep.subr.mxu0 0.0
    %600 = vmatpush1.msra.mxu0 0.0
    %601 = vmatprep.subr.mxu0 0.0
    %602 = vmatpush1.msra.mxu0 0.0
    %603 = vmatprep.subr.mxu0 0.0
    %604 = vmatpush1.msra.mxu0 0.0
    %605 = vmatprep.subr.mxu0 0.0
    %606 = vmatpush1.msra.mxu0 0.0
    %607 = vmatprep.subr.mxu0 0.0
    %608 = vmatpush1.msra.mxu0 0.0
    %609 = vmatprep.subr.mxu0 0.0
    %610 = vmatpush1.msra.mxu0 0.0
    %611 = vmatprep.subr.mxu0 0.0
    %612 = vmatpush1.msra.mxu0 0.0
    %613 = vmatprep.subr.mxu0 0.0
    %614 = vmatpush1.msra.mxu0 0.0
    %615 = vmatprep.subr.mxu0 0.0
    %616 = vmatpush1.msra.mxu0 0.0
    %617 = vmatprep.subr.mxu0 0.0
    %618 = vmatpush1.msra.mxu0 0.0
    %619 = vmatprep.subr.mxu0 0.0
    %620 = vmatpush1.msra.mxu0 0.0
    %621 = vmatprep.subr.mxu0 0.0
    %622 = vmatpush1.msra.mxu0 0.0
    %623 = vmatprep.subr.mxu0 0.0
    %624 = vmatpush1.msra.mxu0 0.0
    %625 = vmatprep.subr.mxu0 0.0
    %626 = vmatpush1.msra.mxu0 0.0
    %627 = vmatprep.subr.mxu0 0.0
    %628 = vmatpush1.msra.mxu0 0.0
    %629 = vmatprep.subr.mxu0 0.0
    %630 = vmatpush1.msra.mxu0 0.0
    %631 = vmatprep.subr.mxu0 0.0
    %632 = vmatpush1.msra.mxu0 0.0
    %633 = vmatprep.subr.mxu0 0.0
    %634 = vmatpush1.msra.mxu0 0.0
    %635 = vmatprep.subr.mxu0 0.0
    %636 = vmatpush1.msra.mxu0 0.0
    %637 = vmatprep.subr.mxu0 0.0
    %638 = vmatpush1.msra.mxu0 0.0
    %639 = vmatprep.subr.mxu0 0.0
    %640 = vmatpush1.msra.mxu0 0.0
    %641 = vmatprep.subr.mxu0 0.0
    %642 = vmatpush1.msra.mxu0 0.0
    %643 = vmatprep.subr.mxu0 0.0
    %644 = vmatpush1.msra.mxu0 0.0
    %645 = vmatprep.subr.mxu0 0.0
    %646 = vmatpush1.msra.mxu0 0.0
    %647 = vmatprep.subr.mxu0 0.0
    %648 = vmatpush1.msra.mxu0 0.0
    %649 = vmatprep.subr.mxu0 0.0
    %650 = vmatpush1.msra.mxu0 0.0
    %651 = vmatprep.subr.mxu0 0.0
    %652 = vmatpush1.msra.mxu0 0.0
    %653 = vmatprep.subr.mxu0 0.0
    %654 = vmatpush1.msra.mxu0 0.0
    %655 = vmatprep.mubr.f32.mxu0 0.0
    %656 = vmatmul.mubr.f32.gmra.mrb[0].mxu0 %v589
    %v657 = vpop.f32.mrb[0].mxu0
    %v658 = vadd.f32 0.0, %v657
    %v659 = vpop.f32.mrb[0].mxu0
    %660 = vdwg.mxu0
    %v662 = vsel %vm55, %v585, 0
    %664 = vmatprep.subr.mxu0 0.0
    %665 = vmatpush1.msra.mxu0 %v47
    %666 = vmatprep.subr.mxu0 0.0
    %667 = vmatpush1.msra.mxu0 %v48
    %668 = vmatprep.subr.mxu0 0.0
    %669 = vmatpush1.msra.mxu0 %v49
    %670 = vmatprep.subr.mxu0 0.0
    %671 = vmatpush1.msra.mxu0 %v50
    %672 = vmatprep.subr.mxu0 0.0
    %673 = vmatpush1.msra.mxu0 0.0
    %674 = vmatprep.subr.mxu0 0.0
    %675 = vmatpush1.msra.mxu0 0.0
    %676 = vmatprep.subr.mxu0 0.0
    %677 = vmatpush1.msra.mxu0 0.0
    %678 = vmatprep.subr.mxu0 0.0
    %679 = vmatpush1.msra.mxu0 0.0
    %680 = vmatprep.subr.mxu0 0.0
    %681 = vmatpush1.msra.mxu0 0.0
    %682 = vmatprep.subr.mxu0 0.0
    %683 = vmatpush1.msra.mxu0 0.0
    %684 = vmatprep.subr.mxu0 0.0
    %685 = vmatpush1.msra.mxu0 0.0
    %686 = vmatprep.subr.mxu0 0.0
    %687 = vmatpush1.msra.mxu0 0.0
    %688 = vmatprep.subr.mxu0 0.0
    %689 = vmatpush1.msra.mxu0 0.0
    %690 = vmatprep.subr.mxu0 0.0
    %691 = vmatpush1.msra.mxu0 0.0
    %692 = vmatprep.subr.mxu0 0.0
    %693 = vmatpush1.msra.mxu0 0.0
    %694 = vmatprep.subr.mxu0 0.0
    %695 = vmatpush1.msra.mxu0 0.0
    %696 = vmatprep.subr.mxu0 0.0
    %697 = vmatpush1.msra.mxu0 0.0
    %698 = vmatprep.subr.mxu0 0.0
    %699 = vmatpush1.msra.mxu0 0.0
    %700 = vmatprep.subr.mxu0 0.0
    %701 = vmatpush1.msra.mxu0 0.0
    %702 = vmatprep.subr.mxu0 0.0
    %703 = vmatpush1.msra.mxu0 0.0
    %704 = vmatprep.subr.mxu0 0.0
    %705 = vmatpush1.msra.mxu0 0.0
    %706 = vmatprep.subr.mxu0 0.0
    %707 = vmatpush1.msra.mxu0 0.0
    %708 = vmatprep.subr.mxu0 0.0
    %709 = vmatpush1.msra.mxu0 0.0
    %710 = vmatprep.subr.mxu0 0.0
    %711 = vmatpush1.msra.mxu0 0.0
    %712 = vmatprep.subr.mxu0 0.0
    %713 = vmatpush1.msra.mxu0 0.0
    %714 = vmatprep.subr.mxu0 0.0
    %715 = vmatpush1.msra.mxu0 0.0
    %716 = vmatprep.subr.mxu0 0.0
    %717 = vmatpush1.msra.mxu0 0.0
    %718 = vmatprep.subr.mxu0 0.0
    %719 = vmatpush1.msra.mxu0 0.0
    %720 = vmatprep.subr.mxu0 0.0
    %721 = vmatpush1.msra.mxu0 0.0
    %722 = vmatprep.subr.mxu0 0.0
    %723 = vmatpush1.msra.mxu0 0.0
    %724 = vmatprep.subr.mxu0 0.0
    %725 = vmatpush1.msra.mxu0 0.0
    %726 = vmatprep.subr.mxu0 0.0
    %727 = vmatpush1.msra.mxu0 0.0
    %728 = vmatprep.mubr.f32.mxu0 0.0
    %729 = vmatmul.mubr.f32.gmra.mrb[0].mxu0 %v662
    %v730 = vpop.f32.mrb[0].mxu0
    %v731 = vadd.f32 %v658, %v730
    %v732 = vpop.f32.mrb[0].mxu0
    %733 = vdwg.mxu0
    %v734 = vadd.f32 %v731, %v207
    %v735 = vxor.u32 %v734, 2147483648
    %v736 = vmul.f32 %v735, 1.442695
    %v737 = vpow.pop %v736
    %v738 = vadd.f32 %v737, 1.0
    %v739 = vrcp.pop %v738
    %v740 = vmul.f32 1.0, %v739
    %v741 = vtanh.pop %v734
    %v742 = vmul.f32 %v740, %v577
    %744 = vrot.lane.b32.xlu0 %v741, 64
    %v745 = vpop.permute.xlu0 %744
    %v747 = vmul.f32 %v740, %v745
    %749 = vrot.lane.b32.xlu0 %v747, 32
    %v750 = vpop.permute.xlu0 %749
    %v752 = vadd.f32 %v742, %v750
    %v753 = vtanh.pop %v752
    %755 = vrot.lane.b32.xlu0 %v753, 64
    %v756 = vpop.permute.xlu0 %755
    %v758 = vmul.f32 %v740, %v756
    %s759 = scalar_lea.vmem %s1, 32
    %v760 = vld [vmem:[%s759] sm:$0xff]
    %762 = vrot.lane.b32.xlu0 %v758, 32
    %v763 = vpop.permute.xlu0 %762
    %v764 = vsel %vm55, %v763, 0
    %766 = vmatprep.subr.mxu0 0.0
    %767 = vmatpush1.msra.mxu0 %v51
    %768 = vmatprep.subr.mxu0 0.0
    %769 = vmatpush1.msra.mxu0 %v52
    %770 = vmatprep.subr.mxu0 0.0
    %771 = vmatpush1.msra.mxu0 %v53
    %772 = vmatprep.subr.mxu0 0.0
    %773 = vmatpush1.msra.mxu0 %v54
    %774 = vmatprep.subr.mxu0 0.0
    %775 = vmatpush1.msra.mxu0 0.0
    %776 = vmatprep.subr.mxu0 0.0
    %777 = vmatpush1.msra.mxu0 0.0
    %778 = vmatprep.subr.mxu0 0.0
    %779 = vmatpush1.msra.mxu0 0.0
    %780 = vmatprep.subr.mxu0 0.0
    %781 = vmatpush1.msra.mxu0 0.0
    %782 = vmatprep.subr.mxu0 0.0
    %783 = vmatpush1.msra.mxu0 0.0
    %784 = vmatprep.subr.mxu0 0.0
    %785 = vmatpush1.msra.mxu0 0.0
    %786 = vmatprep.subr.mxu0 0.0
    %787 = vmatpush1.msra.mxu0 0.0
    %788 = vmatprep.subr.mxu0 0.0
    %789 = vmatpush1.msra.mxu0 0.0
    %790 = vmatprep.subr.mxu0 0.0
    %791 = vmatpush1.msra.mxu0 0.0
    %792 = vmatprep.subr.mxu0 0.0
    %793 = vmatpush1.msra.mxu0 0.0
    %794 = vmatprep.subr.mxu0 0.0
    %795 = vmatpush1.msra.mxu0 0.0
    %796 = vmatprep.subr.mxu0 0.0
    %797 = vmatpush1.msra.mxu0 0.0
    %798 = vmatprep.subr.mxu0 0.0
    %799 = vmatpush1.msra.mxu0 0.0
    %800 = vmatprep.subr.mxu0 0.0
    %801 = vmatpush1.msra.mxu0 0.0
    %802 = vmatprep.subr.mxu0 0.0
    %803 = vmatpush1.msra.mxu0 0.0
    %804 = vmatprep.subr.mxu0 0.0
    %805 = vmatpush1.msra.mxu0 0.0
    %806 = vmatprep.subr.mxu0 0.0
    %807 = vmatpush1.msra.mxu0 0.0
    %808 = vmatprep.subr.mxu0 0.0
    %809 = vmatpush1.msra.mxu0 0.0
    %810 = vmatprep.subr.mxu0 0.0
    %811 = vmatpush1.msra.mxu0 0.0
    %812 = vmatprep.subr.mxu0 0.0
    %813 = vmatpush1.msra.mxu0 0.0
    %814 = vmatprep.subr.mxu0 0.0
    %815 = vmatpush1.msra.mxu0 0.0
    %816 = vmatprep.subr.mxu0 0.0
    %817 = vmatpush1.msra.mxu0 0.0
    %818 = vmatprep.subr.mxu0 0.0
    %819 = vmatpush1.msra.mxu0 0.0
    %820 = vmatprep.subr.mxu0 0.0
    %821 = vmatpush1.msra.mxu0 0.0
    %822 = vmatprep.subr.mxu0 0.0
    %823 = vmatpush1.msra.mxu0 0.0
    %824 = vmatprep.subr.mxu0 0.0
    %825 = vmatpush1.msra.mxu0 0.0
    %826 = vmatprep.subr.mxu0 0.0
    %827 = vmatpush1.msra.mxu0 0.0
    %828 = vmatprep.subr.mxu0 0.0
    %829 = vmatpush1.msra.mxu0 0.0
    %830 = vmatprep.mubr.f32.mxu0 0.0
    %831 = vmatmul.mubr.f32.gmra.mrb[0].mxu0 %v764
    %v832 = vpop.f32.mrb[0].mxu0
    %v833 = vadd.f32 0.0, %v832
    %v834 = vpop.f32.mrb[0].mxu0
    %835 = vdwg.mxu0
    %v837 = vsel %vm55, %v760, 0
    %839 = vmatprep.subr.mxu0 0.0
    %840 = vmatpush1.msra.mxu0 %v47
    %841 = vmatprep.subr.mxu0 0.0
    %842 = vmatpush1.msra.mxu0 %v48
    %843 = vmatprep.subr.mxu0 0.0
    %844 = vmatpush1.msra.mxu0 %v49
    %845 = vmatprep.subr.mxu0 0.0
    %846 = vmatpush1.msra.mxu0 %v50
    %847 = vmatprep.subr.mxu0 0.0
    %848 = vmatpush1.msra.mxu0 0.0
    %849 = vmatprep.subr.mxu0 0.0
    %850 = vmatpush1.msra.mxu0 0.0
    %851 = vmatprep.subr.mxu0 0.0
    %852 = vmatpush1.msra.mxu0 0.0
    %853 = vmatprep.subr.mxu0 0.0
    %854 = vmatpush1.msra.mxu0 0.0
    %855 = vmatprep.subr.mxu0 0.0
    %856 = vmatpush1.msra.mxu0 0.0
    %857 = vmatprep.subr.mxu0 0.0
    %858 = vmatpush1.msra.mxu0 0.0
    %859 = vmatprep.subr.mxu0 0.0
    %860 = vmatpush1.msra.mxu0 0.0
    %861 = vmatprep.subr.mxu0 0.0
    %862 = vmatpush1.msra.mxu0 0.0
    %863 = vmatprep.subr.mxu0 0.0
    %864 = vmatpush1.msra.mxu0 0.0
    %865 = vmatprep.subr.mxu0 0.0
    %866 = vmatpush1.msra.mxu0 0.0
    %867 = vmatprep.subr.mxu0 0.0
    %868 = vmatpush1.msra.mxu0 0.0
    %869 = vmatprep.subr.mxu0 0.0
    %870 = vmatpush1.msra.mxu0 0.0
    %871 = vmatprep.subr.mxu0 0.0
    %872 = vmatpush1.msra.mxu0 0.0
    %873 = vmatprep.subr.mxu0 0.0
    %874 = vmatpush1.msra.mxu0 0.0
    %875 = vmatprep.subr.mxu0 0.0
    %876 = vmatpush1.msra.mxu0 0.0
    %877 = vmatprep.subr.mxu0 0.0
    %878 = vmatpush1.msra.mxu0 0.0
    %879 = vmatprep.subr.mxu0 0.0
    %880 = vmatpush1.msra.mxu0 0.0
    %881 = vmatprep.subr.mxu0 0.0
    %882 = vmatpush1.msra.mxu0 0.0
    %883 = vmatprep.subr.mxu0 0.0
    %884 = vmatpush1.msra.mxu0 0.0
    %885 = vmatprep.subr.mxu0 0.0
    %886 = vmatpush1.msra.mxu0 0.0
    %887 = vmatprep.subr.mxu0 0.0
    %888 = vmatpush1.msra.mxu0 0.0
    %889 = vmatprep.subr.mxu0 0.0
    %890 = vmatpush1.msra.mxu0 0.0
    %891 = vmatprep.subr.mxu0 0.0
    %892 = vmatpush1.msra.mxu0 0.0
    %893 = vmatprep.subr.mxu0 0.0
    %894 = vmatpush1.msra.mxu0 0.0
    %895 = vmatprep.subr.mxu0 0.0
    %896 = vmatpush1.msra.mxu0 0.0
    %897 = vmatprep.subr.mxu0 0.0
    %898 = vmatpush1.msra.mxu0 0.0
    %899 = vmatprep.subr.mxu0 0.0
    %900 = vmatpush1.msra.mxu0 0.0
    %901 = vmatprep.subr.mxu0 0.0
    %902 = vmatpush1.msra.mxu0 0.0
    %903 = vmatprep.mubr.f32.mxu0 0.0
    %904 = vmatmul.mubr.f32.gmra.mrb[0].mxu0 %v837
    %v905 = vpop.f32.mrb[0].mxu0
    %v906 = vadd.f32 %v833, %v905
    %v907 = vpop.f32.mrb[0].mxu0
    %908 = vdwg.mxu0
    %v909 = vadd.f32 %v906, %v207
    %v910 = vxor.u32 %v909, 2147483648
    %v911 = vmul.f32 %v910, 1.442695
    %v912 = vpow.pop %v911
    %v913 = vadd.f32 %v912, 1.0
    %v914 = vrcp.pop %v913
    %v915 = vmul.f32 1.0, %v914
    %v916 = vtanh.pop %v909
    %v917 = vmul.f32 %v915, %v752
    %919 = vrot.lane.b32.xlu0 %v916, 64
    %v920 = vpop.permute.xlu0 %919
    %v922 = vmul.f32 %v915, %v920
    %924 = vrot.lane.b32.xlu0 %v922, 32
    %v925 = vpop.permute.xlu0 %924
    %v927 = vadd.f32 %v917, %v925
    %v928 = vtanh.pop %v927
    %930 = vrot.lane.b32.xlu0 %v928, 64
    %v931 = vpop.permute.xlu0 %930
    %v933 = vmul.f32 %v915, %v931
    %s934 = scalar_lea.vmem %s1, 40
    %v935 = vld [vmem:[%s934] sm:$0xff]
    %937 = vrot.lane.b32.xlu0 %v933, 32
    %v938 = vpop.permute.xlu0 %937
    %v939 = vsel %vm55, %v938, 0
    %941 = vmatprep.subr.mxu0 0.0
    %942 = vmatpush1.msra.mxu0 %v51
    %943 = vmatprep.subr.mxu0 0.0
    %944 = vmatpush1.msra.mxu0 %v52
    %945 = vmatprep.subr.mxu0 0.0
    %946 = vmatpush1.msra.mxu0 %v53
    %947 = vmatprep.subr.mxu0 0.0
    %948 = vmatpush1.msra.mxu0 %v54
    %949 = vmatprep.subr.mxu0 0.0
    %950 = vmatpush1.msra.mxu0 0.0
    %951 = vmatprep.subr.mxu0 0.0
    %952 = vmatpush1.msra.mxu0 0.0
    %953 = vmatprep.subr.mxu0 0.0
    %954 = vmatpush1.msra.mxu0 0.0
    %955 = vmatprep.subr.mxu0 0.0
    %956 = vmatpush1.msra.mxu0 0.0
    %957 = vmatprep.subr.mxu0 0.0
    %958 = vmatpush1.msra.mxu0 0.0
    %959 = vmatprep.subr.mxu0 0.0
    %960 = vmatpush1.msra.mxu0 0.0
    %961 = vmatprep.subr.mxu0 0.0
    %962 = vmatpush1.msra.mxu0 0.0
    %963 = vmatprep.subr.mxu0 0.0
    %964 = vmatpush1.msra.mxu0 0.0
    %965 = vmatprep.subr.mxu0 0.0
    %966 = vmatpush1.msra.mxu0 0.0
    %967 = vmatprep.subr.mxu0 0.0
    %968 = vmatpush1.msra.mxu0 0.0
    %969 = vmatprep.subr.mxu0 0.0
    %970 = vmatpush1.msra.mxu0 0.0
    %971 = vmatprep.subr.mxu0 0.0
    %972 = vmatpush1.msra.mxu0 0.0
    %973 = vmatprep.subr.mxu0 0.0
    %974 = vmatpush1.msra.mxu0 0.0
    %975 = vmatprep.subr.mxu0 0.0
    %976 = vmatpush1.msra.mxu0 0.0
    %977 = vmatprep.subr.mxu0 0.0
    %978 = vmatpush1.msra.mxu0 0.0
    %979 = vmatprep.subr.mxu0 0.0
    %980 = vmatpush1.msra.mxu0 0.0
    %981 = vmatprep.subr.mxu0 0.0
    %982 = vmatpush1.msra.mxu0 0.0
    %983 = vmatprep.subr.mxu0 0.0
    %984 = vmatpush1.msra.mxu0 0.0
    %985 = vmatprep.subr.mxu0 0.0
    %986 = vmatpush1.msra.mxu0 0.0
    %987 = vmatprep.subr.mxu0 0.0
    %988 = vmatpush1.msra.mxu0 0.0
    %989 = vmatprep.subr.mxu0 0.0
    %990 = vmatpush1.msra.mxu0 0.0
    %991 = vmatprep.subr.mxu0 0.0
    %992 = vmatpush1.msra.mxu0 0.0
    %993 = vmatprep.subr.mxu0 0.0
    %994 = vmatpush1.msra.mxu0 0.0
    %995 = vmatprep.subr.mxu0 0.0
    %996 = vmatpush1.msra.mxu0 0.0
    %997 = vmatprep.subr.mxu0 0.0
    %998 = vmatpush1.msra.mxu0 0.0
    %999 = vmatprep.subr.mxu0 0.0
    %1000 = vmatpush1.msra.mxu0 0.0
    %1001 = vmatprep.subr.mxu0 0.0
    %1002 = vmatpush1.msra.mxu0 0.0
    %1003 = vmatprep.subr.mxu0 0.0
    %1004 = vmatpush1.msra.mxu0 0.0
    %1005 = vmatprep.mubr.f32.mxu0 0.0
    %1006 = vmatmul.mubr.f32.gmra.mrb[0].mxu0 %v939
    %v1007 = vpop.f32.mrb[0].mxu0
    %v1008 = vadd.f32 0.0, %v1007
    %v1009 = vpop.f32.mrb[0].mxu0
    %1010 = vdwg.mxu0
    %v1012 = vsel %vm55, %v935, 0
    %1014 = vmatprep.subr.mxu0 0.0
    %1015 = vmatpush1.msra.mxu0 %v47
    %1016 = vmatprep.subr.mxu0 0.0
    %1017 = vmatpush1.msra.mxu0 %v48
    %1018 = vmatprep.subr.mxu0 0.0
    %1019 = vmatpush1.msra.mxu0 %v49
    %1020 = vmatprep.subr.mxu0 0.0
    %1021 = vmatpush1.msra.mxu0 %v50
    %1022 = vmatprep.subr.mxu0 0.0
    %1023 = vmatpush1.msra.mxu0 0.0
    %1024 = vmatprep.subr.mxu0 0.0
    %1025 = vmatpush1.msra.mxu0 0.0
    %1026 = vmatprep.subr.mxu0 0.0
    %1027 = vmatpush1.msra.mxu0 0.0
    %1028 = vmatprep.subr.mxu0 0.0
    %1029 = vmatpush1.msra.mxu0 0.0
    %1030 = vmatprep.subr.mxu0 0.0
    %1031 = vmatpush1.msra.mxu0 0.0
    %1032 = vmatprep.subr.mxu0 0.0
    %1033 = vmatpush1.msra.mxu0 0.0
    %1034 = vmatprep.subr.mxu0 0.0
    %1035 = vmatpush1.msra.mxu0 0.0
    %1036 = vmatprep.subr.mxu0 0.0
    %1037 = vmatpush1.msra.mxu0 0.0
    %1038 = vmatprep.subr.mxu0 0.0
    %1039 = vmatpush1.msra.mxu0 0.0
    %1040 = vmatprep.subr.mxu0 0.0
    %1041 = vmatpush1.msra.mxu0 0.0
    %1042 = vmatprep.subr.mxu0 0.0
    %1043 = vmatpush1.msra.mxu0 0.0
    %1044 = vmatprep.subr.mxu0 0.0
    %1045 = vmatpush1.msra.mxu0 0.0
    %1046 = vmatprep.subr.mxu0 0.0
    %1047 = vmatpush1.msra.mxu0 0.0
    %1048 = vmatprep.subr.mxu0 0.0
    %1049 = vmatpush1.msra.mxu0 0.0
    %1050 = vmatprep.subr.mxu0 0.0
    %1051 = vmatpush1.msra.mxu0 0.0
    %1052 = vmatprep.subr.mxu0 0.0
    %1053 = vmatpush1.msra.mxu0 0.0
    %1054 = vmatprep.subr.mxu0 0.0
    %1055 = vmatpush1.msra.mxu0 0.0
    %1056 = vmatprep.subr.mxu0 0.0
    %1057 = vmatpush1.msra.mxu0 0.0
    %1058 = vmatprep.subr.mxu0 0.0
    %1059 = vmatpush1.msra.mxu0 0.0
    %1060 = vmatprep.subr.mxu0 0.0
    %1061 = vmatpush1.msra.mxu0 0.0
    %1062 = vmatprep.subr.mxu0 0.0
    %1063 = vmatpush1.msra.mxu0 0.0
    %1064 = vmatprep.subr.mxu0 0.0
    %1065 = vmatpush1.msra.mxu0 0.0
    %1066 = vmatprep.subr.mxu0 0.0
    %1067 = vmatpush1.msra.mxu0 0.0
    %1068 = vmatprep.subr.mxu0 0.0
    %1069 = vmatpush1.msra.mxu0 0.0
    %1070 = vmatprep.subr.mxu0 0.0
    %1071 = vmatpush1.msra.mxu0 0.0
    %1072 = vmatprep.subr.mxu0 0.0
    %1073 = vmatpush1.msra.mxu0 0.0
    %1074 = vmatprep.subr.mxu0 0.0
    %1075 = vmatpush1.msra.mxu0 0.0
    %1076 = vmatprep.subr.mxu0 0.0
    %1077 = vmatpush1.msra.mxu0 0.0
    %1078 = vmatprep.mubr.f32.mxu0 0.0
    %1079 = vmatmul.mubr.f32.gmra.mrb[0].mxu0 %v1012
    %v1080 = vpop.f32.mrb[0].mxu0
    %v1081 = vadd.f32 %v1008, %v1080
    %v1082 = vpop.f32.mrb[0].mxu0
    %1083 = vdwg.mxu0
    %v1084 = vadd.f32 %v1081, %v207
    %v1085 = vxor.u32 %v1084, 2147483648
    %v1086 = vmul.f32 %v1085, 1.442695
    %v1087 = vpow.pop %v1086
    %v1088 = vadd.f32 %v1087, 1.0
    %v1089 = vrcp.pop %v1088
    %v1090 = vmul.f32 1.0, %v1089
    %v1091 = vtanh.pop %v1084
    %v1092 = vmul.f32 %v1090, %v927
    %1094 = vrot.lane.b32.xlu0 %v1091, 64
    %v1095 = vpop.permute.xlu0 %1094
    %v1097 = vmul.f32 %v1090, %v1095
    %1099 = vrot.lane.b32.xlu0 %v1097, 32
    %v1100 = vpop.permute.xlu0 %1099
    %v1102 = vadd.f32 %v1092, %v1100
    %v1103 = vtanh.pop %v1102
    %1105 = vrot.lane.b32.xlu0 %v1103, 64
    %v1106 = vpop.permute.xlu0 %1105
    %v1108 = vmul.f32 %v1090, %v1106
    %1109 = vst.msk [vmem:[#allocation4] sm:$0xff] %vm55, 0.0
    %v1110 = vld [vmem:[%s2] sm:$0xff]
    %v1111 = vld [vmem:[%s6] sm:$0xff]
    %v1112 = vld [vmem:[%s6 + $0x8] sm:$0xff]
    %v1113 = vld [vmem:[%s6 + $0x10] sm:$0xff]
    %v1114 = vld [vmem:[%s6 + $0x18] sm:$0xff]
    %v1115 = vld [vmem:[%s7] sm:$0xff]
    %v1116 = vld [vmem:[%s7 + $0x8] sm:$0xff]
    %v1117 = vld [vmem:[%s7 + $0x10] sm:$0xff]
    %v1118 = vld [vmem:[%s7 + $0x18] sm:$0xff]
    %1120 = vrot.lane.b32.xlu0 %v1108, 32
    %v1121 = vpop.permute.xlu0 %1120
    %v1122 = vsel %vm55, %v1121, 0
    %1124 = vmatprep.subr.mxu0 0.0
    %1125 = vmatpush1.msra.mxu0 %v1115
    %1126 = vmatprep.subr.mxu0 0.0
    %1127 = vmatpush1.msra.mxu0 %v1116
    %1128 = vmatprep.subr.mxu0 0.0
    %1129 = vmatpush1.msra.mxu0 %v1117
    %1130 = vmatprep.subr.mxu0 0.0
    %1131 = vmatpush1.msra.mxu0 %v1118
    %1132 = vmatprep.subr.mxu0 0.0
    %1133 = vmatpush1.msra.mxu0 0.0
    %1134 = vmatprep.subr.mxu0 0.0
    %1135 = vmatpush1.msra.mxu0 0.0
    %1136 = vmatprep.subr.mxu0 0.0
    %1137 = vmatpush1.msra.mxu0 0.0
    %1138 = vmatprep.subr.mxu0 0.0
    %1139 = vmatpush1.msra.mxu0 0.0
    %1140 = vmatprep.subr.mxu0 0.0
    %1141 = vmatpush1.msra.mxu0 0.0
    %1142 = vmatprep.subr.mxu0 0.0
    %1143 = vmatpush1.msra.mxu0 0.0
    %1144 = vmatprep.subr.mxu0 0.0
    %1145 = vmatpush1.msra.mxu0 0.0
    %1146 = vmatprep.subr.mxu0 0.0
    %1147 = vmatpush1.msra.mxu0 0.0
    %1148 = vmatprep.subr.mxu0 0.0
    %1149 = vmatpush1.msra.mxu0 0.0
    %1150 = vmatprep.subr.mxu0 0.0
    %1151 = vmatpush1.msra.mxu0 0.0
    %1152 = vmatprep.subr.mxu0 0.0
    %1153 = vmatpush1.msra.mxu0 0.0
    %1154 = vmatprep.subr.mxu0 0.0
    %1155 = vmatpush1.msra.mxu0 0.0
    %1156 = vmatprep.subr.mxu0 0.0
    %1157 = vmatpush1.msra.mxu0 0.0
    %1158 = vmatprep.subr.mxu0 0.0
    %1159 = vmatpush1.msra.mxu0 0.0
    %1160 = vmatprep.subr.mxu0 0.0
    %1161 = vmatpush1.msra.mxu0 0.0
    %1162 = vmatprep.subr.mxu0 0.0
    %1163 = vmatpush1.msra.mxu0 0.0
    %1164 = vmatprep.subr.mxu0 0.0
    %1165 = vmatpush1.msra.mxu0 0.0
    %1166 = vmatprep.subr.mxu0 0.0
    %1167 = vmatpush1.msra.mxu0 0.0
    %1168 = vmatprep.subr.mxu0 0.0
    %1169 = vmatpush1.msra.mxu0 0.0
    %1170 = vmatprep.subr.mxu0 0.0
    %1171 = vmatpush1.msra.mxu0 0.0
    %1172 = vmatprep.subr.mxu0 0.0
    %1173 = vmatpush1.msra.mxu0 0.0
    %1174 = vmatprep.subr.mxu0 0.0
    %1175 = vmatpush1.msra.mxu0 0.0
    %1176 = vmatprep.subr.mxu0 0.0
    %1177 = vmatpush1.msra.mxu0 0.0
    %1178 = vmatprep.subr.mxu0 0.0
    %1179 = vmatpush1.msra.mxu0 0.0
    %1180 = vmatprep.subr.mxu0 0.0
    %1181 = vmatpush1.msra.mxu0 0.0
    %1182 = vmatprep.subr.mxu0 0.0
    %1183 = vmatpush1.msra.mxu0 0.0
    %1184 = vmatprep.subr.mxu0 0.0
    %1185 = vmatpush1.msra.mxu0 0.0
    %1186 = vmatprep.subr.mxu0 0.0
    %1187 = vmatpush1.msra.mxu0 0.0
    %1188 = vmatprep.mubr.f32.mxu0 0.0
    %1189 = vmatmul.mubr.f32.gmra.mrb[0].mxu0 %v1122
    %v1190 = vpop.f32.mrb[0].mxu0
    %v1191 = vadd.f32 0.0, %v1190
    %v1192 = vpop.f32.mrb[0].mxu0
    %1193 = vdwg.mxu0
    %v1195 = vsel %vm55, %v1110, 0
    %1197 = vmatprep.subr.mxu0 0.0
    %1198 = vmatpush1.msra.mxu0 %v1111
    %1199 = vmatprep.subr.mxu0 0.0
    %1200 = vmatpush1.msra.mxu0 %v1112
    %1201 = vmatprep.subr.mxu0 0.0
    %1202 = vmatpush1.msra.mxu0 %v1113
    %1203 = vmatprep.subr.mxu0 0.0
    %1204 = vmatpush1.msra.mxu0 %v1114
    %1205 = vmatprep.subr.mxu0 0.0
    %1206 = vmatpush1.msra.mxu0 0.0
    %1207 = vmatprep.subr.mxu0 0.0
    %1208 = vmatpush1.msra.mxu0 0.0
    %1209 = vmatprep.subr.mxu0 0.0
    %1210 = vmatpush1.msra.mxu0 0.0
    %1211 = vmatprep.subr.mxu0 0.0
    %1212 = vmatpush1.msra.mxu0 0.0
    %1213 = vmatprep.subr.mxu0 0.0
    %1214 = vmatpush1.msra.mxu0 0.0
    %1215 = vmatprep.subr.mxu0 0.0
    %1216 = vmatpush1.msra.mxu0 0.0
    %1217 = vmatprep.subr.mxu0 0.0
    %1218 = vmatpush1.msra.mxu0 0.0
    %1219 = vmatprep.subr.mxu0 0.0
    %1220 = vmatpush1.msra.mxu0 0.0
    %1221 = vmatprep.subr.mxu0 0.0
    %1222 = vmatpush1.msra.mxu0 0.0
    %1223 = vmatprep.subr.mxu0 0.0
    %1224 = vmatpush1.msra.mxu0 0.0
    %1225 = vmatprep.subr.mxu0 0.0
    %1226 = vmatpush1.msra.mxu0 0.0
    %1227 = vmatprep.subr.mxu0 0.0
    %1228 = vmatpush1.msra.mxu0 0.0
    %1229 = vmatprep.subr.mxu0 0.0
    %1230 = vmatpush1.msra.mxu0 0.0
    %1231 = vmatprep.subr.mxu0 0.0
    %1232 = vmatpush1.msra.mxu0 0.0
    %1233 = vmatprep.subr.mxu0 0.0
    %1234 = vmatpush1.msra.mxu0 0.0
    %1235 = vmatprep.subr.mxu0 0.0
    %1236 = vmatpush1.msra.mxu0 0.0
    %1237 = vmatprep.subr.mxu0 0.0
    %1238 = vmatpush1.msra.mxu0 0.0
    %1239 = vmatprep.subr.mxu0 0.0
    %1240 = vmatpush1.msra.mxu0 0.0
    %1241 = vmatprep.subr.mxu0 0.0
    %1242 = vmatpush1.msra.mxu0 0.0
    %1243 = vmatprep.subr.mxu0 0.0
    %1244 = vmatpush1.msra.mxu0 0.0
    %1245 = vmatprep.subr.mxu0 0.0
    %1246 = vmatpush1.msra.mxu0 0.0
    %1247 = vmatprep.subr.mxu0 0.0
    %1248 = vmatpush1.msra.mxu0 0.0
    %1249 = vmatprep.subr.mxu0 0.0
    %1250 = vmatpush1.msra.mxu0 0.0
    %1251 = vmatprep.subr.mxu0 0.0
    %1252 = vmatpush1.msra.mxu0 0.0
    %1253 = vmatprep.subr.mxu0 0.0
    %1254 = vmatpush1.msra.mxu0 0.0
    %1255 = vmatprep.subr.mxu0 0.0
    %1256 = vmatpush1.msra.mxu0 0.0
    %1257 = vmatprep.subr.mxu0 0.0
    %1258 = vmatpush1.msra.mxu0 0.0
    %1259 = vmatprep.subr.mxu0 0.0
    %1260 = vmatpush1.msra.mxu0 0.0
    %1261 = vmatprep.mubr.f32.mxu0 0.0
    %1262 = vmatmul.mubr.f32.gmra.mrb[0].mxu0 %v1195
    %v1263 = vpop.f32.mrb[0].mxu0
    %v1264 = vadd.f32 %v1191, %v1263
    %v1265 = vpop.f32.mrb[0].mxu0
    %1266 = vdwg.mxu0
    %v1267 = vld [vmem:[%s8] sm:$0x1]
    %v1269 = vlaneseq
    %v1270 = vshrl.u32 %v1269, 7
    %v1271 = vsub.s32 0, %v1270
    %v1272 = vrot.slane %v1267, %v1271
    %v1274 = vadd.f32 %v1264, %v1272
    %v1275 = vxor.u32 %v1274, 2147483648
    %v1276 = vmul.f32 %v1275, 1.442695
    %v1277 = vpow.pop %v1276
    %v1278 = vadd.f32 %v1277, 1.0
    %v1279 = vrcp.pop %v1278
    %v1280 = vmul.f32 1.0, %v1279
    %v1281 = vtanh.pop %v1274
    %v1282 = vmul.f32 %v1280, %v1102
    %1284 = vrot.lane.b32.xlu0 %v1281, 64
    %v1285 = vpop.permute.xlu0 %1284
    %v1287 = vmul.f32 %v1280, %v1285
    %1289 = vrot.lane.b32.xlu0 %v1287, 32
    %v1290 = vpop.permute.xlu0 %1289
    %v1292 = vadd.f32 %v1282, %v1290
    %v1293 = vtanh.pop %v1292
    %1295 = vrot.lane.b32.xlu0 %v1293, 64
    %v1296 = vpop.permute.xlu0 %1295
    %v1298 = vmul.f32 %v1280, %v1296
    %v1299 = vld [vmem:[%s10] sm:$0xff]
    %v1300 = vld [vmem:[%s10 + $0x8] sm:$0xff]
    %v1301 = vld [vmem:[%s10 + $0x10] sm:$0xff]
    %v1302 = vld [vmem:[%s10 + $0x18] sm:$0xff]
    %v1303 = vld [vmem:[%s11] sm:$0x1]
    %v1305 = vlaneseq
    %v1306 = vshrl.u32 %v1305, 7
    %v1307 = vsub.s32 0, %v1306
    %v1308 = vrot.slane %v1303, %v1307
    %1311 = vrot.lane.b32.xlu0 %v1298, 32
    %v1312 = vpop.permute.xlu0 %1311
    %v1313 = vsel %vm55, %v1312, 0
    %1315 = vmatprep.subr.mxu0 0.0
    %1316 = vmatpush1.msra.mxu0 %v1299
    %1317 = vmatprep.subr.mxu0 0.0
    %1318 = vmatpush1.msra.mxu0 %v1300
    %1319 = vmatprep.subr.mxu0 0.0
    %1320 = vmatpush1.msra.mxu0 %v1301
    %1321 = vmatprep.subr.mxu0 0.0
    %1322 = vmatpush1.msra.mxu0 %v1302
    %1323 = vmatprep.subr.mxu0 0.0
    %1324 = vmatpush1.msra.mxu0 0.0
    %1325 = vmatprep.subr.mxu0 0.0
    %1326 = vmatpush1.msra.mxu0 0.0
    %1327 = vmatprep.subr.mxu0 0.0
    %1328 = vmatpush1.msra.mxu0 0.0
    %1329 = vmatprep.subr.mxu0 0.0
    %1330 = vmatpush1.msra.mxu0 0.0
    %1331 = vmatprep.subr.mxu0 0.0
    %1332 = vmatpush1.msra.mxu0 0.0
    %1333 = vmatprep.subr.mxu0 0.0
    %1334 = vmatpush1.msra.mxu0 0.0
    %1335 = vmatprep.subr.mxu0 0.0
    %1336 = vmatpush1.msra.mxu0 0.0
    %1337 = vmatprep.subr.mxu0 0.0
    %1338 = vmatpush1.msra.mxu0 0.0
    %1339 = vmatprep.subr.mxu0 0.0
    %1340 = vmatpush1.msra.mxu0 0.0
    %1341 = vmatprep.subr.mxu0 0.0
    %1342 = vmatpush1.msra.mxu0 0.0
    %1343 = vmatprep.subr.mxu0 0.0
    %1344 = vmatpush1.msra.mxu0 0.0
    %1345 = vmatprep.subr.mxu0 0.0
    %1346 = vmatpush1.msra.mxu0 0.0
    %1347 = vmatprep.subr.mxu0 0.0
    %1348 = vmatpush1.msra.mxu0 0.0
    %1349 = vmatprep.subr.mxu0 0.0
    %1350 = vmatpush1.msra.mxu0 0.0
    %1351 = vmatprep.subr.mxu0 0.0
    %1352 = vmatpush1.msra.mxu0 0.0
    %1353 = vmatprep.subr.mxu0 0.0
    %1354 = vmatpush1.msra.mxu0 0.0
    %1355 = vmatprep.subr.mxu0 0.0
    %1356 = vmatpush1.msra.mxu0 0.0
    %1357 = vmatprep.subr.mxu0 0.0
    %1358 = vmatpush1.msra.mxu0 0.0
    %1359 = vmatprep.subr.mxu0 0.0
    %1360 = vmatpush1.msra.mxu0 0.0
    %1361 = vmatprep.subr.mxu0 0.0
    %1362 = vmatpush1.msra.mxu0 0.0
    %1363 = vmatprep.subr.mxu0 0.0
    %1364 = vmatpush1.msra.mxu0 0.0
    %1365 = vmatprep.subr.mxu0 0.0
    %1366 = vmatpush1.msra.mxu0 0.0
    %1367 = vmatprep.subr.mxu0 0.0
    %1368 = vmatpush1.msra.mxu0 0.0
    %1369 = vmatprep.subr.mxu0 0.0
    %1370 = vmatpush1.msra.mxu0 0.0
    %1371 = vmatprep.subr.mxu0 0.0
    %1372 = vmatpush1.msra.mxu0 0.0
    %1373 = vmatprep.subr.mxu0 0.0
    %1374 = vmatpush1.msra.mxu0 0.0
    %1375 = vmatprep.subr.mxu0 0.0
    %1376 = vmatpush1.msra.mxu0 0.0
    %1377 = vmatprep.subr.mxu0 0.0
    %1378 = vmatpush1.msra.mxu0 0.0
    %1379 = vmatprep.mubr.f32.mxu0 0.0
    %1380 = vmatmul.mubr.f32.gmra.mrb[0].mxu0 %v1313
    %v1381 = vpop.f32.mrb[0].mxu0
    %v1382 = vadd.f32 %v1308, %v1381
    %v1383 = vpop.f32.mrb[0].mxu0
    %1384 = vdwg.mxu0
    %s1385 = scalar_lea.vmem [#allocation4], 8
    %1386 = vst.msk [vmem:[%s1385] sm:$0xff] %vm55, %v1382
    %v1387 = vlaneseq
    %v1388 = vand.u32 %v1387, 127
    %v1389 = vsel %vm55, %v1382, -inf
    %1390 = vmax.xlane.f32.xlu0 %v1389
    %v1391 = vpop.xlane.xlu0 %1390
    %vm1392 = vcmp.eq.f32.partialorder %v1382, %v1391
    %v1393 = vsel %vm1392, %v1388, 32
    %v1394 = vsel %vm55, %v1393, 2147483647
    %v1395 = vand.u32 %v1394, 65535
    %v1396 = vshra.s32 %v1394, 16
    %v1397 = vcvt.s32.f32 %v1395
    %v1398 = vcvt.s32.f32 %v1396
    %1399 = vmin.xlane.f32.xlu0 %v1398
    %v1400 = vpop.xlane.xlu0 %1399
    %vm1401 = vcmp.eq.f32.partialorder %v1398, %v1400
    %v1402 = vsel %vm1401, %v1397, inf
    %1403 = vmin.xlane.f32.xlu0 %v1402
    %v1404 = vpop.xlane.xlu0 %1403
    %v1405 = vcvt.f32.s32 %v1404
    %v1406 = vcvt.f32.s32 %v1400
    %v1407 = vshll.u32 %v1406, 16
    %v1408 = vadd.s32 %v1407, %v1405
    %vm1409 = vcmp.eq.s32.totalorder %v1388, %v1408
    %v1410 = vsel %vm1409, 1, 0
    %v1411 = vcvt.s32.f32 %v1410
    %v1412 = vld [vmem:[%s9] sm:$0xff]
    %v1413 = vld [vmem:[%s9 + $0x8] sm:$0xff]
    %v1414 = vld [vmem:[%s9 + $0x10] sm:$0xff]
    %v1415 = vld [vmem:[%s9 + $0x18] sm:$0xff]
    %v1417 = vsel %vm55, %v1411, 0
    %1419 = vmatprep.subr.mxu0 0.0
    %1420 = vmatpush1.msra.mxu0 %v1412
    %1421 = vmatprep.subr.mxu0 0.0
    %1422 = vmatpush1.msra.mxu0 %v1413
    %1423 = vmatprep.subr.mxu0 0.0
    %1424 = vmatpush1.msra.mxu0 %v1414
    %1425 = vmatprep.subr.mxu0 0.0
    %1426 = vmatpush1.msra.mxu0 %v1415
    %1427 = vmatprep.subr.mxu0 0.0
    %1428 = vmatpush1.msra.mxu0 0.0
    %1429 = vmatprep.subr.mxu0 0.0
    %1430 = vmatpush1.msra.mxu0 0.0
    %1431 = vmatprep.subr.mxu0 0.0
    %1432 = vmatpush1.msra.mxu0 0.0
    %1433 = vmatprep.subr.mxu0 0.0
    %1434 = vmatpush1.msra.mxu0 0.0
    %1435 = vmatprep.subr.mxu0 0.0
    %1436 = vmatpush1.msra.mxu0 0.0
    %1437 = vmatprep.subr.mxu0 0.0
    %1438 = vmatpush1.msra.mxu0 0.0
    %1439 = vmatprep.subr.mxu0 0.0
    %1440 = vmatpush1.msra.mxu0 0.0
    %1441 = vmatprep.subr.mxu0 0.0
    %1442 = vmatpush1.msra.mxu0 0.0
    %1443 = vmatprep.subr.mxu0 0.0
    %1444 = vmatpush1.msra.mxu0 0.0
    %1445 = vmatprep.subr.mxu0 0.0
    %1446 = vmatpush1.msra.mxu0 0.0
    %1447 = vmatprep.subr.mxu0 0.0
    %1448 = vmatpush1.msra.mxu0 0.0
    %1449 = vmatprep.subr.mxu0 0.0
    %1450 = vmatpush1.msra.mxu0 0.0
    %1451 = vmatprep.subr.mxu0 0.0
    %1452 = vmatpush1.msra.mxu0 0.0
    %1453 = vmatprep.subr.mxu0 0.0
    %1454 = vmatpush1.msra.mxu0 0.0
    %1455 = vmatprep.subr.mxu0 0.0
    %1456 = vmatpush1.msra.mxu0 0.0
    %1457 = vmatprep.subr.mxu0 0.0
    %1458 = vmatpush1.msra.mxu0 0.0
    %1459 = vmatprep.subr.mxu0 0.0
    %1460 = vmatpush1.msra.mxu0 0.0
    %1461 = vmatprep.subr.mxu0 0.0
    %1462 = vmatpush1.msra.mxu0 0.0
    %1463 = vmatprep.subr.mxu0 0.0
    %1464 = vmatpush1.msra.mxu0 0.0
    %1465 = vmatprep.subr.mxu0 0.0
    %1466 = vmatpush1.msra.mxu0 0.0
    %1467 = vmatprep.subr.mxu0 0.0
    %1468 = vmatpush1.msra.mxu0 0.0
    %1469 = vmatprep.subr.mxu0 0.0
    %1470 = vmatpush1.msra.mxu0 0.0
    %1471 = vmatprep.subr.mxu0 0.0
    %1472 = vmatpush1.msra.mxu0 0.0
    %1473 = vmatprep.subr.mxu0 0.0
    %1474 = vmatpush1.msra.mxu0 0.0
    %1475 = vmatprep.subr.mxu0 0.0
    %1476 = vmatpush1.msra.mxu0 0.0
    %1477 = vmatprep.subr.mxu0 0.0
    %1478 = vmatpush1.msra.mxu0 0.0
    %1479 = vmatprep.subr.mxu0 0.0
    %1480 = vmatpush1.msra.mxu0 0.0
    %1481 = vmatprep.subr.mxu0 0.0
    %1482 = vmatpush1.msra.mxu0 0.0
    %1483 = vmatprep.mubr.f32.mxu0 0.0
    %1484 = vmatmul.mubr.f32.gmra.mrb[0].mxu0 %v1417
    %v1485 = vpop.f32.mrb[0].mxu0
    %v1486 = vadd.f32 0.0, %v1485
    %v1487 = vpop.f32.mrb[0].mxu0
    %1488 = vdwg.mxu0
    %s1489 = scalar_lea.vmem %s2, 8
    %v1490 = vld [vmem:[%s1489] sm:$0xff]
    %s1491 = sld [smem:[#allocation3 + $0x1]]
    %p1492 = scmp.gt.s32.totalorder %s1491, 0
    %s1493 = scalar_select %p1492, 1, 0
    %s1494 = scvt.s32.f32 %s1493
    %v1495 = vstv %s1494
    %v1496 = vmul.f32 %v1495, %v1490
    %s1497 = ssub.f32 1.0, %s1494
    %v1498 = vstv %s1497
    %v1499 = vmul.f32 %v1498, %v1486
    %v1500 = vadd.f32 %v1496, %v1499
    %v1501 = vld [vmem:[%s6] sm:$0xff]
    %v1502 = vld [vmem:[%s6 + $0x8] sm:$0xff]
    %v1503 = vld [vmem:[%s6 + $0x10] sm:$0xff]
    %v1504 = vld [vmem:[%s6 + $0x18] sm:$0xff]
    %v1505 = vld [vmem:[%s7] sm:$0xff]
    %v1506 = vld [vmem:[%s7 + $0x8] sm:$0xff]
    %v1507 = vld [vmem:[%s7 + $0x10] sm:$0xff]
    %v1508 = vld [vmem:[%s7 + $0x18] sm:$0xff]
    %1509 = vmatprep.subr.mxu0 0.0
    %1510 = vmatpush1.msra.mxu0 %v1505
    %1511 = vmatprep.subr.mxu0 0.0
    %1512 = vmatpush1.msra.mxu0 %v1506
    %1513 = vmatprep.subr.mxu0 0.0
    %1514 = vmatpush1.msra.mxu0 %v1507
    %1515 = vmatprep.subr.mxu0 0.0
    %1516 = vmatpush1.msra.mxu0 %v1508
    %1517 = vmatprep.subr.mxu0 0.0
    %1518 = vmatpush1.msra.mxu0 0.0
    %1519 = vmatprep.subr.mxu0 0.0
    %1520 = vmatpush1.msra.mxu0 0.0
    %1521 = vmatprep.subr.mxu0 0.0
    %1522 = vmatpush1.msra.mxu0 0.0
    %1523 = vmatprep.subr.mxu0 0.0
    %1524 = vmatpush1.msra.mxu0 0.0
    %1525 = vmatprep.subr.mxu0 0.0
    %1526 = vmatpush1.msra.mxu0 0.0
    %1527 = vmatprep.subr.mxu0 0.0
    %1528 = vmatpush1.msra.mxu0 0.0
    %1529 = vmatprep.subr.mxu0 0.0
    %1530 = vmatpush1.msra.mxu0 0.0
    %1531 = vmatprep.subr.mxu0 0.0
    %1532 = vmatpush1.msra.mxu0 0.0
    %1533 = vmatprep.subr.mxu0 0.0
    %1534 = vmatpush1.msra.mxu0 0.0
    %1535 = vmatprep.subr.mxu0 0.0
    %1536 = vmatpush1.msra.mxu0 0.0
    %1537 = vmatprep.subr.mxu0 0.0
    %1538 = vmatpush1.msra.mxu0 0.0
    %1539 = vmatprep.subr.mxu0 0.0
    %1540 = vmatpush1.msra.mxu0 0.0
    %1541 = vmatprep.subr.mxu0 0.0
    %1542 = vmatpush1.msra.mxu0 0.0
    %1543 = vmatprep.subr.mxu0 0.0
    %1544 = vmatpush1.msra.mxu0 0.0
    %1545 = vmatprep.subr.mxu0 0.0
    %1546 = vmatpush1.msra.mxu0 0.0
    %1547 = vmatprep.subr.mxu0 0.0
    %1548 = vmatpush1.msra.mxu0 0.0
    %1549 = vmatprep.subr.mxu0 0.0
    %1550 = vmatpush1.msra.mxu0 0.0
    %1551 = vmatprep.subr.mxu0 0.0
    %1552 = vmatpush1.msra.mxu0 0.0
    %1553 = vmatprep.subr.mxu0 0.0
    %1554 = vmatpush1.msra.mxu0 0.0
    %1555 = vmatprep.subr.mxu0 0.0
    %1556 = vmatpush1.msra.mxu0 0.0
    %1557 = vmatprep.subr.mxu0 0.0
    %1558 = vmatpush1.msra.mxu0 0.0
    %1559 = vmatprep.subr.mxu0 0.0
    %1560 = vmatpush1.msra.mxu0 0.0
    %1561 = vmatprep.subr.mxu0 0.0
    %1562 = vmatpush1.msra.mxu0 0.0
    %1563 = vmatprep.subr.mxu0 0.0
    %1564 = vmatpush1.msra.mxu0 0.0
    %1565 = vmatprep.subr.mxu0 0.0
    %1566 = vmatpush1.msra.mxu0 0.0
    %1567 = vmatprep.subr.mxu0 0.0
    %1568 = vmatpush1.msra.mxu0 0.0
    %1569 = vmatprep.subr.mxu0 0.0
    %1570 = vmatpush1.msra.mxu0 0.0
    %1571 = vmatprep.subr.mxu0 0.0
    %1572 = vmatpush1.msra.mxu0 0.0
    %1573 = vmatprep.mubr.f32.mxu0 0.0
    %1574 = vmatmul.mubr.f32.gmra.mrb[0].mxu0 %v1313
    %v1575 = vpop.f32.mrb[0].mxu0
    %v1576 = vadd.f32 0.0, %v1575
    %v1577 = vpop.f32.mrb[0].mxu0
    %1578 = vdwg.mxu0
    %v1580 = vsel %vm55, %v1500, 0
    %1582 = vmatprep.subr.mxu0 0.0
    %1583 = vmatpush1.msra.mxu0 %v1501
    %1584 = vmatprep.subr.mxu0 0.0
    %1585 = vmatpush1.msra.mxu0 %v1502
    %1586 = vmatprep.subr.mxu0 0.0
    %1587 = vmatpush1.msra.mxu0 %v1503
    %1588 = vmatprep.subr.mxu0 0.0
    %1589 = vmatpush1.msra.mxu0 %v1504
    %1590 = vmatprep.subr.mxu0 0.0
    %1591 = vmatpush1.msra.mxu0 0.0
    %1592 = vmatprep.subr.mxu0 0.0
    %1593 = vmatpush1.msra.mxu0 0.0
    %1594 = vmatprep.subr.mxu0 0.0
    %1595 = vmatpush1.msra.mxu0 0.0
    %1596 = vmatprep.subr.mxu0 0.0
    %1597 = vmatpush1.msra.mxu0 0.0
    %1598 = vmatprep.subr.mxu0 0.0
    %1599 = vmatpush1.msra.mxu0 0.0
    %1600 = vmatprep.subr.mxu0 0.0
    %1601 = vmatpush1.msra.mxu0 0.0
    %1602 = vmatprep.subr.mxu0 0.0
    %1603 = vmatpush1.msra.mxu0 0.0
    %1604 = vmatprep.subr.mxu0 0.0
    %1605 = vmatpush1.msra.mxu0 0.0
    %1606 = vmatprep.subr.mxu0 0.0
    %1607 = vmatpush1.msra.mxu0 0.0
    %1608 = vmatprep.subr.mxu0 0.0
    %1609 = vmatpush1.msra.mxu0 0.0
    %1610 = vmatprep.subr.mxu0 0.0
    %1611 = vmatpush1.msra.mxu0 0.0
    %1612 = vmatprep.subr.mxu0 0.0
    %1613 = vmatpush1.msra.mxu0 0.0
    %1614 = vmatprep.subr.mxu0 0.0
    %1615 = vmatpush1.msra.mxu0 0.0
    %1616 = vmatprep.subr.mxu0 0.0
    %1617 = vmatpush1.msra.mxu0 0.0
    %1618 = vmatprep.subr.mxu0 0.0
    %1619 = vmatpush1.msra.mxu0 0.0
    %1620 = vmatprep.subr.mxu0 0.0
    %1621 = vmatpush1.msra.mxu0 0.0
    %1622 = vmatprep.subr.mxu0 0.0
    %1623 = vmatpush1.msra.mxu0 0.0
    %1624 = vmatprep.subr.mxu0 0.0
    %1625 = vmatpush1.msra.mxu0 0.0
    %1626 = vmatprep.subr.mxu0 0.0
    %1627 = vmatpush1.msra.mxu0 0.0
    %1628 = vmatprep.subr.mxu0 0.0
    %1629 = vmatpush1.msra.mxu0 0.0
    %1630 = vmatprep.subr.mxu0 0.0
    %1631 = vmatpush1.msra.mxu0 0.0
    %1632 = vmatprep.subr.mxu0 0.0
    %1633 = vmatpush1.msra.mxu0 0.0
    %1634 = vmatprep.subr.mxu0 0.0
    %1635 = vmatpush1.msra.mxu0 0.0
    %1636 = vmatprep.subr.mxu0 0.0
    %1637 = vmatpush1.msra.mxu0 0.0
    %1638 = vmatprep.subr.mxu0 0.0
    %1639 = vmatpush1.msra.mxu0 0.0
    %1640 = vmatprep.subr.mxu0 0.0
    %1641 = vmatpush1.msra.mxu0 0.0
    %1642 = vmatprep.subr.mxu0 0.0
    %1643 = vmatpush1.msra.mxu0 0.0
    %1644 = vmatprep.subr.mxu0 0.0
    %1645 = vmatpush1.msra.mxu0 0.0
    %1646 = vmatprep.mubr.f32.mxu0 0.0
    %1647 = vmatmul.mubr.f32.gmra.mrb[0].mxu0 %v1580
    %v1648 = vpop.f32.mrb[0].mxu0
    %v1649 = vadd.f32 %v1576, %v1648
    %v1650 = vpop.f32.mrb[0].mxu0
    %1651 = vdwg.mxu0
    %v1652 = vld [vmem:[%s8] sm:$0x1]
    %v1654 = vlaneseq
    %v1655 = vshrl.u32 %v1654, 7
    %v1656 = vsub.s32 0, %v1655
    %v1657 = vrot.slane %v1652, %v1656
    %v1659 = vadd.f32 %v1649, %v1657
    %v1660 = vxor.u32 %v1659, 2147483648
    %v1661 = vmul.f32 %v1660, 1.442695
    %v1662 = vpow.pop %v1661
    %v1663 = vadd.f32 %v1662, 1.0
    %v1664 = vrcp.pop %v1663
    %v1665 = vmul.f32 1.0, %v1664
    %v1666 = vtanh.pop %v1659
    %v1667 = vmul.f32 %v1665, %v1292
    %1669 = vrot.lane.b32.xlu0 %v1666, 64
    %v1670 = vpop.permute.xlu0 %1669
    %v1672 = vmul.f32 %v1665, %v1670
    %1674 = vrot.lane.b32.xlu0 %v1672, 32
    %v1675 = vpop.permute.xlu0 %1674
    %v1677 = vadd.f32 %v1667, %v1675
    %v1678 = vtanh.pop %v1677
    %1680 = vrot.lane.b32.xlu0 %v1678, 64
    %v1681 = vpop.permute.xlu0 %1680
    %v1683 = vmul.f32 %v1665, %v1681
    %v1684 = vld [vmem:[%s10] sm:$0xff]
    %v1685 = vld [vmem:[%s10 + $0x8] sm:$0xff]
    %v1686 = vld [vmem:[%s10 + $0x10] sm:$0xff]
    %v1687 = vld [vmem:[%s10 + $0x18] sm:$0xff]
    %v1688 = vld [vmem:[%s11] sm:$0x1]
    %v1690 = vlaneseq
    %v1691 = vshrl.u32 %v1690, 7
    %v1692 = vsub.s32 0, %v1691
    %v1693 = vrot.slane %v1688, %v1692
    %1696 = vrot.lane.b32.xlu0 %v1683, 32
    %v1697 = vpop.permute.xlu0 %1696
    %v1698 = vsel %vm55, %v1697, 0
    %1700 = vmatprep.subr.mxu0 0.0
    %1701 = vmatpush1.msra.mxu0 %v1684
    %1702 = vmatprep.subr.mxu0 0.0
    %1703 = vmatpush1.msra.mxu0 %v1685
    %1704 = vmatprep.subr.mxu0 0.0
    %1705 = vmatpush1.msra.mxu0 %v1686
    %1706 = vmatprep.subr.mxu0 0.0
    %1707 = vmatpush1.msra.mxu0 %v1687
    %1708 = vmatprep.subr.mxu0 0.0
    %1709 = vmatpush1.msra.mxu0 0.0
    %1710 = vmatprep.subr.mxu0 0.0
    %1711 = vmatpush1.msra.mxu0 0.0
    %1712 = vmatprep.subr.mxu0 0.0
    %1713 = vmatpush1.msra.mxu0 0.0
    %1714 = vmatprep.subr.mxu0 0.0
    %1715 = vmatpush1.msra.mxu0 0.0
    %1716 = vmatprep.subr.mxu0 0.0
    %1717 = vmatpush1.msra.mxu0 0.0
    %1718 = vmatprep.subr.mxu0 0.0
    %1719 = vmatpush1.msra.mxu0 0.0
    %1720 = vmatprep.subr.mxu0 0.0
    %1721 = vmatpush1.msra.mxu0 0.0
    %1722 = vmatprep.subr.mxu0 0.0
    %1723 = vmatpush1.msra.mxu0 0.0
    %1724 = vmatprep.subr.mxu0 0.0
    %1725 = vmatpush1.msra.mxu0 0.0
    %1726 = vmatprep.subr.mxu0 0.0
    %1727 = vmatpush1.msra.mxu0 0.0
    %1728 = vmatprep.subr.mxu0 0.0
    %1729 = vmatpush1.msra.mxu0 0.0
    %1730 = vmatprep.subr.mxu0 0.0
    %1731 = vmatpush1.msra.mxu0 0.0
    %1732 = vmatprep.subr.mxu0 0.0
    %1733 = vmatpush1.msra.mxu0 0.0
    %1734 = vmatprep.subr.mxu0 0.0
    %1735 = vmatpush1.msra.mxu0 0.0
    %1736 = vmatprep.subr.mxu0 0.0
    %1737 = vmatpush1.msra.mxu0 0.0
    %1738 = vmatprep.subr.mxu0 0.0
    %1739 = vmatpush1.msra.mxu0 0.0
    %1740 = vmatprep.subr.mxu0 0.0
    %1741 = vmatpush1.msra.mxu0 0.0
    %1742 = vmatprep.subr.mxu0 0.0
    %1743 = vmatpush1.msra.mxu0 0.0
    %1744 = vmatprep.subr.mxu0 0.0
    %1745 = vmatpush1.msra.mxu0 0.0
    %1746 = vmatprep.subr.mxu0 0.0
    %1747 = vmatpush1.msra.mxu0 0.0
    %1748 = vmatprep.subr.mxu0 0.0
    %1749 = vmatpush1.msra.mxu0 0.0
    %1750 = vmatprep.subr.mxu0 0.0
    %1751 = vmatpush1.msra.mxu0 0.0
    %1752 = vmatprep.subr.mxu0 0.0
    %1753 = vmatpush1.msra.mxu0 0.0
    %1754 = vmatprep.subr.mxu0 0.0
    %1755 = vmatpush1.msra.mxu0 0.0
    %1756 = vmatprep.subr.mxu0 0.0
    %1757 = vmatpush1.msra.mxu0 0.0
    %1758 = vmatprep.subr.mxu0 0.0
    %1759 = vmatpush1.msra.mxu0 0.0
    %1760 = vmatprep.subr.mxu0 0.0
    %1761 = vmatpush1.msra.mxu0 0.0
    %1762 = vmatprep.subr.mxu0 0.0
    %1763 = vmatpush1.msra.mxu0 0.0
    %1764 = vmatprep.mubr.f32.mxu0 0.0
    %1765 = vmatmul.mubr.f32.gmra.mrb[0].mxu0 %v1698
    %v1766 = vpop.f32.mrb[0].mxu0
    %v1767 = vadd.f32 %v1693, %v1766
    %v1768 = vpop.f32.mrb[0].mxu0
    %1769 = vdwg.mxu0
    %s1770 = scalar_lea.vmem [#allocation4], 16
    %1771 = vst.msk [vmem:[%s1770] sm:$0xff] %vm55, %v1767
    %v1772 = vsel %vm55, %v1767, -inf
    %1773 = vmax.xlane.f32.xlu0 %v1772
    %v1774 = vpop.xlane.xlu0 %1773
    %vm1775 = vcmp.eq.f32.partialorder %v1767, %v1774
    %v1776 = vsel %vm1775, %v1388, 32
    %v1777 = vsel %vm55, %v1776, 2147483647
    %v1778 = vand.u32 %v1777, 65535
    %v1779 = vshra.s32 %v1777, 16
    %v1780 = vcvt.s32.f32 %v1778
    %v1781 = vcvt.s32.f32 %v1779
    %1782 = vmin.xlane.f32.xlu0 %v1781
    %v1783 = vpop.xlane.xlu0 %1782
    %vm1784 = vcmp.eq.f32.partialorder %v1781, %v1783
    %v1785 = vsel %vm1784, %v1780, inf
    %1786 = vmin.xlane.f32.xlu0 %v1785
    %v1787 = vpop.xlane.xlu0 %1786
    %v1788 = vcvt.f32.s32 %v1787
    %v1789 = vcvt.f32.s32 %v1783
    %v1790 = vshll.u32 %v1789, 16
    %v1791 = vadd.s32 %v1790, %v1788
    %vm1792 = vcmp.eq.s32.totalorder %v1388, %v1791
    %v1793 = vsel %vm1792, 1, 0
    %v1794 = vcvt.s32.f32 %v1793
    %v1795 = vld [vmem:[%s9] sm:$0xff]
    %v1796 = vld [vmem:[%s9 + $0x8] sm:$0xff]
    %v1797 = vld [vmem:[%s9 + $0x10] sm:$0xff]
    %v1798 = vld [vmem:[%s9 + $0x18] sm:$0xff]
    %v1800 = vsel %vm55, %v1794, 0
    %1802 = vmatprep.subr.mxu0 0.0
    %1803 = vmatpush1.msra.mxu0 %v1795
    %1804 = vmatprep.subr.mxu0 0.0
    %1805 = vmatpush1.msra.mxu0 %v1796
    %1806 = vmatprep.subr.mxu0 0.0
    %1807 = vmatpush1.msra.mxu0 %v1797
    %1808 = vmatprep.subr.mxu0 0.0
    %1809 = vmatpush1.msra.mxu0 %v1798
    %1810 = vmatprep.subr.mxu0 0.0
    %1811 = vmatpush1.msra.mxu0 0.0
    %1812 = vmatprep.subr.mxu0 0.0
    %1813 = vmatpush1.msra.mxu0 0.0
    %1814 = vmatprep.subr.mxu0 0.0
    %1815 = vmatpush1.msra.mxu0 0.0
    %1816 = vmatprep.subr.mxu0 0.0
    %1817 = vmatpush1.msra.mxu0 0.0
    %1818 = vmatprep.subr.mxu0 0.0
    %1819 = vmatpush1.msra.mxu0 0.0
    %1820 = vmatprep.subr.mxu0 0.0
    %1821 = vmatpush1.msra.mxu0 0.0
    %1822 = vmatprep.subr.mxu0 0.0
    %1823 = vmatpush1.msra.mxu0 0.0
    %1824 = vmatprep.subr.mxu0 0.0
    %1825 = vmatpush1.msra.mxu0 0.0
    %1826 = vmatprep.subr.mxu0 0.0
    %1827 = vmatpush1.msra.mxu0 0.0
    %1828 = vmatprep.subr.mxu0 0.0
    %1829 = vmatpush1.msra.mxu0 0.0
    %1830 = vmatprep.subr.mxu0 0.0
    %1831 = vmatpush1.msra.mxu0 0.0
    %1832 = vmatprep.subr.mxu0 0.0
    %1833 = vmatpush1.msra.mxu0 0.0
    %1834 = vmatprep.subr.mxu0 0.0
    %1835 = vmatpush1.msra.mxu0 0.0
    %1836 = vmatprep.subr.mxu0 0.0
    %1837 = vmatpush1.msra.mxu0 0.0
    %1838 = vmatprep.subr.mxu0 0.0
    %1839 = vmatpush1.msra.mxu0 0.0
    %1840 = vmatprep.subr.mxu0 0.0
    %1841 = vmatpush1.msra.mxu0 0.0
    %1842 = vmatprep.subr.mxu0 0.0
    %1843 = vmatpush1.msra.mxu0 0.0
    %1844 = vmatprep.subr.mxu0 0.0
    %1845 = vmatpush1.msra.mxu0 0.0
    %1846 = vmatprep.subr.mxu0 0.0
    %1847 = vmatpush1.msra.mxu0 0.0
    %1848 = vmatprep.subr.mxu0 0.0
    %1849 = vmatpush1.msra.mxu0 0.0
    %1850 = vmatprep.subr.mxu0 0.0
    %1851 = vmatpush1.msra.mxu0 0.0
    %1852 = vmatprep.subr.mxu0 0.0
    %1853 = vmatpush1.msra.mxu0 0.0
    %1854 = vmatprep.subr.mxu0 0.0
    %1855 = vmatpush1.msra.mxu0 0.0
    %1856 = vmatprep.subr.mxu0 0.0
    %1857 = vmatpush1.msra.mxu0 0.0
    %1858 = vmatprep.subr.mxu0 0.0
    %1859 = vmatpush1.msra.mxu0 0.0
    %1860 = vmatprep.subr.mxu0 0.0
    %1861 = vmatpush1.msra.mxu0 0.0
    %1862 = vmatprep.subr.mxu0 0.0
    %1863 = vmatpush1.msra.mxu0 0.0
    %1864 = vmatprep.subr.mxu0 0.0
    %1865 = vmatpush1.msra.mxu0 0.0
    %1866 = vmatprep.mubr.f32.mxu0 0.0
    %1867 = vmatmul.mubr.f32.gmra.mrb[0].mxu0 %v1800
    %v1868 = vpop.f32.mrb[0].mxu0
    %v1869 = vadd.f32 0.0, %v1868
    %v1870 = vpop.f32.mrb[0].mxu0
    %1871 = vdwg.mxu0
    %s1872 = scalar_lea.vmem %s2, 16
    %v1873 = vld [vmem:[%s1872] sm:$0xff]
    %s1874 = sld [smem:[#allocation3 + $0x2]]
    %p1875 = scmp.gt.s32.totalorder %s1874, 0
    %s1876 = scalar_select %p1875, 1, 0
    %s1877 = scvt.s32.f32 %s1876
    %v1878 = vstv %s1877
    %v1879 = vmul.f32 %v1878, %v1873
    %s1880 = ssub.f32 1.0, %s1877
    %v1881 = vstv %s1880
    %v1882 = vmul.f32 %v1881, %v1869
    %v1883 = vadd.f32 %v1879, %v1882
    %v1884 = vld [vmem:[%s6] sm:$0xff]
    %v1885 = vld [vmem:[%s6 + $0x8] sm:$0xff]
    %v1886 = vld [vmem:[%s6 + $0x10] sm:$0xff]
    %v1887 = vld [vmem:[%s6 + $0x18] sm:$0xff]
    %v1888 = vld [vmem:[%s7] sm:$0xff]
    %v1889 = vld [vmem:[%s7 + $0x8] sm:$0xff]
    %v1890 = vld [vmem:[%s7 + $0x10] sm:$0xff]
    %v1891 = vld [vmem:[%s7 + $0x18] sm:$0xff]
    %1892 = vmatprep.subr.mxu0 0.0
    %1893 = vmatpush1.msra.mxu0 %v1888
    %1894 = vmatprep.subr.mxu0 0.0
    %1895 = vmatpush1.msra.mxu0 %v1889
    %1896 = vmatprep.subr.mxu0 0.0
    %1897 = vmatpush1.msra.mxu0 %v1890
    %1898 = vmatprep.subr.mxu0 0.0
    %1899 = vmatpush1.msra.mxu0 %v1891
    %1900 = vmatprep.subr.mxu0 0.0
    %1901 = vmatpush1.msra.mxu0 0.0
    %1902 = vmatprep.subr.mxu0 0.0
    %1903 = vmatpush1.msra.mxu0 0.0
    %1904 = vmatprep.subr.mxu0 0.0
    %1905 = vmatpush1.msra.mxu0 0.0
    %1906 = vmatprep.subr.mxu0 0.0
    %1907 = vmatpush1.msra.mxu0 0.0
    %1908 = vmatprep.subr.mxu0 0.0
    %1909 = vmatpush1.msra.mxu0 0.0
    %1910 = vmatprep.subr.mxu0 0.0
    %1911 = vmatpush1.msra.mxu0 0.0
    %1912 = vmatprep.subr.mxu0 0.0
    %1913 = vmatpush1.msra.mxu0 0.0
    %1914 = vmatprep.subr.mxu0 0.0
    %1915 = vmatpush1.msra.mxu0 0.0
    %1916 = vmatprep.subr.mxu0 0.0
    %1917 = vmatpush1.msra.mxu0 0.0
    %1918 = vmatprep.subr.mxu0 0.0
    %1919 = vmatpush1.msra.mxu0 0.0
    %1920 = vmatprep.subr.mxu0 0.0
    %1921 = vmatpush1.msra.mxu0 0.0
    %1922 = vmatprep.subr.mxu0 0.0
    %1923 = vmatpush1.msra.mxu0 0.0
    %1924 = vmatprep.subr.mxu0 0.0
    %1925 = vmatpush1.msra.mxu0 0.0
    %1926 = vmatprep.subr.mxu0 0.0
    %1927 = vmatpush1.msra.mxu0 0.0
    %1928 = vmatprep.subr.mxu0 0.0
    %1929 = vmatpush1.msra.mxu0 0.0
    %1930 = vmatprep.subr.mxu0 0.0
    %1931 = vmatpush1.msra.mxu0 0.0
    %1932 = vmatprep.subr.mxu0 0.0
    %1933 = vmatpush1.msra.mxu0 0.0
    %1934 = vmatprep.subr.mxu0 0.0
    %1935 = vmatpush1.msra.mxu0 0.0
    %1936 = vmatprep.subr.mxu0 0.0
    %1937 = vmatpush1.msra.mxu0 0.0
    %1938 = vmatprep.subr.mxu0 0.0
    %1939 = vmatpush1.msra.mxu0 0.0
    %1940 = vmatprep.subr.mxu0 0.0
    %1941 = vmatpush1.msra.mxu0 0.0
    %1942 = vmatprep.subr.mxu0 0.0
    %1943 = vmatpush1.msra.mxu0 0.0
    %1944 = vmatprep.subr.mxu0 0.0
    %1945 = vmatpush1.msra.mxu0 0.0
    %1946 = vmatprep.subr.mxu0 0.0
    %1947 = vmatpush1.msra.mxu0 0.0
    %1948 = vmatprep.subr.mxu0 0.0
    %1949 = vmatpush1.msra.mxu0 0.0
    %1950 = vmatprep.subr.mxu0 0.0
    %1951 = vmatpush1.msra.mxu0 0.0
    %1952 = vmatprep.subr.mxu0 0.0
    %1953 = vmatpush1.msra.mxu0 0.0
    %1954 = vmatprep.subr.mxu0 0.0
    %1955 = vmatpush1.msra.mxu0 0.0
    %1956 = vmatprep.mubr.f32.mxu0 0.0
    %1957 = vmatmul.mubr.f32.gmra.mrb[0].mxu0 %v1698
    %v1958 = vpop.f32.mrb[0].mxu0
    %v1959 = vadd.f32 0.0, %v1958
    %v1960 = vpop.f32.mrb[0].mxu0
    %1961 = vdwg.mxu0
    %v1963 = vsel %vm55, %v1883, 0
    %1965 = vmatprep.subr.mxu0 0.0
    %1966 = vmatpush1.msra.mxu0 %v1884
    %1967 = vmatprep.subr.mxu0 0.0
    %1968 = vmatpush1.msra.mxu0 %v1885
    %1969 = vmatprep.subr.mxu0 0.0
    %1970 = vmatpush1.msra.mxu0 %v1886
    %1971 = vmatprep.subr.mxu0 0.0
    %1972 = vmatpush1.msra.mxu0 %v1887
    %1973 = vmatprep.subr.mxu0 0.0
    %1974 = vmatpush1.msra.mxu0 0.0
    %1975 = vmatprep.subr.mxu0 0.0
    %1976 = vmatpush1.msra.mxu0 0.0
    %1977 = vmatprep.subr.mxu0 0.0
    %1978 = vmatpush1.msra.mxu0 0.0
    %1979 = vmatprep.subr.mxu0 0.0
    %1980 = vmatpush1.msra.mxu0 0.0
    %1981 = vmatprep.subr.mxu0 0.0
    %1982 = vmatpush1.msra.mxu0 0.0
    %1983 = vmatprep.subr.mxu0 0.0
    %1984 = vmatpush1.msra.mxu0 0.0
    %1985 = vmatprep.subr.mxu0 0.0
    %1986 = vmatpush1.msra.mxu0 0.0
    %1987 = vmatprep.subr.mxu0 0.0
    %1988 = vmatpush1.msra.mxu0 0.0
    %1989 = vmatprep.subr.mxu0 0.0
    %1990 = vmatpush1.msra.mxu0 0.0
    %1991 = vmatprep.subr.mxu0 0.0
    %1992 = vmatpush1.msra.mxu0 0.0
    %1993 = vmatprep.subr.mxu0 0.0
    %1994 = vmatpush1.msra.mxu0 0.0
    %1995 = vmatprep.subr.mxu0 0.0
    %1996 = vmatpush1.msra.mxu0 0.0
    %1997 = vmatprep.subr.mxu0 0.0
    %1998 = vmatpush1.msra.mxu0 0.0
    %1999 = vmatprep.subr.mxu0 0.0
    %2000 = vmatpush1.msra.mxu0 0.0
    %2001 = vmatprep.subr.mxu0 0.0
    %2002 = vmatpush1.msra.mxu0 0.0
    %2003 = vmatprep.subr.mxu0 0.0
    %2004 = vmatpush1.msra.mxu0 0.0
    %2005 = vmatprep.subr.mxu0 0.0
    %2006 = vmatpush1.msra.mxu0 0.0
    %2007 = vmatprep.subr.mxu0 0.0
    %2008 = vmatpush1.msra.mxu0 0.0
    %2009 = vmatprep.subr.mxu0 0.0
    %2010 = vmatpush1.msra.mxu0 0.0
    %2011 = vmatprep.subr.mxu0 0.0
    %2012 = vmatpush1.msra.mxu0 0.0
    %2013 = vmatprep.subr.mxu0 0.0
    %2014 = vmatpush1.msra.mxu0 0.0
    %2015 = vmatprep.subr.mxu0 0.0
    %2016 = vmatpush1.msra.mxu0 0.0
    %2017 = vmatprep.subr.mxu0 0.0
    %2018 = vmatpush1.msra.mxu0 0.0
    %2019 = vmatprep.subr.mxu0 0.0
    %2020 = vmatpush1.msra.mxu0 0.0
    %2021 = vmatprep.subr.mxu0 0.0
    %2022 = vmatpush1.msra.mxu0 0.0
    %2023 = vmatprep.subr.mxu0 0.0
    %2024 = vmatpush1.msra.mxu0 0.0
    %2025 = vmatprep.subr.mxu0 0.0
    %2026 = vmatpush1.msra.mxu0 0.0
    %2027 = vmatprep.subr.mxu0 0.0
    %2028 = vmatpush1.msra.mxu0 0.0
    %2029 = vmatprep.mubr.f32.mxu0 0.0
    %2030 = vmatmul.mubr.f32.gmra.mrb[0].mxu0 %v1963
    %v2031 = vpop.f32.mrb[0].mxu0
    %v2032 = vadd.f32 %v1959, %v2031
    %v2033 = vpop.f32.mrb[0].mxu0
    %2034 = vdwg.mxu0
    %v2035 = vld [vmem:[%s8] sm:$0x1]
    %v2037 = vlaneseq
    %v2038 = vshrl.u32 %v2037, 7
    %v2039 = vsub.s32 0, %v2038
    %v2040 = vrot.slane %v2035, %v2039
    %v2042 = vadd.f32 %v2032, %v2040
    %v2043 = vxor.u32 %v2042, 2147483648
    %v2044 = vmul.f32 %v2043, 1.442695
    %v2045 = vpow.pop %v2044
    %v2046 = vadd.f32 %v2045, 1.0
    %v2047 = vrcp.pop %v2046
    %v2048 = vmul.f32 1.0, %v2047
    %v2049 = vtanh.pop %v2042
    %v2050 = vmul.f32 %v2048, %v1677
    %2052 = vrot.lane.b32.xlu0 %v2049, 64
    %v2053 = vpop.permute.xlu0 %2052
    %v2055 = vmul.f32 %v2048, %v2053
    %2057 = vrot.lane.b32.xlu0 %v2055, 32
    %v2058 = vpop.permute.xlu0 %2057
    %v2060 = vadd.f32 %v2050, %v2058
    %v2061 = vtanh.pop %v2060
    %2063 = vrot.lane.b32.xlu0 %v2061, 64
    %v2064 = vpop.permute.xlu0 %2063
    %v2066 = vmul.f32 %v2048, %v2064
    %v2067 = vld [vmem:[%s10] sm:$0xff]
    %v2068 = vld [vmem:[%s10 + $0x8] sm:$0xff]
    %v2069 = vld [vmem:[%s10 + $0x10] sm:$0xff]
    %v2070 = vld [vmem:[%s10 + $0x18] sm:$0xff]
    %v2071 = vld [vmem:[%s11] sm:$0x1]
    %v2073 = vlaneseq
    %v2074 = vshrl.u32 %v2073, 7
    %v2075 = vsub.s32 0, %v2074
    %v2076 = vrot.slane %v2071, %v2075
    %2079 = vrot.lane.b32.xlu0 %v2066, 32
    %v2080 = vpop.permute.xlu0 %2079
    %v2081 = vsel %vm55, %v2080, 0
    %2083 = vmatprep.subr.mxu0 0.0
    %2084 = vmatpush1.msra.mxu0 %v2067
    %2085 = vmatprep.subr.mxu0 0.0
    %2086 = vmatpush1.msra.mxu0 %v2068
    %2087 = vmatprep.subr.mxu0 0.0
    %2088 = vmatpush1.msra.mxu0 %v2069
    %2089 = vmatprep.subr.mxu0 0.0
    %2090 = vmatpush1.msra.mxu0 %v2070
    %2091 = vmatprep.subr.mxu0 0.0
    %2092 = vmatpush1.msra.mxu0 0.0
    %2093 = vmatprep.subr.mxu0 0.0
    %2094 = vmatpush1.msra.mxu0 0.0
    %2095 = vmatprep.subr.mxu0 0.0
    %2096 = vmatpush1.msra.mxu0 0.0
    %2097 = vmatprep.subr.mxu0 0.0
    %2098 = vmatpush1.msra.mxu0 0.0
    %2099 = vmatprep.subr.mxu0 0.0
    %2100 = vmatpush1.msra.mxu0 0.0
    %2101 = vmatprep.subr.mxu0 0.0
    %2102 = vmatpush1.msra.mxu0 0.0
    %2103 = vmatprep.subr.mxu0 0.0
    %2104 = vmatpush1.msra.mxu0 0.0
    %2105 = vmatprep.subr.mxu0 0.0
    %2106 = vmatpush1.msra.mxu0 0.0
    %2107 = vmatprep.subr.mxu0 0.0
    %2108 = vmatpush1.msra.mxu0 0.0
    %2109 = vmatprep.subr.mxu0 0.0
    %2110 = vmatpush1.msra.mxu0 0.0
    %2111 = vmatprep.subr.mxu0 0.0
    %2112 = vmatpush1.msra.mxu0 0.0
    %2113 = vmatprep.subr.mxu0 0.0
    %2114 = vmatpush1.msra.mxu0 0.0
    %2115 = vmatprep.subr.mxu0 0.0
    %2116 = vmatpush1.msra.mxu0 0.0
    %2117 = vmatprep.subr.mxu0 0.0
    %2118 = vmatpush1.msra.mxu0 0.0
    %2119 = vmatprep.subr.mxu0 0.0
    %2120 = vmatpush1.msra.mxu0 0.0
    %2121 = vmatprep.subr.mxu0 0.0
    %2122 = vmatpush1.msra.mxu0 0.0
    %2123 = vmatprep.subr.mxu0 0.0
    %2124 = vmatpush1.msra.mxu0 0.0
    %2125 = vmatprep.subr.mxu0 0.0
    %2126 = vmatpush1.msra.mxu0 0.0
    %2127 = vmatprep.subr.mxu0 0.0
    %2128 = vmatpush1.msra.mxu0 0.0
    %2129 = vmatprep.subr.mxu0 0.0
    %2130 = vmatpush1.msra.mxu0 0.0
    %2131 = vmatprep.subr.mxu0 0.0
    %2132 = vmatpush1.msra.mxu0 0.0
    %2133 = vmatprep.subr.mxu0 0.0
    %2134 = vmatpush1.msra.mxu0 0.0
    %2135 = vmatprep.subr.mxu0 0.0
    %2136 = vmatpush1.msra.mxu0 0.0
    %2137 = vmatprep.subr.mxu0 0.0
    %2138 = vmatpush1.msra.mxu0 0.0
    %2139 = vmatprep.subr.mxu0 0.0
    %2140 = vmatpush1.msra.mxu0 0.0
    %2141 = vmatprep.subr.mxu0 0.0
    %2142 = vmatpush1.msra.mxu0 0.0
    %2143 = vmatprep.subr.mxu0 0.0
    %2144 = vmatpush1.msra.mxu0 0.0
    %2145 = vmatprep.subr.mxu0 0.0
    %2146 = vmatpush1.msra.mxu0 0.0
    %2147 = vmatprep.mubr.f32.mxu0 0.0
    %2148 = vmatmul.mubr.f32.gmra.mrb[0].mxu0 %v2081
    %v2149 = vpop.f32.mrb[0].mxu0
    %v2150 = vadd.f32 %v2076, %v2149
    %v2151 = vpop.f32.mrb[0].mxu0
    %2152 = vdwg.mxu0
    %s2153 = scalar_lea.vmem [#allocation4], 24
    %2154 = vst.msk [vmem:[%s2153] sm:$0xff] %vm55, %v2150
    %v2155 = vsel %vm55, %v2150, -inf
    %2156 = vmax.xlane.f32.xlu0 %v2155
    %v2157 = vpop.xlane.xlu0 %2156
    %vm2158 = vcmp.eq.f32.partialorder %v2150, %v2157
    %v2159 = vsel %vm2158, %v1388, 32
    %v2160 = vsel %vm55, %v2159, 2147483647
    %v2161 = vand.u32 %v2160, 65535
    %v2162 = vshra.s32 %v2160, 16
    %v2163 = vcvt.s32.f32 %v2161
    %v2164 = vcvt.s32.f32 %v2162
    %2165 = vmin.xlane.f32.xlu0 %v2164
    %v2166 = vpop.xlane.xlu0 %2165
    %vm2167 = vcmp.eq.f32.partialorder %v2164, %v2166
    %v2168 = vsel %vm2167, %v2163, inf
    %2169 = vmin.xlane.f32.xlu0 %v2168
    %v2170 = vpop.xlane.xlu0 %2169
    %v2171 = vcvt.f32.s32 %v2170
    %v2172 = vcvt.f32.s32 %v2166
    %v2173 = vshll.u32 %v2172, 16
    %v2174 = vadd.s32 %v2173, %v2171
    %vm2175 = vcmp.eq.s32.totalorder %v1388, %v2174
    %v2176 = vsel %vm2175, 1, 0
    %v2177 = vcvt.s32.f32 %v2176
    %v2178 = vld [vmem:[%s9] sm:$0xff]
    %v2179 = vld [vmem:[%s9 + $0x8] sm:$0xff]
    %v2180 = vld [vmem:[%s9 + $0x10] sm:$0xff]
    %v2181 = vld [vmem:[%s9 + $0x18] sm:$0xff]
    %v2183 = vsel %vm55, %v2177, 0
    %2185 = vmatprep.subr.mxu0 0.0
    %2186 = vmatpush1.msra.mxu0 %v2178
    %2187 = vmatprep.subr.mxu0 0.0
    %2188 = vmatpush1.msra.mxu0 %v2179
    %2189 = vmatprep.subr.mxu0 0.0
    %2190 = vmatpush1.msra.mxu0 %v2180
    %2191 = vmatprep.subr.mxu0 0.0
    %2192 = vmatpush1.msra.mxu0 %v2181
    %2193 = vmatprep.subr.mxu0 0.0
    %2194 = vmatpush1.msra.mxu0 0.0
    %2195 = vmatprep.subr.mxu0 0.0
    %2196 = vmatpush1.msra.mxu0 0.0
    %2197 = vmatprep.subr.mxu0 0.0
    %2198 = vmatpush1.msra.mxu0 0.0
    %2199 = vmatprep.subr.mxu0 0.0
    %2200 = vmatpush1.msra.mxu0 0.0
    %2201 = vmatprep.subr.mxu0 0.0
    %2202 = vmatpush1.msra.mxu0 0.0
    %2203 = vmatprep.subr.mxu0 0.0
    %2204 = vmatpush1.msra.mxu0 0.0
    %2205 = vmatprep.subr.mxu0 0.0
    %2206 = vmatpush1.msra.mxu0 0.0
    %2207 = vmatprep.subr.mxu0 0.0
    %2208 = vmatpush1.msra.mxu0 0.0
    %2209 = vmatprep.subr.mxu0 0.0
    %2210 = vmatpush1.msra.mxu0 0.0
    %2211 = vmatprep.subr.mxu0 0.0
    %2212 = vmatpush1.msra.mxu0 0.0
    %2213 = vmatprep.subr.mxu0 0.0
    %2214 = vmatpush1.msra.mxu0 0.0
    %2215 = vmatprep.subr.mxu0 0.0
    %2216 = vmatpush1.msra.mxu0 0.0
    %2217 = vmatprep.subr.mxu0 0.0
    %2218 = vmatpush1.msra.mxu0 0.0
    %2219 = vmatprep.subr.mxu0 0.0
    %2220 = vmatpush1.msra.mxu0 0.0
    %2221 = vmatprep.subr.mxu0 0.0
    %2222 = vmatpush1.msra.mxu0 0.0
    %2223 = vmatprep.subr.mxu0 0.0
    %2224 = vmatpush1.msra.mxu0 0.0
    %2225 = vmatprep.subr.mxu0 0.0
    %2226 = vmatpush1.msra.mxu0 0.0
    %2227 = vmatprep.subr.mxu0 0.0
    %2228 = vmatpush1.msra.mxu0 0.0
    %2229 = vmatprep.subr.mxu0 0.0
    %2230 = vmatpush1.msra.mxu0 0.0
    %2231 = vmatprep.subr.mxu0 0.0
    %2232 = vmatpush1.msra.mxu0 0.0
    %2233 = vmatprep.subr.mxu0 0.0
    %2234 = vmatpush1.msra.mxu0 0.0
    %2235 = vmatprep.subr.mxu0 0.0
    %2236 = vmatpush1.msra.mxu0 0.0
    %2237 = vmatprep.subr.mxu0 0.0
    %2238 = vmatpush1.msra.mxu0 0.0
    %2239 = vmatprep.subr.mxu0 0.0
    %2240 = vmatpush1.msra.mxu0 0.0
    %2241 = vmatprep.subr.mxu0 0.0
    %2242 = vmatpush1.msra.mxu0 0.0
    %2243 = vmatprep.subr.mxu0 0.0
    %2244 = vmatpush1.msra.mxu0 0.0
    %2245 = vmatprep.subr.mxu0 0.0
    %2246 = vmatpush1.msra.mxu0 0.0
    %2247 = vmatprep.subr.mxu0 0.0
    %2248 = vmatpush1.msra.mxu0 0.0
    %2249 = vmatprep.mubr.f32.mxu0 0.0
    %2250 = vmatmul.mubr.f32.gmra.mrb[0].mxu0 %v2183
    %v2251 = vpop.f32.mrb[0].mxu0
    %v2252 = vadd.f32 0.0, %v2251
    %v2253 = vpop.f32.mrb[0].mxu0
    %2254 = vdwg.mxu0
    %s2255 = scalar_lea.vmem %s2, 24
    %v2256 = vld [vmem:[%s2255] sm:$0xff]
    %s2257 = sld [smem:[#allocation3 + $0x3]]
    %p2258 = scmp.gt.s32.totalorder %s2257, 0
    %s2259 = scalar_select %p2258, 1, 0
    %s2260 = scvt.s32.f32 %s2259
    %v2261 = vstv %s2260
    %v2262 = vmul.f32 %v2261, %v2256
    %s2263 = ssub.f32 1.0, %s2260
    %v2264 = vstv %s2263
    %v2265 = vmul.f32 %v2264, %v2252
    %v2266 = vadd.f32 %v2262, %v2265
    %v2267 = vld [vmem:[%s6] sm:$0xff]
    %v2268 = vld [vmem:[%s6 + $0x8] sm:$0xff]
    %v2269 = vld [vmem:[%s6 + $0x10] sm:$0xff]
    %v2270 = vld [vmem:[%s6 + $0x18] sm:$0xff]
    %v2271 = vld [vmem:[%s7] sm:$0xff]
    %v2272 = vld [vmem:[%s7 + $0x8] sm:$0xff]
    %v2273 = vld [vmem:[%s7 + $0x10] sm:$0xff]
    %v2274 = vld [vmem:[%s7 + $0x18] sm:$0xff]
    %2275 = vmatprep.subr.mxu0 0.0
    %2276 = vmatpush1.msra.mxu0 %v2271
    %2277 = vmatprep.subr.mxu0 0.0
    %2278 = vmatpush1.msra.mxu0 %v2272
    %2279 = vmatprep.subr.mxu0 0.0
    %2280 = vmatpush1.msra.mxu0 %v2273
    %2281 = vmatprep.subr.mxu0 0.0
    %2282 = vmatpush1.msra.mxu0 %v2274
    %2283 = vmatprep.subr.mxu0 0.0
    %2284 = vmatpush1.msra.mxu0 0.0
    %2285 = vmatprep.subr.mxu0 0.0
    %2286 = vmatpush1.msra.mxu0 0.0
    %2287 = vmatprep.subr.mxu0 0.0
    %2288 = vmatpush1.msra.mxu0 0.0
    %2289 = vmatprep.subr.mxu0 0.0
    %2290 = vmatpush1.msra.mxu0 0.0
    %2291 = vmatprep.subr.mxu0 0.0
    %2292 = vmatpush1.msra.mxu0 0.0
    %2293 = vmatprep.subr.mxu0 0.0
    %2294 = vmatpush1.msra.mxu0 0.0
    %2295 = vmatprep.subr.mxu0 0.0
    %2296 = vmatpush1.msra.mxu0 0.0
    %2297 = vmatprep.subr.mxu0 0.0
    %2298 = vmatpush1.msra.mxu0 0.0
    %2299 = vmatprep.subr.mxu0 0.0
    %2300 = vmatpush1.msra.mxu0 0.0
    %2301 = vmatprep.subr.mxu0 0.0
    %2302 = vmatpush1.msra.mxu0 0.0
    %2303 = vmatprep.subr.mxu0 0.0
    %2304 = vmatpush1.msra.mxu0 0.0
    %2305 = vmatprep.subr.mxu0 0.0
    %2306 = vmatpush1.msra.mxu0 0.0
    %2307 = vmatprep.subr.mxu0 0.0
    %2308 = vmatpush1.msra.mxu0 0.0
    %2309 = vmatprep.subr.mxu0 0.0
    %2310 = vmatpush1.msra.mxu0 0.0
    %2311 = vmatprep.subr.mxu0 0.0
    %2312 = vmatpush1.msra.mxu0 0.0
    %2313 = vmatprep.subr.mxu0 0.0
    %2314 = vmatpush1.msra.mxu0 0.0
    %2315 = vmatprep.subr.mxu0 0.0
    %2316 = vmatpush1.msra.mxu0 0.0
    %2317 = vmatprep.subr.mxu0 0.0
    %2318 = vmatpush1.msra.mxu0 0.0
    %2319 = vmatprep.subr.mxu0 0.0
    %2320 = vmatpush1.msra.mxu0 0.0
    %2321 = vmatprep.subr.mxu0 0.0
    %2322 = vmatpush1.msra.mxu0 0.0
    %2323 = vmatprep.subr.mxu0 0.0
    %2324 = vmatpush1.msra.mxu0 0.0
    %2325 = vmatprep.subr.mxu0 0.0
    %2326 = vmatpush1.msra.mxu0 0.0
    %2327 = vmatprep.subr.mxu0 0.0
    %2328 = vmatpush1.msra.mxu0 0.0
    %2329 = vmatprep.subr.mxu0 0.0
    %2330 = vmatpush1.msra.mxu0 0.0
    %2331 = vmatprep.subr.mxu0 0.0
    %2332 = vmatpush1.msra.mxu0 0.0
    %2333 = vmatprep.subr.mxu0 0.0
    %2334 = vmatpush1.msra.mxu0 0.0
    %2335 = vmatprep.subr.mxu0 0.0
    %2336 = vmatpush1.msra.mxu0 0.0
    %2337 = vmatprep.subr.mxu0 0.0
    %2338 = vmatpush1.msra.mxu0 0.0
    %2339 = vmatprep.mubr.f32.mxu0 0.0
    %2340 = vmatmul.mubr.f32.gmra.mrb[0].mxu0 %v2081
    %v2341 = vpop.f32.mrb[0].mxu0
    %v2342 = vadd.f32 0.0, %v2341
    %v2343 = vpop.f32.mrb[0].mxu0
    %2344 = vdwg.mxu0
    %v2346 = vsel %vm55, %v2266, 0
    %2348 = vmatprep.subr.mxu0 0.0
    %2349 = vmatpush1.msra.mxu0 %v2267
    %2350 = vmatprep.subr.mxu0 0.0
    %2351 = vmatpush1.msra.mxu0 %v2268
    %2352 = vmatprep.subr.mxu0 0.0
    %2353 = vmatpush1.msra.mxu0 %v2269
    %2354 = vmatprep.subr.mxu0 0.0
    %2355 = vmatpush1.msra.mxu0 %v2270
    %2356 = vmatprep.subr.mxu0 0.0
    %2357 = vmatpush1.msra.mxu0 0.0
    %2358 = vmatprep.subr.mxu0 0.0
    %2359 = vmatpush1.msra.mxu0 0.0
    %2360 = vmatprep.subr.mxu0 0.0
    %2361 = vmatpush1.msra.mxu0 0.0
    %2362 = vmatprep.subr.mxu0 0.0
    %2363 = vmatpush1.msra.mxu0 0.0
    %2364 = vmatprep.subr.mxu0 0.0
    %2365 = vmatpush1.msra.mxu0 0.0
    %2366 = vmatprep.subr.mxu0 0.0
    %2367 = vmatpush1.msra.mxu0 0.0
    %2368 = vmatprep.subr.mxu0 0.0
    %2369 = vmatpush1.msra.mxu0 0.0
    %2370 = vmatprep.subr.mxu0 0.0
    %2371 = vmatpush1.msra.mxu0 0.0
    %2372 = vmatprep.subr.mxu0 0.0
    %2373 = vmatpush1.msra.mxu0 0.0
    %2374 = vmatprep.subr.mxu0 0.0
    %2375 = vmatpush1.msra.mxu0 0.0
    %2376 = vmatprep.subr.mxu0 0.0
    %2377 = vmatpush1.msra.mxu0 0.0
    %2378 = vmatprep.subr.mxu0 0.0
    %2379 = vmatpush1.msra.mxu0 0.0
    %2380 = vmatprep.subr.mxu0 0.0
    %2381 = vmatpush1.msra.mxu0 0.0
    %2382 = vmatprep.subr.mxu0 0.0
    %2383 = vmatpush1.msra.mxu0 0.0
    %2384 = vmatprep.subr.mxu0 0.0
    %2385 = vmatpush1.msra.mxu0 0.0
    %2386 = vmatprep.subr.mxu0 0.0
    %2387 = vmatpush1.msra.mxu0 0.0
    %2388 = vmatprep.subr.mxu0 0.0
    %2389 = vmatpush1.msra.mxu0 0.0
    %2390 = vmatprep.subr.mxu0 0.0
    %2391 = vmatpush1.msra.mxu0 0.0
    %2392 = vmatprep.subr.mxu0 0.0
    %2393 = vmatpush1.msra.mxu0 0.0
    %2394 = vmatprep.subr.mxu0 0.0
    %2395 = vmatpush1.msra.mxu0 0.0
    %2396 = vmatprep.subr.mxu0 0.0
    %2397 = vmatpush1.msra.mxu0 0.0
    %2398 = vmatprep.subr.mxu0 0.0
    %2399 = vmatpush1.msra.mxu0 0.0
    %2400 = vmatprep.subr.mxu0 0.0
    %2401 = vmatpush1.msra.mxu0 0.0
    %2402 = vmatprep.subr.mxu0 0.0
    %2403 = vmatpush1.msra.mxu0 0.0
    %2404 = vmatprep.subr.mxu0 0.0
    %2405 = vmatpush1.msra.mxu0 0.0
    %2406 = vmatprep.subr.mxu0 0.0
    %2407 = vmatpush1.msra.mxu0 0.0
    %2408 = vmatprep.subr.mxu0 0.0
    %2409 = vmatpush1.msra.mxu0 0.0
    %2410 = vmatprep.subr.mxu0 0.0
    %2411 = vmatpush1.msra.mxu0 0.0
    %2412 = vmatprep.mubr.f32.mxu0 0.0
    %2413 = vmatmul.mubr.f32.gmra.mrb[0].mxu0 %v2346
    %v2414 = vpop.f32.mrb[0].mxu0
    %v2415 = vadd.f32 %v2342, %v2414
    %v2416 = vpop.f32.mrb[0].mxu0
    %2417 = vdwg.mxu0
    %v2418 = vld [vmem:[%s8] sm:$0x1]
    %v2420 = vlaneseq
    %v2421 = vshrl.u32 %v2420, 7
    %v2422 = vsub.s32 0, %v2421
    %v2423 = vrot.slane %v2418, %v2422
    %v2425 = vadd.f32 %v2415, %v2423
    %v2426 = vxor.u32 %v2425, 2147483648
    %v2427 = vmul.f32 %v2426, 1.442695
    %v2428 = vpow.pop %v2427
    %v2429 = vadd.f32 %v2428, 1.0
    %v2430 = vrcp.pop %v2429
    %v2431 = vmul.f32 1.0, %v2430
    %v2432 = vtanh.pop %v2425
    %v2433 = vmul.f32 %v2431, %v2060
    %2435 = vrot.lane.b32.xlu0 %v2432, 64
    %v2436 = vpop.permute.xlu0 %2435
    %v2438 = vmul.f32 %v2431, %v2436
    %2440 = vrot.lane.b32.xlu0 %v2438, 32
    %v2441 = vpop.permute.xlu0 %2440
    %v2443 = vadd.f32 %v2433, %v2441
    %v2444 = vtanh.pop %v2443
    %2446 = vrot.lane.b32.xlu0 %v2444, 64
    %v2447 = vpop.permute.xlu0 %2446
    %v2449 = vmul.f32 %v2431, %v2447
    %v2450 = vld [vmem:[%s10] sm:$0xff]
    %v2451 = vld [vmem:[%s10 + $0x8] sm:$0xff]
    %v2452 = vld [vmem:[%s10 + $0x10] sm:$0xff]
    %v2453 = vld [vmem:[%s10 + $0x18] sm:$0xff]
    %v2454 = vld [vmem:[%s11] sm:$0x1]
    %v2456 = vlaneseq
    %v2457 = vshrl.u32 %v2456, 7
    %v2458 = vsub.s32 0, %v2457
    %v2459 = vrot.slane %v2454, %v2458
    %2462 = vrot.lane.b32.xlu0 %v2449, 32
    %v2463 = vpop.permute.xlu0 %2462
    %v2464 = vsel %vm55, %v2463, 0
    %2466 = vmatprep.subr.mxu0 0.0
    %2467 = vmatpush1.msra.mxu0 %v2450
    %2468 = vmatprep.subr.mxu0 0.0
    %2469 = vmatpush1.msra.mxu0 %v2451
    %2470 = vmatprep.subr.mxu0 0.0
    %2471 = vmatpush1.msra.mxu0 %v2452
    %2472 = vmatprep.subr.mxu0 0.0
    %2473 = vmatpush1.msra.mxu0 %v2453
    %2474 = vmatprep.subr.mxu0 0.0
    %2475 = vmatpush1.msra.mxu0 0.0
    %2476 = vmatprep.subr.mxu0 0.0
    %2477 = vmatpush1.msra.mxu0 0.0
    %2478 = vmatprep.subr.mxu0 0.0
    %2479 = vmatpush1.msra.mxu0 0.0
    %2480 = vmatprep.subr.mxu0 0.0
    %2481 = vmatpush1.msra.mxu0 0.0
    %2482 = vmatprep.subr.mxu0 0.0
    %2483 = vmatpush1.msra.mxu0 0.0
    %2484 = vmatprep.subr.mxu0 0.0
    %2485 = vmatpush1.msra.mxu0 0.0
    %2486 = vmatprep.subr.mxu0 0.0
    %2487 = vmatpush1.msra.mxu0 0.0
    %2488 = vmatprep.subr.mxu0 0.0
    %2489 = vmatpush1.msra.mxu0 0.0
    %2490 = vmatprep.subr.mxu0 0.0
    %2491 = vmatpush1.msra.mxu0 0.0
    %2492 = vmatprep.subr.mxu0 0.0
    %2493 = vmatpush1.msra.mxu0 0.0
    %2494 = vmatprep.subr.mxu0 0.0
    %2495 = vmatpush1.msra.mxu0 0.0
    %2496 = vmatprep.subr.mxu0 0.0
    %2497 = vmatpush1.msra.mxu0 0.0
    %2498 = vmatprep.subr.mxu0 0.0
    %2499 = vmatpush1.msra.mxu0 0.0
    %2500 = vmatprep.subr.mxu0 0.0
    %2501 = vmatpush1.msra.mxu0 0.0
    %2502 = vmatprep.subr.mxu0 0.0
    %2503 = vmatpush1.msra.mxu0 0.0
    %2504 = vmatprep.subr.mxu0 0.0
    %2505 = vmatpush1.msra.mxu0 0.0
    %2506 = vmatprep.subr.mxu0 0.0
    %2507 = vmatpush1.msra.mxu0 0.0
    %2508 = vmatprep.subr.mxu0 0.0
    %2509 = vmatpush1.msra.mxu0 0.0
    %2510 = vmatprep.subr.mxu0 0.0
    %2511 = vmatpush1.msra.mxu0 0.0
    %2512 = vmatprep.subr.mxu0 0.0
    %2513 = vmatpush1.msra.mxu0 0.0
    %2514 = vmatprep.subr.mxu0 0.0
    %2515 = vmatpush1.msra.mxu0 0.0
    %2516 = vmatprep.subr.mxu0 0.0
    %2517 = vmatpush1.msra.mxu0 0.0
    %2518 = vmatprep.subr.mxu0 0.0
    %2519 = vmatpush1.msra.mxu0 0.0
    %2520 = vmatprep.subr.mxu0 0.0
    %2521 = vmatpush1.msra.mxu0 0.0
    %2522 = vmatprep.subr.mxu0 0.0
    %2523 = vmatpush1.msra.mxu0 0.0
    %2524 = vmatprep.subr.mxu0 0.0
    %2525 = vmatpush1.msra.mxu0 0.0
    %2526 = vmatprep.subr.mxu0 0.0
    %2527 = vmatpush1.msra.mxu0 0.0
    %2528 = vmatprep.subr.mxu0 0.0
    %2529 = vmatpush1.msra.mxu0 0.0
    %2530 = vmatprep.mubr.f32.mxu0 0.0
    %2531 = vmatmul.mubr.f32.gmra.mrb[0].mxu0 %v2464
    %v2532 = vpop.f32.mrb[0].mxu0
    %v2533 = vadd.f32 %v2459, %v2532
    %v2534 = vpop.f32.mrb[0].mxu0
    %2535 = vdwg.mxu0
    %s2536 = scalar_lea.vmem [#allocation4], 32
    %2537 = vst.msk [vmem:[%s2536] sm:$0xff] %vm55, %v2533
    %v2538 = vsel %vm55, %v2533, -inf
    %2539 = vmax.xlane.f32.xlu0 %v2538
    %v2540 = vpop.xlane.xlu0 %2539
    %vm2541 = vcmp.eq.f32.partialorder %v2533, %v2540
    %v2542 = vsel %vm2541, %v1388, 32
    %v2543 = vsel %vm55, %v2542, 2147483647
    %v2544 = vand.u32 %v2543, 65535
    %v2545 = vshra.s32 %v2543, 16
    %v2546 = vcvt.s32.f32 %v2544
    %v2547 = vcvt.s32.f32 %v2545
    %2548 = vmin.xlane.f32.xlu0 %v2547
    %v2549 = vpop.xlane.xlu0 %2548
    %vm2550 = vcmp.eq.f32.partialorder %v2547, %v2549
    %v2551 = vsel %vm2550, %v2546, inf
    %2552 = vmin.xlane.f32.xlu0 %v2551
    %v2553 = vpop.xlane.xlu0 %2552
    %v2554 = vcvt.f32.s32 %v2553
    %v2555 = vcvt.f32.s32 %v2549
    %v2556 = vshll.u32 %v2555, 16
    %v2557 = vadd.s32 %v2556, %v2554
    %vm2558 = vcmp.eq.s32.totalorder %v1388, %v2557
    %v2559 = vsel %vm2558, 1, 0
    %v2560 = vcvt.s32.f32 %v2559
    %v2561 = vld [vmem:[%s9] sm:$0xff]
    %v2562 = vld [vmem:[%s9 + $0x8] sm:$0xff]
    %v2563 = vld [vmem:[%s9 + $0x10] sm:$0xff]
    %v2564 = vld [vmem:[%s9 + $0x18] sm:$0xff]
    %v2566 = vsel %vm55, %v2560, 0
    %2568 = vmatprep.subr.mxu0 0.0
    %2569 = vmatpush1.msra.mxu0 %v2561
    %2570 = vmatprep.subr.mxu0 0.0
    %2571 = vmatpush1.msra.mxu0 %v2562
    %2572 = vmatprep.subr.mxu0 0.0
    %2573 = vmatpush1.msra.mxu0 %v2563
    %2574 = vmatprep.subr.mxu0 0.0
    %2575 = vmatpush1.msra.mxu0 %v2564
    %2576 = vmatprep.subr.mxu0 0.0
    %2577 = vmatpush1.msra.mxu0 0.0
    %2578 = vmatprep.subr.mxu0 0.0
    %2579 = vmatpush1.msra.mxu0 0.0
    %2580 = vmatprep.subr.mxu0 0.0
    %2581 = vmatpush1.msra.mxu0 0.0
    %2582 = vmatprep.subr.mxu0 0.0
    %2583 = vmatpush1.msra.mxu0 0.0
    %2584 = vmatprep.subr.mxu0 0.0
    %2585 = vmatpush1.msra.mxu0 0.0
    %2586 = vmatprep.subr.mxu0 0.0
    %2587 = vmatpush1.msra.mxu0 0.0
    %2588 = vmatprep.subr.mxu0 0.0
    %2589 = vmatpush1.msra.mxu0 0.0
    %2590 = vmatprep.subr.mxu0 0.0
    %2591 = vmatpush1.msra.mxu0 0.0
    %2592 = vmatprep.subr.mxu0 0.0
    %2593 = vmatpush1.msra.mxu0 0.0
    %2594 = vmatprep.subr.mxu0 0.0
    %2595 = vmatpush1.msra.mxu0 0.0
    %2596 = vmatprep.subr.mxu0 0.0
    %2597 = vmatpush1.msra.mxu0 0.0
    %2598 = vmatprep.subr.mxu0 0.0
    %2599 = vmatpush1.msra.mxu0 0.0
    %2600 = vmatprep.subr.mxu0 0.0
    %2601 = vmatpush1.msra.mxu0 0.0
    %2602 = vmatprep.subr.mxu0 0.0
    %2603 = vmatpush1.msra.mxu0 0.0
    %2604 = vmatprep.subr.mxu0 0.0
    %2605 = vmatpush1.msra.mxu0 0.0
    %2606 = vmatprep.subr.mxu0 0.0
    %2607 = vmatpush1.msra.mxu0 0.0
    %2608 = vmatprep.subr.mxu0 0.0
    %2609 = vmatpush1.msra.mxu0 0.0
    %2610 = vmatprep.subr.mxu0 0.0
    %2611 = vmatpush1.msra.mxu0 0.0
    %2612 = vmatprep.subr.mxu0 0.0
    %2613 = vmatpush1.msra.mxu0 0.0
    %2614 = vmatprep.subr.mxu0 0.0
    %2615 = vmatpush1.msra.mxu0 0.0
    %2616 = vmatprep.subr.mxu0 0.0
    %2617 = vmatpush1.msra.mxu0 0.0
    %2618 = vmatprep.subr.mxu0 0.0
    %2619 = vmatpush1.msra.mxu0 0.0
    %2620 = vmatprep.subr.mxu0 0.0
    %2621 = vmatpush1.msra.mxu0 0.0
    %2622 = vmatprep.subr.mxu0 0.0
    %2623 = vmatpush1.msra.mxu0 0.0
    %2624 = vmatprep.subr.mxu0 0.0
    %2625 = vmatpush1.msra.mxu0 0.0
    %2626 = vmatprep.subr.mxu0 0.0
    %2627 = vmatpush1.msra.mxu0 0.0
    %2628 = vmatprep.subr.mxu0 0.0
    %2629 = vmatpush1.msra.mxu0 0.0
    %2630 = vmatprep.subr.mxu0 0.0
    %2631 = vmatpush1.msra.mxu0 0.0
    %2632 = vmatprep.mubr.f32.mxu0 0.0
    %2633 = vmatmul.mubr.f32.gmra.mrb[0].mxu0 %v2566
    %v2634 = vpop.f32.mrb[0].mxu0
    %v2635 = vadd.f32 0.0, %v2634
    %v2636 = vpop.f32.mrb[0].mxu0
    %2637 = vdwg.mxu0
    %s2638 = scalar_lea.vmem %s2, 32
    %v2639 = vld [vmem:[%s2638] sm:$0xff]
    %s2640 = sld [smem:[#allocation3 + $0x4]]
    %p2641 = scmp.gt.s32.totalorder %s2640, 0
    %s2642 = scalar_select %p2641, 1, 0
    %s2643 = scvt.s32.f32 %s2642
    %v2644 = vstv %s2643
    %v2645 = vmul.f32 %v2644, %v2639
    %s2646 = ssub.f32 1.0, %s2643
    %v2647 = vstv %s2646
    %v2648 = vmul.f32 %v2647, %v2635
    %v2649 = vadd.f32 %v2645, %v2648
    %v2650 = vld [vmem:[%s6] sm:$0xff]
    %v2651 = vld [vmem:[%s6 + $0x8] sm:$0xff]
    %v2652 = vld [vmem:[%s6 + $0x10] sm:$0xff]
    %v2653 = vld [vmem:[%s6 + $0x18] sm:$0xff]
    %v2654 = vld [vmem:[%s7] sm:$0xff]
    %v2655 = vld [vmem:[%s7 + $0x8] sm:$0xff]
    %v2656 = vld [vmem:[%s7 + $0x10] sm:$0xff]
    %v2657 = vld [vmem:[%s7 + $0x18] sm:$0xff]
    %2658 = vmatprep.subr.mxu0 0.0
    %2659 = vmatpush1.msra.mxu0 %v2654
    %2660 = vmatprep.subr.mxu0 0.0
    %2661 = vmatpush1.msra.mxu0 %v2655
    %2662 = vmatprep.subr.mxu0 0.0
    %2663 = vmatpush1.msra.mxu0 %v2656
    %2664 = vmatprep.subr.mxu0 0.0
    %2665 = vmatpush1.msra.mxu0 %v2657
    %2666 = vmatprep.subr.mxu0 0.0
    %2667 = vmatpush1.msra.mxu0 0.0
    %2668 = vmatprep.subr.mxu0 0.0
    %2669 = vmatpush1.msra.mxu0 0.0
    %2670 = vmatprep.subr.mxu0 0.0
    %2671 = vmatpush1.msra.mxu0 0.0
    %2672 = vmatprep.subr.mxu0 0.0
    %2673 = vmatpush1.msra.mxu0 0.0
    %2674 = vmatprep.subr.mxu0 0.0
    %2675 = vmatpush1.msra.mxu0 0.0
    %2676 = vmatprep.subr.mxu0 0.0
    %2677 = vmatpush1.msra.mxu0 0.0
    %2678 = vmatprep.subr.mxu0 0.0
    %2679 = vmatpush1.msra.mxu0 0.0
    %2680 = vmatprep.subr.mxu0 0.0
    %2681 = vmatpush1.msra.mxu0 0.0
    %2682 = vmatprep.subr.mxu0 0.0
    %2683 = vmatpush1.msra.mxu0 0.0
    %2684 = vmatprep.subr.mxu0 0.0
    %2685 = vmatpush1.msra.mxu0 0.0
    %2686 = vmatprep.subr.mxu0 0.0
    %2687 = vmatpush1.msra.mxu0 0.0
    %2688 = vmatprep.subr.mxu0 0.0
    %2689 = vmatpush1.msra.mxu0 0.0
    %2690 = vmatprep.subr.mxu0 0.0
    %2691 = vmatpush1.msra.mxu0 0.0
    %2692 = vmatprep.subr.mxu0 0.0
    %2693 = vmatpush1.msra.mxu0 0.0
    %2694 = vmatprep.subr.mxu0 0.0
    %2695 = vmatpush1.msra.mxu0 0.0
    %2696 = vmatprep.subr.mxu0 0.0
    %2697 = vmatpush1.msra.mxu0 0.0
    %2698 = vmatprep.subr.mxu0 0.0
    %2699 = vmatpush1.msra.mxu0 0.0
    %2700 = vmatprep.subr.mxu0 0.0
    %2701 = vmatpush1.msra.mxu0 0.0
    %2702 = vmatprep.subr.mxu0 0.0
    %2703 = vmatpush1.msra.mxu0 0.0
    %2704 = vmatprep.subr.mxu0 0.0
    %2705 = vmatpush1.msra.mxu0 0.0
    %2706 = vmatprep.subr.mxu0 0.0
    %2707 = vmatpush1.msra.mxu0 0.0
    %2708 = vmatprep.subr.mxu0 0.0
    %2709 = vmatpush1.msra.mxu0 0.0
    %2710 = vmatprep.subr.mxu0 0.0
    %2711 = vmatpush1.msra.mxu0 0.0
    %2712 = vmatprep.subr.mxu0 0.0
    %2713 = vmatpush1.msra.mxu0 0.0
    %2714 = vmatprep.subr.mxu0 0.0
    %2715 = vmatpush1.msra.mxu0 0.0
    %2716 = vmatprep.subr.mxu0 0.0
    %2717 = vmatpush1.msra.mxu0 0.0
    %2718 = vmatprep.subr.mxu0 0.0
    %2719 = vmatpush1.msra.mxu0 0.0
    %2720 = vmatprep.subr.mxu0 0.0
    %2721 = vmatpush1.msra.mxu0 0.0
    %2722 = vmatprep.mubr.f32.mxu0 0.0
    %2723 = vmatmul.mubr.f32.gmra.mrb[0].mxu0 %v2464
    %v2724 = vpop.f32.mrb[0].mxu0
    %v2725 = vadd.f32 0.0, %v2724
    %v2726 = vpop.f32.mrb[0].mxu0
    %2727 = vdwg.mxu0
    %v2729 = vsel %vm55, %v2649, 0
    %2731 = vmatprep.subr.mxu0 0.0
    %2732 = vmatpush1.msra.mxu0 %v2650
    %2733 = vmatprep.subr.mxu0 0.0
    %2734 = vmatpush1.msra.mxu0 %v2651
    %2735 = vmatprep.subr.mxu0 0.0
    %2736 = vmatpush1.msra.mxu0 %v2652
    %2737 = vmatprep.subr.mxu0 0.0
    %2738 = vmatpush1.msra.mxu0 %v2653
    %2739 = vmatprep.subr.mxu0 0.0
    %2740 = vmatpush1.msra.mxu0 0.0
    %2741 = vmatprep.subr.mxu0 0.0
    %2742 = vmatpush1.msra.mxu0 0.0
    %2743 = vmatprep.subr.mxu0 0.0
    %2744 = vmatpush1.msra.mxu0 0.0
    %2745 = vmatprep.subr.mxu0 0.0
    %2746 = vmatpush1.msra.mxu0 0.0
    %2747 = vmatprep.subr.mxu0 0.0
    %2748 = vmatpush1.msra.mxu0 0.0
    %2749 = vmatprep.subr.mxu0 0.0
    %2750 = vmatpush1.msra.mxu0 0.0
    %2751 = vmatprep.subr.mxu0 0.0
    %2752 = vmatpush1.msra.mxu0 0.0
    %2753 = vmatprep.subr.mxu0 0.0
    %2754 = vmatpush1.msra.mxu0 0.0
    %2755 = vmatprep.subr.mxu0 0.0
    %2756 = vmatpush1.msra.mxu0 0.0
    %2757 = vmatprep.subr.mxu0 0.0
    %2758 = vmatpush1.msra.mxu0 0.0
    %2759 = vmatprep.subr.mxu0 0.0
    %2760 = vmatpush1.msra.mxu0 0.0
    %2761 = vmatprep.subr.mxu0 0.0
    %2762 = vmatpush1.msra.mxu0 0.0
    %2763 = vmatprep.subr.mxu0 0.0
    %2764 = vmatpush1.msra.mxu0 0.0
    %2765 = vmatprep.subr.mxu0 0.0
    %2766 = vmatpush1.msra.mxu0 0.0
    %2767 = vmatprep.subr.mxu0 0.0
    %2768 = vmatpush1.msra.mxu0 0.0
    %2769 = vmatprep.subr.mxu0 0.0
    %2770 = vmatpush1.msra.mxu0 0.0
    %2771 = vmatprep.subr.mxu0 0.0
    %2772 = vmatpush1.msra.mxu0 0.0
    %2773 = vmatprep.subr.mxu0 0.0
    %2774 = vmatpush1.msra.mxu0 0.0
    %2775 = vmatprep.subr.mxu0 0.0
    %2776 = vmatpush1.msra.mxu0 0.0
    %2777 = vmatprep.subr.mxu0 0.0
    %2778 = vmatpush1.msra.mxu0 0.0
    %2779 = vmatprep.subr.mxu0 0.0
    %2780 = vmatpush1.msra.mxu0 0.0
    %2781 = vmatprep.subr.mxu0 0.0
    %2782 = vmatpush1.msra.mxu0 0.0
    %2783 = vmatprep.subr.mxu0 0.0
    %2784 = vmatpush1.msra.mxu0 0.0
    %2785 = vmatprep.subr.mxu0 0.0
    %2786 = vmatpush1.msra.mxu0 0.0
    %2787 = vmatprep.subr.mxu0 0.0
    %2788 = vmatpush1.msra.mxu0 0.0
    %2789 = vmatprep.subr.mxu0 0.0
    %2790 = vmatpush1.msra.mxu0 0.0
    %2791 = vmatprep.subr.mxu0 0.0
    %2792 = vmatpush1.msra.mxu0 0.0
    %2793 = vmatprep.subr.mxu0 0.0
    %2794 = vmatpush1.msra.mxu0 0.0
    %2795 = vmatprep.mubr.f32.mxu0 0.0
    %2796 = vmatmul.mubr.f32.gmra.mrb[0].mxu0 %v2729
    %v2797 = vpop.f32.mrb[0].mxu0
    %v2798 = vadd.f32 %v2725, %v2797
    %v2799 = vpop.f32.mrb[0].mxu0
    %2800 = vdwg.mxu0
    %v2801 = vld [vmem:[%s8] sm:$0x1]
    %v2803 = vlaneseq
    %v2804 = vshrl.u32 %v2803, 7
    %v2805 = vsub.s32 0, %v2804
    %v2806 = vrot.slane %v2801, %v2805
    %v2808 = vadd.f32 %v2798, %v2806
    %v2809 = vxor.u32 %v2808, 2147483648
    %v2810 = vmul.f32 %v2809, 1.442695
    %v2811 = vpow.pop %v2810
    %v2812 = vadd.f32 %v2811, 1.0
    %v2813 = vrcp.pop %v2812
    %v2814 = vmul.f32 1.0, %v2813
    %v2815 = vtanh.pop %v2808
    %v2816 = vmul.f32 %v2814, %v2443
    %2818 = vrot.lane.b32.xlu0 %v2815, 64
    %v2819 = vpop.permute.xlu0 %2818
    %v2821 = vmul.f32 %v2814, %v2819
    %2823 = vrot.lane.b32.xlu0 %v2821, 32
    %v2824 = vpop.permute.xlu0 %2823
    %v2826 = vadd.f32 %v2816, %v2824
    %v2827 = vtanh.pop %v2826
    %2829 = vrot.lane.b32.xlu0 %v2827, 64
    %v2830 = vpop.permute.xlu0 %2829
    %v2832 = vmul.f32 %v2814, %v2830
    %v2833 = vld [vmem:[%s10] sm:$0xff]
    %v2834 = vld [vmem:[%s10 + $0x8] sm:$0xff]
    %v2835 = vld [vmem:[%s10 + $0x10] sm:$0xff]
    %v2836 = vld [vmem:[%s10 + $0x18] sm:$0xff]
    %v2837 = vld [vmem:[%s11] sm:$0x1]
    %v2839 = vlaneseq
    %v2840 = vshrl.u32 %v2839, 7
    %v2841 = vsub.s32 0, %v2840
    %v2842 = vrot.slane %v2837, %v2841
    %2845 = vrot.lane.b32.xlu0 %v2832, 32
    %v2846 = vpop.permute.xlu0 %2845
    %v2847 = vsel %vm55, %v2846, 0
    %2849 = vmatprep.subr.mxu0 0.0
    %2850 = vmatpush1.msra.mxu0 %v2833
    %2851 = vmatprep.subr.mxu0 0.0
    %2852 = vmatpush1.msra.mxu0 %v2834
    %2853 = vmatprep.subr.mxu0 0.0
    %2854 = vmatpush1.msra.mxu0 %v2835
    %2855 = vmatprep.subr.mxu0 0.0
    %2856 = vmatpush1.msra.mxu0 %v2836
    %2857 = vmatprep.subr.mxu0 0.0
    %2858 = vmatpush1.msra.mxu0 0.0
    %2859 = vmatprep.subr.mxu0 0.0
    %2860 = vmatpush1.msra.mxu0 0.0
    %2861 = vmatprep.subr.mxu0 0.0
    %2862 = vmatpush1.msra.mxu0 0.0
    %2863 = vmatprep.subr.mxu0 0.0
    %2864 = vmatpush1.msra.mxu0 0.0
    %2865 = vmatprep.subr.mxu0 0.0
    %2866 = vmatpush1.msra.mxu0 0.0
    %2867 = vmatprep.subr.mxu0 0.0
    %2868 = vmatpush1.msra.mxu0 0.0
    %2869 = vmatprep.subr.mxu0 0.0
    %2870 = vmatpush1.msra.mxu0 0.0
    %2871 = vmatprep.subr.mxu0 0.0
    %2872 = vmatpush1.msra.mxu0 0.0
    %2873 = vmatprep.subr.mxu0 0.0
    %2874 = vmatpush1.msra.mxu0 0.0
    %2875 = vmatprep.subr.mxu0 0.0
    %2876 = vmatpush1.msra.mxu0 0.0
    %2877 = vmatprep.subr.mxu0 0.0
    %2878 = vmatpush1.msra.mxu0 0.0
    %2879 = vmatprep.subr.mxu0 0.0
    %2880 = vmatpush1.msra.mxu0 0.0
    %2881 = vmatprep.subr.mxu0 0.0
    %2882 = vmatpush1.msra.mxu0 0.0
    %2883 = vmatprep.subr.mxu0 0.0
    %2884 = vmatpush1.msra.mxu0 0.0
    %2885 = vmatprep.subr.mxu0 0.0
    %2886 = vmatpush1.msra.mxu0 0.0
    %2887 = vmatprep.subr.mxu0 0.0
    %2888 = vmatpush1.msra.mxu0 0.0
    %2889 = vmatprep.subr.mxu0 0.0
    %2890 = vmatpush1.msra.mxu0 0.0
    %2891 = vmatprep.subr.mxu0 0.0
    %2892 = vmatpush1.msra.mxu0 0.0
    %2893 = vmatprep.subr.mxu0 0.0
    %2894 = vmatpush1.msra.mxu0 0.0
    %2895 = vmatprep.subr.mxu0 0.0
    %2896 = vmatpush1.msra.mxu0 0.0
    %2897 = vmatprep.subr.mxu0 0.0
    %2898 = vmatpush1.msra.mxu0 0.0
    %2899 = vmatprep.subr.mxu0 0.0
    %2900 = vmatpush1.msra.mxu0 0.0
    %2901 = vmatprep.subr.mxu0 0.0
    %2902 = vmatpush1.msra.mxu0 0.0
    %2903 = vmatprep.subr.mxu0 0.0
    %2904 = vmatpush1.msra.mxu0 0.0
    %2905 = vmatprep.subr.mxu0 0.0
    %2906 = vmatpush1.msra.mxu0 0.0
    %2907 = vmatprep.subr.mxu0 0.0
    %2908 = vmatpush1.msra.mxu0 0.0
    %2909 = vmatprep.subr.mxu0 0.0
    %2910 = vmatpush1.msra.mxu0 0.0
    %2911 = vmatprep.subr.mxu0 0.0
    %2912 = vmatpush1.msra.mxu0 0.0
    %2913 = vmatprep.mubr.f32.mxu0 0.0
    %2914 = vmatmul.mubr.f32.gmra.mrb[0].mxu0 %v2847
    %v2915 = vpop.f32.mrb[0].mxu0
    %v2916 = vadd.f32 %v2842, %v2915
    %v2917 = vpop.f32.mrb[0].mxu0
    %2918 = vdwg.mxu0
    %s2919 = scalar_lea.vmem [#allocation4], 40
    %2920 = vst.msk [vmem:[%s2919] sm:$0xff] %vm55, %v2916
    %v2921 = vsel %vm55, %v2916, -inf
    %2922 = vmax.xlane.f32.xlu0 %v2921
    %v2923 = vpop.xlane.xlu0 %2922
    %vm2924 = vcmp.eq.f32.partialorder %v2916, %v2923
    %v2925 = vsel %vm2924, %v1388, 32
    %v2926 = vsel %vm55, %v2925, 2147483647
    %v2927 = vand.u32 %v2926, 65535
    %v2928 = vshra.s32 %v2926, 16
    %v2929 = vcvt.s32.f32 %v2927
    %v2930 = vcvt.s32.f32 %v2928
    %2931 = vmin.xlane.f32.xlu0 %v2930
    %v2932 = vpop.xlane.xlu0 %2931
    %vm2933 = vcmp.eq.f32.partialorder %v2930, %v2932
    %v2934 = vsel %vm2933, %v2929, inf
    %2935 = vmin.xlane.f32.xlu0 %v2934
    %v2936 = vpop.xlane.xlu0 %2935
    %v2937 = vcvt.f32.s32 %v2936
    %v2938 = vcvt.f32.s32 %v2932
    %v2939 = vshll.u32 %v2938, 16
    %v2940 = vadd.s32 %v2939, %v2937
    %vm2941 = vcmp.eq.s32.totalorder %v1388, %v2940
    %v2942 = vsel %vm2941, 1, 0
    %v2943 = vcvt.s32.f32 %v2942
    %v2944 = vld [vmem:[%s9] sm:$0xff]
    %v2945 = vld [vmem:[%s9 + $0x8] sm:$0xff]
    %v2946 = vld [vmem:[%s9 + $0x10] sm:$0xff]
    %v2947 = vld [vmem:[%s9 + $0x18] sm:$0xff]
    %v2949 = vsel %vm55, %v2943, 0
    %2951 = vmatprep.subr.mxu0 0.0
    %2952 = vmatpush1.msra.mxu0 %v2944
    %2953 = vmatprep.subr.mxu0 0.0
    %2954 = vmatpush1.msra.mxu0 %v2945
    %2955 = vmatprep.subr.mxu0 0.0
    %2956 = vmatpush1.msra.mxu0 %v2946
    %2957 = vmatprep.subr.mxu0 0.0
    %2958 = vmatpush1.msra.mxu0 %v2947
    %2959 = vmatprep.subr.mxu0 0.0
    %2960 = vmatpush1.msra.mxu0 0.0
    %2961 = vmatprep.subr.mxu0 0.0
    %2962 = vmatpush1.msra.mxu0 0.0
    %2963 = vmatprep.subr.mxu0 0.0
    %2964 = vmatpush1.msra.mxu0 0.0
    %2965 = vmatprep.subr.mxu0 0.0
    %2966 = vmatpush1.msra.mxu0 0.0
    %2967 = vmatprep.subr.mxu0 0.0
    %2968 = vmatpush1.msra.mxu0 0.0
    %2969 = vmatprep.subr.mxu0 0.0
    %2970 = vmatpush1.msra.mxu0 0.0
    %2971 = vmatprep.subr.mxu0 0.0
    %2972 = vmatpush1.msra.mxu0 0.0
    %2973 = vmatprep.subr.mxu0 0.0
    %2974 = vmatpush1.msra.mxu0 0.0
    %2975 = vmatprep.subr.mxu0 0.0
    %2976 = vmatpush1.msra.mxu0 0.0
    %2977 = vmatprep.subr.mxu0 0.0
    %2978 = vmatpush1.msra.mxu0 0.0
    %2979 = vmatprep.subr.mxu0 0.0
    %2980 = vmatpush1.msra.mxu0 0.0
    %2981 = vmatprep.subr.mxu0 0.0
    %2982 = vmatpush1.msra.mxu0 0.0
    %2983 = vmatprep.subr.mxu0 0.0
    %2984 = vmatpush1.msra.mxu0 0.0
    %2985 = vmatprep.subr.mxu0 0.0
    %2986 = vmatpush1.msra.mxu0 0.0
    %2987 = vmatprep.subr.mxu0 0.0
    %2988 = vmatpush1.msra.mxu0 0.0
    %2989 = vmatprep.subr.mxu0 0.0
    %2990 = vmatpush1.msra.mxu0 0.0
    %2991 = vmatprep.subr.mxu0 0.0
    %2992 = vmatpush1.msra.mxu0 0.0
    %2993 = vmatprep.subr.mxu0 0.0
    %2994 = vmatpush1.msra.mxu0 0.0
    %2995 = vmatprep.subr.mxu0 0.0
    %2996 = vmatpush1.msra.mxu0 0.0
    %2997 = vmatprep.subr.mxu0 0.0
    %2998 = vmatpush1.msra.mxu0 0.0
    %2999 = vmatprep.subr.mxu0 0.0
    %3000 = vmatpush1.msra.mxu0 0.0
    %3001 = vmatprep.subr.mxu0 0.0
    %3002 = vmatpush1.msra.mxu0 0.0
    %3003 = vmatprep.subr.mxu0 0.0
    %3004 = vmatpush1.msra.mxu0 0.0
    %3005 = vmatprep.subr.mxu0 0.0
    %3006 = vmatpush1.msra.mxu0 0.0
    %3007 = vmatprep.subr.mxu0 0.0
    %3008 = vmatpush1.msra.mxu0 0.0
    %3009 = vmatprep.subr.mxu0 0.0
    %3010 = vmatpush1.msra.mxu0 0.0
    %3011 = vmatprep.subr.mxu0 0.0
    %3012 = vmatpush1.msra.mxu0 0.0
    %3013 = vmatprep.subr.mxu0 0.0
    %3014 = vmatpush1.msra.mxu0 0.0
    %3015 = vmatprep.mubr.f32.mxu0 0.0
    %3016 = vmatmul.mubr.f32.gmra.mrb[0].mxu0 %v2949
    %v3017 = vpop.f32.mrb[0].mxu0
    %v3018 = vadd.f32 0.0, %v3017
    %v3019 = vpop.f32.mrb[0].mxu0
    %3020 = vdwg.mxu0
    %s3021 = scalar_lea.vmem %s2, 40
    %v3022 = vld [vmem:[%s3021] sm:$0xff]
    %s3023 = sld [smem:[#allocation3 + $0x5]]
    %p3024 = scmp.gt.s32.totalorder %s3023, 0
    %s3025 = scalar_select %p3024, 1, 0
    %s3026 = scvt.s32.f32 %s3025
    %v3027 = vstv %s3026
    %v3028 = vmul.f32 %v3027, %v3022
    %s3029 = ssub.f32 1.0, %s3026
    %v3030 = vstv %s3029
    %v3031 = vmul.f32 %v3030, %v3018
    %v3032 = vadd.f32 %v3028, %v3031
    %v3033 = vld [vmem:[%s6] sm:$0xff]
    %v3034 = vld [vmem:[%s6 + $0x8] sm:$0xff]
    %v3035 = vld [vmem:[%s6 + $0x10] sm:$0xff]
    %v3036 = vld [vmem:[%s6 + $0x18] sm:$0xff]
    %v3037 = vld [vmem:[%s7] sm:$0xff]
    %v3038 = vld [vmem:[%s7 + $0x8] sm:$0xff]
    %v3039 = vld [vmem:[%s7 + $0x10] sm:$0xff]
    %v3040 = vld [vmem:[%s7 + $0x18] sm:$0xff]
    %3041 = vmatprep.subr.mxu0 0.0
    %3042 = vmatpush1.msra.mxu0 %v3037
    %3043 = vmatprep.subr.mxu0 0.0
    %3044 = vmatpush1.msra.mxu0 %v3038
    %3045 = vmatprep.subr.mxu0 0.0
    %3046 = vmatpush1.msra.mxu0 %v3039
    %3047 = vmatprep.subr.mxu0 0.0
    %3048 = vmatpush1.msra.mxu0 %v3040
    %3049 = vmatprep.subr.mxu0 0.0
    %3050 = vmatpush1.msra.mxu0 0.0
    %3051 = vmatprep.subr.mxu0 0.0
    %3052 = vmatpush1.msra.mxu0 0.0
    %3053 = vmatprep.subr.mxu0 0.0
    %3054 = vmatpush1.msra.mxu0 0.0
    %3055 = vmatprep.subr.mxu0 0.0
    %3056 = vmatpush1.msra.mxu0 0.0
    %3057 = vmatprep.subr.mxu0 0.0
    %3058 = vmatpush1.msra.mxu0 0.0
    %3059 = vmatprep.subr.mxu0 0.0
    %3060 = vmatpush1.msra.mxu0 0.0
    %3061 = vmatprep.subr.mxu0 0.0
    %3062 = vmatpush1.msra.mxu0 0.0
    %3063 = vmatprep.subr.mxu0 0.0
    %3064 = vmatpush1.msra.mxu0 0.0
    %3065 = vmatprep.subr.mxu0 0.0
    %3066 = vmatpush1.msra.mxu0 0.0
    %3067 = vmatprep.subr.mxu0 0.0
    %3068 = vmatpush1.msra.mxu0 0.0
    %3069 = vmatprep.subr.mxu0 0.0
    %3070 = vmatpush1.msra.mxu0 0.0
    %3071 = vmatprep.subr.mxu0 0.0
    %3072 = vmatpush1.msra.mxu0 0.0
    %3073 = vmatprep.subr.mxu0 0.0
    %3074 = vmatpush1.msra.mxu0 0.0
    %3075 = vmatprep.subr.mxu0 0.0
    %3076 = vmatpush1.msra.mxu0 0.0
    %3077 = vmatprep.subr.mxu0 0.0
    %3078 = vmatpush1.msra.mxu0 0.0
    %3079 = vmatprep.subr.mxu0 0.0
    %3080 = vmatpush1.msra.mxu0 0.0
    %3081 = vmatprep.subr.mxu0 0.0
    %3082 = vmatpush1.msra.mxu0 0.0
    %3083 = vmatprep.subr.mxu0 0.0
    %3084 = vmatpush1.msra.mxu0 0.0
    %3085 = vmatprep.subr.mxu0 0.0
    %3086 = vmatpush1.msra.mxu0 0.0
    %3087 = vmatprep.subr.mxu0 0.0
    %3088 = vmatpush1.msra.mxu0 0.0
    %3089 = vmatprep.subr.mxu0 0.0
    %3090 = vmatpush1.msra.mxu0 0.0
    %3091 = vmatprep.subr.mxu0 0.0
    %3092 = vmatpush1.msra.mxu0 0.0
    %3093 = vmatprep.subr.mxu0 0.0
    %3094 = vmatpush1.msra.mxu0 0.0
    %3095 = vmatprep.subr.mxu0 0.0
    %3096 = vmatpush1.msra.mxu0 0.0
    %3097 = vmatprep.subr.mxu0 0.0
    %3098 = vmatpush1.msra.mxu0 0.0
    %3099 = vmatprep.subr.mxu0 0.0
    %3100 = vmatpush1.msra.mxu0 0.0
    %3101 = vmatprep.subr.mxu0 0.0
    %3102 = vmatpush1.msra.mxu0 0.0
    %3103 = vmatprep.subr.mxu0 0.0
    %3104 = vmatpush1.msra.mxu0 0.0
    %3105 = vmatprep.mubr.f32.mxu0 0.0
    %3106 = vmatmul.mubr.f32.gmra.mrb[0].mxu0 %v2847
    %v3107 = vpop.f32.mrb[0].mxu0
    %v3108 = vadd.f32 0.0, %v3107
    %v3109 = vpop.f32.mrb[0].mxu0
    %3110 = vdwg.mxu0
    %v3112 = vsel %vm55, %v3032, 0
    %3114 = vmatprep.subr.mxu0 0.0
    %3115 = vmatpush1.msra.mxu0 %v3033
    %3116 = vmatprep.subr.mxu0 0.0
    %3117 = vmatpush1.msra.mxu0 %v3034
    %3118 = vmatprep.subr.mxu0 0.0
    %3119 = vmatpush1.msra.mxu0 %v3035
    %3120 = vmatprep.subr.mxu0 0.0
    %3121 = vmatpush1.msra.mxu0 %v3036
    %3122 = vmatprep.subr.mxu0 0.0
    %3123 = vmatpush1.msra.mxu0 0.0
    %3124 = vmatprep.subr.mxu0 0.0
    %3125 = vmatpush1.msra.mxu0 0.0
    %3126 = vmatprep.subr.mxu0 0.0
    %3127 = vmatpush1.msra.mxu0 0.0
    %3128 = vmatprep.subr.mxu0 0.0
    %3129 = vmatpush1.msra.mxu0 0.0
    %3130 = vmatprep.subr.mxu0 0.0
    %3131 = vmatpush1.msra.mxu0 0.0
    %3132 = vmatprep.subr.mxu0 0.0
    %3133 = vmatpush1.msra.mxu0 0.0
    %3134 = vmatprep.subr.mxu0 0.0
    %3135 = vmatpush1.msra.mxu0 0.0
    %3136 = vmatprep.subr.mxu0 0.0
    %3137 = vmatpush1.msra.mxu0 0.0
    %3138 = vmatprep.subr.mxu0 0.0
    %3139 = vmatpush1.msra.mxu0 0.0
    %3140 = vmatprep.subr.mxu0 0.0
    %3141 = vmatpush1.msra.mxu0 0.0
    %3142 = vmatprep.subr.mxu0 0.0
    %3143 = vmatpush1.msra.mxu0 0.0
    %3144 = vmatprep.subr.mxu0 0.0
    %3145 = vmatpush1.msra.mxu0 0.0
    %3146 = vmatprep.subr.mxu0 0.0
    %3147 = vmatpush1.msra.mxu0 0.0
    %3148 = vmatprep.subr.mxu0 0.0
    %3149 = vmatpush1.msra.mxu0 0.0
    %3150 = vmatprep.subr.mxu0 0.0
    %3151 = vmatpush1.msra.mxu0 0.0
    %3152 = vmatprep.subr.mxu0 0.0
    %3153 = vmatpush1.msra.mxu0 0.0
    %3154 = vmatprep.subr.mxu0 0.0
    %3155 = vmatpush1.msra.mxu0 0.0
    %3156 = vmatprep.subr.mxu0 0.0
    %3157 = vmatpush1.msra.mxu0 0.0
    %3158 = vmatprep.subr.mxu0 0.0
    %3159 = vmatpush1.msra.mxu0 0.0
    %3160 = vmatprep.subr.mxu0 0.0
    %3161 = vmatpush1.msra.mxu0 0.0
    %3162 = vmatprep.subr.mxu0 0.0
    %3163 = vmatpush1.msra.mxu0 0.0
    %3164 = vmatprep.subr.mxu0 0.0
    %3165 = vmatpush1.msra.mxu0 0.0
    %3166 = vmatprep.subr.mxu0 0.0
    %3167 = vmatpush1.msra.mxu0 0.0
    %3168 = vmatprep.subr.mxu0 0.0
    %3169 = vmatpush1.msra.mxu0 0.0
    %3170 = vmatprep.subr.mxu0 0.0
    %3171 = vmatpush1.msra.mxu0 0.0
    %3172 = vmatprep.subr.mxu0 0.0
    %3173 = vmatpush1.msra.mxu0 0.0
    %3174 = vmatprep.subr.mxu0 0.0
    %3175 = vmatpush1.msra.mxu0 0.0
    %3176 = vmatprep.subr.mxu0 0.0
    %3177 = vmatpush1.msra.mxu0 0.0
    %3178 = vmatprep.mubr.f32.mxu0 0.0
    %3179 = vmatmul.mubr.f32.gmra.mrb[0].mxu0 %v3112
    %v3180 = vpop.f32.mrb[0].mxu0
    %v3181 = vadd.f32 %v3108, %v3180
    %v3182 = vpop.f32.mrb[0].mxu0
    %3183 = vdwg.mxu0
    %v3184 = vld [vmem:[%s8] sm:$0x1]
    %v3186 = vlaneseq
    %v3187 = vshrl.u32 %v3186, 7
    %v3188 = vsub.s32 0, %v3187
    %v3189 = vrot.slane %v3184, %v3188
    %v3191 = vadd.f32 %v3181, %v3189
    %v3192 = vxor.u32 %v3191, 2147483648
    %v3193 = vmul.f32 %v3192, 1.442695
    %v3194 = vpow.pop %v3193
    %v3195 = vadd.f32 %v3194, 1.0
    %v3196 = vrcp.pop %v3195
    %v3197 = vmul.f32 1.0, %v3196
    %v3198 = vtanh.pop %v3191
    %v3199 = vmul.f32 %v3197, %v2826
    %3201 = vrot.lane.b32.xlu0 %v3198, 64
    %v3202 = vpop.permute.xlu0 %3201
    %v3204 = vmul.f32 %v3197, %v3202
    %3206 = vrot.lane.b32.xlu0 %v3204, 32
    %v3207 = vpop.permute.xlu0 %3206
    %v3209 = vadd.f32 %v3199, %v3207
    %v3210 = vtanh.pop %v3209
    %3212 = vrot.lane.b32.xlu0 %v3210, 64
    %v3213 = vpop.permute.xlu0 %3212
    %v3215 = vmul.f32 %v3197, %v3213
    %v3216 = vld [vmem:[%s10] sm:$0xff]
    %v3217 = vld [vmem:[%s10 + $0x8] sm:$0xff]
    %v3218 = vld [vmem:[%s10 + $0x10] sm:$0xff]
    %v3219 = vld [vmem:[%s10 + $0x18] sm:$0xff]
    %v3220 = vld [vmem:[%s11] sm:$0x1]
    %v3222 = vlaneseq
    %v3223 = vshrl.u32 %v3222, 7
    %v3224 = vsub.s32 0, %v3223
    %v3225 = vrot.slane %v3220, %v3224
    %3228 = vrot.lane.b32.xlu0 %v3215, 32
    %v3229 = vpop.permute.xlu0 %3228
    %v3230 = vsel %vm55, %v3229, 0
    %3232 = vmatprep.subr.mxu0 0.0
    %3233 = vmatpush1.msra.mxu0 %v3216
    %3234 = vmatprep.subr.mxu0 0.0
    %3235 = vmatpush1.msra.mxu0 %v3217
    %3236 = vmatprep.subr.mxu0 0.0
    %3237 = vmatpush1.msra.mxu0 %v3218
    %3238 = vmatprep.subr.mxu0 0.0
    %3239 = vmatpush1.msra.mxu0 %v3219
    %3240 = vmatprep.subr.mxu0 0.0
    %3241 = vmatpush1.msra.mxu0 0.0
    %3242 = vmatprep.subr.mxu0 0.0
    %3243 = vmatpush1.msra.mxu0 0.0
    %3244 = vmatprep.subr.mxu0 0.0
    %3245 = vmatpush1.msra.mxu0 0.0
    %3246 = vmatprep.subr.mxu0 0.0
    %3247 = vmatpush1.msra.mxu0 0.0
    %3248 = vmatprep.subr.mxu0 0.0
    %3249 = vmatpush1.msra.mxu0 0.0
    %3250 = vmatprep.subr.mxu0 0.0
    %3251 = vmatpush1.msra.mxu0 0.0
    %3252 = vmatprep.subr.mxu0 0.0
    %3253 = vmatpush1.msra.mxu0 0.0
    %3254 = vmatprep.subr.mxu0 0.0
    %3255 = vmatpush1.msra.mxu0 0.0
    %3256 = vmatprep.subr.mxu0 0.0
    %3257 = vmatpush1.msra.mxu0 0.0
    %3258 = vmatprep.subr.mxu0 0.0
    %3259 = vmatpush1.msra.mxu0 0.0
    %3260 = vmatprep.subr.mxu0 0.0
    %3261 = vmatpush1.msra.mxu0 0.0
    %3262 = vmatprep.subr.mxu0 0.0
    %3263 = vmatpush1.msra.mxu0 0.0
    %3264 = vmatprep.subr.mxu0 0.0
    %3265 = vmatpush1.msra.mxu0 0.0
    %3266 = vmatprep.subr.mxu0 0.0
    %3267 = vmatpush1.msra.mxu0 0.0
    %3268 = vmatprep.subr.mxu0 0.0
    %3269 = vmatpush1.msra.mxu0 0.0
    %3270 = vmatprep.subr.mxu0 0.0
    %3271 = vmatpush1.msra.mxu0 0.0
    %3272 = vmatprep.subr.mxu0 0.0
    %3273 = vmatpush1.msra.mxu0 0.0
    %3274 = vmatprep.subr.mxu0 0.0
    %3275 = vmatpush1.msra.mxu0 0.0
    %3276 = vmatprep.subr.mxu0 0.0
    %3277 = vmatpush1.msra.mxu0 0.0
    %3278 = vmatprep.subr.mxu0 0.0
    %3279 = vmatpush1.msra.mxu0 0.0
    %3280 = vmatprep.subr.mxu0 0.0
    %3281 = vmatpush1.msra.mxu0 0.0
    %3282 = vmatprep.subr.mxu0 0.0
    %3283 = vmatpush1.msra.mxu0 0.0
    %3284 = vmatprep.subr.mxu0 0.0
    %3285 = vmatpush1.msra.mxu0 0.0
    %3286 = vmatprep.subr.mxu0 0.0
    %3287 = vmatpush1.msra.mxu0 0.0
    %3288 = vmatprep.subr.mxu0 0.0
    %3289 = vmatpush1.msra.mxu0 0.0
    %3290 = vmatprep.subr.mxu0 0.0
    %3291 = vmatpush1.msra.mxu0 0.0
    %3292 = vmatprep.subr.mxu0 0.0
    %3293 = vmatpush1.msra.mxu0 0.0
    %3294 = vmatprep.subr.mxu0 0.0
    %3295 = vmatpush1.msra.mxu0 0.0
    %3296 = vmatprep.mubr.f32.mxu0 0.0
    %3297 = vmatmul.mubr.f32.gmra.mrb[0].mxu0 %v3230
    %v3298 = vpop.f32.mrb[0].mxu0
    %v3299 = vadd.f32 %v3225, %v3298
    %v3300 = vpop.f32.mrb[0].mxu0
    %3301 = vdwg.mxu0
    %s3302 = scalar_lea.vmem [#allocation4], 48
    %3303 = vst.msk [vmem:[%s3302] sm:$0xff] %vm55, %v3299
    %v3304 = vsel %vm55, %v3299, -inf
    %3305 = vmax.xlane.f32.xlu0 %v3304
    %v3306 = vpop.xlane.xlu0 %3305
    %vm3307 = vcmp.eq.f32.partialorder %v3299, %v3306
    %v3308 = vsel %vm3307, %v1388, 32
    %v3309 = vsel %vm55, %v3308, 2147483647
    %v3310 = vand.u32 %v3309, 65535
    %v3311 = vshra.s32 %v3309, 16
    %v3312 = vcvt.s32.f32 %v3310
    %v3313 = vcvt.s32.f32 %v3311
    %3314 = vmin.xlane.f32.xlu0 %v3313
    %v3315 = vpop.xlane.xlu0 %3314
    %vm3316 = vcmp.eq.f32.partialorder %v3313, %v3315
    %v3317 = vsel %vm3316, %v3312, inf
    %3318 = vmin.xlane.f32.xlu0 %v3317
    %v3319 = vpop.xlane.xlu0 %3318
    %v3320 = vcvt.f32.s32 %v3319
    %v3321 = vcvt.f32.s32 %v3315
    %v3322 = vshll.u32 %v3321, 16
    %v3323 = vadd.s32 %v3322, %v3320
    %vm3324 = vcmp.eq.s32.totalorder %v1388, %v3323
    %v3325 = vsel %vm3324, 1, 0
    %v3326 = vcvt.s32.f32 %v3325
    %v3327 = vld [vmem:[%s9] sm:$0xff]
    %v3328 = vld [vmem:[%s9 + $0x8] sm:$0xff]
    %v3329 = vld [vmem:[%s9 + $0x10] sm:$0xff]
    %v3330 = vld [vmem:[%s9 + $0x18] sm:$0xff]
    %v3332 = vsel %vm55, %v3326, 0
    %3334 = vmatprep.subr.mxu0 0.0
    %3335 = vmatpush1.msra.mxu0 %v3327
    %3336 = vmatprep.subr.mxu0 0.0
    %3337 = vmatpush1.msra.mxu0 %v3328
    %3338 = vmatprep.subr.mxu0 0.0
    %3339 = vmatpush1.msra.mxu0 %v3329
    %3340 = vmatprep.subr.mxu0 0.0
    %3341 = vmatpush1.msra.mxu0 %v3330
    %3342 = vmatprep.subr.mxu0 0.0
    %3343 = vmatpush1.msra.mxu0 0.0
    %3344 = vmatprep.subr.mxu0 0.0
    %3345 = vmatpush1.msra.mxu0 0.0
    %3346 = vmatprep.subr.mxu0 0.0
    %3347 = vmatpush1.msra.mxu0 0.0
    %3348 = vmatprep.subr.mxu0 0.0
    %3349 = vmatpush1.msra.mxu0 0.0
    %3350 = vmatprep.subr.mxu0 0.0
    %3351 = vmatpush1.msra.mxu0 0.0
    %3352 = vmatprep.subr.mxu0 0.0
    %3353 = vmatpush1.msra.mxu0 0.0
    %3354 = vmatprep.subr.mxu0 0.0
    %3355 = vmatpush1.msra.mxu0 0.0
    %3356 = vmatprep.subr.mxu0 0.0
    %3357 = vmatpush1.msra.mxu0 0.0
    %3358 = vmatprep.subr.mxu0 0.0
    %3359 = vmatpush1.msra.mxu0 0.0
    %3360 = vmatprep.subr.mxu0 0.0
    %3361 = vmatpush1.msra.mxu0 0.0
    %3362 = vmatprep.subr.mxu0 0.0
    %3363 = vmatpush1.msra.mxu0 0.0
    %3364 = vmatprep.subr.mxu0 0.0
    %3365 = vmatpush1.msra.mxu0 0.0
    %3366 = vmatprep.subr.mxu0 0.0
    %3367 = vmatpush1.msra.mxu0 0.0
    %3368 = vmatprep.subr.mxu0 0.0
    %3369 = vmatpush1.msra.mxu0 0.0
    %3370 = vmatprep.subr.mxu0 0.0
    %3371 = vmatpush1.msra.mxu0 0.0
    %3372 = vmatprep.subr.mxu0 0.0
    %3373 = vmatpush1.msra.mxu0 0.0
    %3374 = vmatprep.subr.mxu0 0.0
    %3375 = vmatpush1.msra.mxu0 0.0
    %3376 = vmatprep.subr.mxu0 0.0
    %3377 = vmatpush1.msra.mxu0 0.0
    %3378 = vmatprep.subr.mxu0 0.0
    %3379 = vmatpush1.msra.mxu0 0.0
    %3380 = vmatprep.subr.mxu0 0.0
    %3381 = vmatpush1.msra.mxu0 0.0
    %3382 = vmatprep.subr.mxu0 0.0
    %3383 = vmatpush1.msra.mxu0 0.0
    %3384 = vmatprep.subr.mxu0 0.0
    %3385 = vmatpush1.msra.mxu0 0.0
    %3386 = vmatprep.subr.mxu0 0.0
    %3387 = vmatpush1.msra.mxu0 0.0
    %3388 = vmatprep.subr.mxu0 0.0
    %3389 = vmatpush1.msra.mxu0 0.0
    %3390 = vmatprep.subr.mxu0 0.0
    %3391 = vmatpush1.msra.mxu0 0.0
    %3392 = vmatprep.subr.mxu0 0.0
    %3393 = vmatpush1.msra.mxu0 0.0
    %3394 = vmatprep.subr.mxu0 0.0
    %3395 = vmatpush1.msra.mxu0 0.0
    %3396 = vmatprep.subr.mxu0 0.0
    %3397 = vmatpush1.msra.mxu0 0.0
    %3398 = vmatprep.mubr.f32.mxu0 0.0
    %3399 = vmatmul.mubr.f32.gmra.mrb[0].mxu0 %v3332
    %v3400 = vpop.f32.mrb[0].mxu0
    %v3401 = vadd.f32 0.0, %v3400
    %v3402 = vpop.f32.mrb[0].mxu0
    %3403 = vdwg.mxu0
    %s3404 = scalar_lea.vmem %s2, 48
    %v3405 = vld [vmem:[%s3404] sm:$0xff]
    %s3406 = sld [smem:[#allocation3 + $0x6]]
    %p3407 = scmp.gt.s32.totalorder %s3406, 0
    %s3408 = scalar_select %p3407, 1, 0
    %s3409 = scvt.s32.f32 %s3408
    %v3410 = vstv %s3409
    %v3411 = vmul.f32 %v3410, %v3405
    %s3412 = ssub.f32 1.0, %s3409
    %v3413 = vstv %s3412
    %v3414 = vmul.f32 %v3413, %v3401
    %v3415 = vadd.f32 %v3411, %v3414
    %v3416 = vld [vmem:[%s6] sm:$0xff]
    %v3417 = vld [vmem:[%s6 + $0x8] sm:$0xff]
    %v3418 = vld [vmem:[%s6 + $0x10] sm:$0xff]
    %v3419 = vld [vmem:[%s6 + $0x18] sm:$0xff]
    %v3420 = vld [vmem:[%s7] sm:$0xff]
    %v3421 = vld [vmem:[%s7 + $0x8] sm:$0xff]
    %v3422 = vld [vmem:[%s7 + $0x10] sm:$0xff]
    %v3423 = vld [vmem:[%s7 + $0x18] sm:$0xff]
    %3424 = vmatprep.subr.mxu0 0.0
    %3425 = vmatpush1.msra.mxu0 %v3420
    %3426 = vmatprep.subr.mxu0 0.0
    %3427 = vmatpush1.msra.mxu0 %v3421
    %3428 = vmatprep.subr.mxu0 0.0
    %3429 = vmatpush1.msra.mxu0 %v3422
    %3430 = vmatprep.subr.mxu0 0.0
    %3431 = vmatpush1.msra.mxu0 %v3423
    %3432 = vmatprep.subr.mxu0 0.0
    %3433 = vmatpush1.msra.mxu0 0.0
    %3434 = vmatprep.subr.mxu0 0.0
    %3435 = vmatpush1.msra.mxu0 0.0
    %3436 = vmatprep.subr.mxu0 0.0
    %3437 = vmatpush1.msra.mxu0 0.0
    %3438 = vmatprep.subr.mxu0 0.0
    %3439 = vmatpush1.msra.mxu0 0.0
    %3440 = vmatprep.subr.mxu0 0.0
    %3441 = vmatpush1.msra.mxu0 0.0
    %3442 = vmatprep.subr.mxu0 0.0
    %3443 = vmatpush1.msra.mxu0 0.0
    %3444 = vmatprep.subr.mxu0 0.0
    %3445 = vmatpush1.msra.mxu0 0.0
    %3446 = vmatprep.subr.mxu0 0.0
    %3447 = vmatpush1.msra.mxu0 0.0
    %3448 = vmatprep.subr.mxu0 0.0
    %3449 = vmatpush1.msra.mxu0 0.0
    %3450 = vmatprep.subr.mxu0 0.0
    %3451 = vmatpush1.msra.mxu0 0.0
    %3452 = vmatprep.subr.mxu0 0.0
    %3453 = vmatpush1.msra.mxu0 0.0
    %3454 = vmatprep.subr.mxu0 0.0
    %3455 = vmatpush1.msra.mxu0 0.0
    %3456 = vmatprep.subr.mxu0 0.0
    %3457 = vmatpush1.msra.mxu0 0.0
    %3458 = vmatprep.subr.mxu0 0.0
    %3459 = vmatpush1.msra.mxu0 0.0
    %3460 = vmatprep.subr.mxu0 0.0
    %3461 = vmatpush1.msra.mxu0 0.0
    %3462 = vmatprep.subr.mxu0 0.0
    %3463 = vmatpush1.msra.mxu0 0.0
    %3464 = vmatprep.subr.mxu0 0.0
    %3465 = vmatpush1.msra.mxu0 0.0
    %3466 = vmatprep.subr.mxu0 0.0
    %3467 = vmatpush1.msra.mxu0 0.0
    %3468 = vmatprep.subr.mxu0 0.0
    %3469 = vmatpush1.msra.mxu0 0.0
    %3470 = vmatprep.subr.mxu0 0.0
    %3471 = vmatpush1.msra.mxu0 0.0
    %3472 = vmatprep.subr.mxu0 0.0
    %3473 = vmatpush1.msra.mxu0 0.0
    %3474 = vmatprep.subr.mxu0 0.0
    %3475 = vmatpush1.msra.mxu0 0.0
    %3476 = vmatprep.subr.mxu0 0.0
    %3477 = vmatpush1.msra.mxu0 0.0
    %3478 = vmatprep.subr.mxu0 0.0
    %3479 = vmatpush1.msra.mxu0 0.0
    %3480 = vmatprep.subr.mxu0 0.0
    %3481 = vmatpush1.msra.mxu0 0.0
    %3482 = vmatprep.subr.mxu0 0.0
    %3483 = vmatpush1.msra.mxu0 0.0
    %3484 = vmatprep.subr.mxu0 0.0
    %3485 = vmatpush1.msra.mxu0 0.0
    %3486 = vmatprep.subr.mxu0 0.0
    %3487 = vmatpush1.msra.mxu0 0.0
    %3488 = vmatprep.mubr.f32.mxu0 0.0
    %3489 = vmatmul.mubr.f32.gmra.mrb[0].mxu0 %v3230
    %v3490 = vpop.f32.mrb[0].mxu0
    %v3491 = vadd.f32 0.0, %v3490
    %v3492 = vpop.f32.mrb[0].mxu0
    %3493 = vdwg.mxu0
    %v3495 = vsel %vm55, %v3415, 0
    %3497 = vmatprep.subr.mxu0 0.0
    %3498 = vmatpush1.msra.mxu0 %v3416
    %3499 = vmatprep.subr.mxu0 0.0
    %3500 = vmatpush1.msra.mxu0 %v3417
    %3501 = vmatprep.subr.mxu0 0.0
    %3502 = vmatpush1.msra.mxu0 %v3418
    %3503 = vmatprep.subr.mxu0 0.0
    %3504 = vmatpush1.msra.mxu0 %v3419
    %3505 = vmatprep.subr.mxu0 0.0
    %3506 = vmatpush1.msra.mxu0 0.0
    %3507 = vmatprep.subr.mxu0 0.0
    %3508 = vmatpush1.msra.mxu0 0.0
    %3509 = vmatprep.subr.mxu0 0.0
    %3510 = vmatpush1.msra.mxu0 0.0
    %3511 = vmatprep.subr.mxu0 0.0
    %3512 = vmatpush1.msra.mxu0 0.0
    %3513 = vmatprep.subr.mxu0 0.0
    %3514 = vmatpush1.msra.mxu0 0.0
    %3515 = vmatprep.subr.mxu0 0.0
    %3516 = vmatpush1.msra.mxu0 0.0
    %3517 = vmatprep.subr.mxu0 0.0
    %3518 = vmatpush1.msra.mxu0 0.0
    %3519 = vmatprep.subr.mxu0 0.0
    %3520 = vmatpush1.msra.mxu0 0.0
    %3521 = vmatprep.subr.mxu0 0.0
    %3522 = vmatpush1.msra.mxu0 0.0
    %3523 = vmatprep.subr.mxu0 0.0
    %3524 = vmatpush1.msra.mxu0 0.0
    %3525 = vmatprep.subr.mxu0 0.0
    %3526 = vmatpush1.msra.mxu0 0.0
    %3527 = vmatprep.subr.mxu0 0.0
    %3528 = vmatpush1.msra.mxu0 0.0
    %3529 = vmatprep.subr.mxu0 0.0
    %3530 = vmatpush1.msra.mxu0 0.0
    %3531 = vmatprep.subr.mxu0 0.0
    %3532 = vmatpush1.msra.mxu0 0.0
    %3533 = vmatprep.subr.mxu0 0.0
    %3534 = vmatpush1.msra.mxu0 0.0
    %3535 = vmatprep.subr.mxu0 0.0
    %3536 = vmatpush1.msra.mxu0 0.0
    %3537 = vmatprep.subr.mxu0 0.0
    %3538 = vmatpush1.msra.mxu0 0.0
    %3539 = vmatprep.subr.mxu0 0.0
    %3540 = vmatpush1.msra.mxu0 0.0
    %3541 = vmatprep.subr.mxu0 0.0
    %3542 = vmatpush1.msra.mxu0 0.0
    %3543 = vmatprep.subr.mxu0 0.0
    %3544 = vmatpush1.msra.mxu0 0.0
    %3545 = vmatprep.subr.mxu0 0.0
    %3546 = vmatpush1.msra.mxu0 0.0
    %3547 = vmatprep.subr.mxu0 0.0
    %3548 = vmatpush1.msra.mxu0 0.0
    %3549 = vmatprep.subr.mxu0 0.0
    %3550 = vmatpush1.msra.mxu0 0.0
    %3551 = vmatprep.subr.mxu0 0.0
    %3552 = vmatpush1.msra.mxu0 0.0
    %3553 = vmatprep.subr.mxu0 0.0
    %3554 = vmatpush1.msra.mxu0 0.0
    %3555 = vmatprep.subr.mxu0 0.0
    %3556 = vmatpush1.msra.mxu0 0.0
    %3557 = vmatprep.subr.mxu0 0.0
    %3558 = vmatpush1.msra.mxu0 0.0
    %3559 = vmatprep.subr.mxu0 0.0
    %3560 = vmatpush1.msra.mxu0 0.0
    %3561 = vmatprep.mubr.f32.mxu0 0.0
    %3562 = vmatmul.mubr.f32.gmra.mrb[0].mxu0 %v3495
    %v3563 = vpop.f32.mrb[0].mxu0
    %v3564 = vadd.f32 %v3491, %v3563
    %v3565 = vpop.f32.mrb[0].mxu0
    %3566 = vdwg.mxu0
    %v3567 = vld [vmem:[%s8] sm:$0x1]
    %v3569 = vlaneseq
    %v3570 = vshrl.u32 %v3569, 7
    %v3571 = vsub.s32 0, %v3570
    %v3572 = vrot.slane %v3567, %v3571
    %v3574 = vadd.f32 %v3564, %v3572
    %v3575 = vxor.u32 %v3574, 2147483648
    %v3576 = vmul.f32 %v3575, 1.442695
    %v3577 = vpow.pop %v3576
    %v3578 = vadd.f32 %v3577, 1.0
    %v3579 = vrcp.pop %v3578
    %v3580 = vmul.f32 1.0, %v3579
    %v3581 = vtanh.pop %v3574
    %v3582 = vmul.f32 %v3580, %v3209
    %3584 = vrot.lane.b32.xlu0 %v3581, 64
    %v3585 = vpop.permute.xlu0 %3584
    %v3587 = vmul.f32 %v3580, %v3585
    %3589 = vrot.lane.b32.xlu0 %v3587, 32
    %v3590 = vpop.permute.xlu0 %3589
    %v3592 = vadd.f32 %v3582, %v3590
    %v3593 = vtanh.pop %v3592
    %3595 = vrot.lane.b32.xlu0 %v3593, 64
    %v3596 = vpop.permute.xlu0 %3595
    %v3598 = vmul.f32 %v3580, %v3596
    %v3599 = vld [vmem:[%s10] sm:$0xff]
    %v3600 = vld [vmem:[%s10 + $0x8] sm:$0xff]
    %v3601 = vld [vmem:[%s10 + $0x10] sm:$0xff]
    %v3602 = vld [vmem:[%s10 + $0x18] sm:$0xff]
    %v3603 = vld [vmem:[%s11] sm:$0x1]
    %v3605 = vlaneseq
    %v3606 = vshrl.u32 %v3605, 7
    %v3607 = vsub.s32 0, %v3606
    %v3608 = vrot.slane %v3603, %v3607
    %3611 = vrot.lane.b32.xlu0 %v3598, 32
    %v3612 = vpop.permute.xlu0 %3611
    %v3613 = vsel %vm55, %v3612, 0
    %3615 = vmatprep.subr.mxu0 0.0
    %3616 = vmatpush1.msra.mxu0 %v3599
    %3617 = vmatprep.subr.mxu0 0.0
    %3618 = vmatpush1.msra.mxu0 %v3600
    %3619 = vmatprep.subr.mxu0 0.0
    %3620 = vmatpush1.msra.mxu0 %v3601
    %3621 = vmatprep.subr.mxu0 0.0
    %3622 = vmatpush1.msra.mxu0 %v3602
    %3623 = vmatprep.subr.mxu0 0.0
    %3624 = vmatpush1.msra.mxu0 0.0
    %3625 = vmatprep.subr.mxu0 0.0
    %3626 = vmatpush1.msra.mxu0 0.0
    %3627 = vmatprep.subr.mxu0 0.0
    %3628 = vmatpush1.msra.mxu0 0.0
    %3629 = vmatprep.subr.mxu0 0.0
    %3630 = vmatpush1.msra.mxu0 0.0
    %3631 = vmatprep.subr.mxu0 0.0
    %3632 = vmatpush1.msra.mxu0 0.0
    %3633 = vmatprep.subr.mxu0 0.0
    %3634 = vmatpush1.msra.mxu0 0.0
    %3635 = vmatprep.subr.mxu0 0.0
    %3636 = vmatpush1.msra.mxu0 0.0
    %3637 = vmatprep.subr.mxu0 0.0
    %3638 = vmatpush1.msra.mxu0 0.0
    %3639 = vmatprep.subr.mxu0 0.0
    %3640 = vmatpush1.msra.mxu0 0.0
    %3641 = vmatprep.subr.mxu0 0.0
    %3642 = vmatpush1.msra.mxu0 0.0
    %3643 = vmatprep.subr.mxu0 0.0
    %3644 = vmatpush1.msra.mxu0 0.0
    %3645 = vmatprep.subr.mxu0 0.0
    %3646 = vmatpush1.msra.mxu0 0.0
    %3647 = vmatprep.subr.mxu0 0.0
    %3648 = vmatpush1.msra.mxu0 0.0
    %3649 = vmatprep.subr.mxu0 0.0
    %3650 = vmatpush1.msra.mxu0 0.0
    %3651 = vmatprep.subr.mxu0 0.0
    %3652 = vmatpush1.msra.mxu0 0.0
    %3653 = vmatprep.subr.mxu0 0.0
    %3654 = vmatpush1.msra.mxu0 0.0
    %3655 = vmatprep.subr.mxu0 0.0
    %3656 = vmatpush1.msra.mxu0 0.0
    %3657 = vmatprep.subr.mxu0 0.0
    %3658 = vmatpush1.msra.mxu0 0.0
    %3659 = vmatprep.subr.mxu0 0.0
    %3660 = vmatpush1.msra.mxu0 0.0
    %3661 = vmatprep.subr.mxu0 0.0
    %3662 = vmatpush1.msra.mxu0 0.0
    %3663 = vmatprep.subr.mxu0 0.0
    %3664 = vmatpush1.msra.mxu0 0.0
    %3665 = vmatprep.subr.mxu0 0.0
    %3666 = vmatpush1.msra.mxu0 0.0
    %3667 = vmatprep.subr.mxu0 0.0
    %3668 = vmatpush1.msra.mxu0 0.0
    %3669 = vmatprep.subr.mxu0 0.0
    %3670 = vmatpush1.msra.mxu0 0.0
    %3671 = vmatprep.subr.mxu0 0.0
    %3672 = vmatpush1.msra.mxu0 0.0
    %3673 = vmatprep.subr.mxu0 0.0
    %3674 = vmatpush1.msra.mxu0 0.0
    %3675 = vmatprep.subr.mxu0 0.0
    %3676 = vmatpush1.msra.mxu0 0.0
    %3677 = vmatprep.subr.mxu0 0.0
    %3678 = vmatpush1.msra.mxu0 0.0
    %3679 = vmatprep.mubr.f32.mxu0 0.0
    %3680 = vmatmul.mubr.f32.gmra.mrb[0].mxu0 %v3613
    %v3681 = vpop.f32.mrb[0].mxu0
    %v3682 = vadd.f32 %v3608, %v3681
    %v3683 = vpop.f32.mrb[0].mxu0
    %3684 = vdwg.mxu0
    %s3685 = scalar_lea.vmem [#allocation4], 56
    %3686 = vst.msk [vmem:[%s3685] sm:$0xff] %vm55, %v3682
    // Predicated region
    $region46: #{_device_forward.1} parent=1 // pred_check
      _
    $region47: #{_device_forward.1} parent=1 // pred_check_branch
      %3688 = sbr.rel (0) target = $region49
    $region48: #{_device_forward.1} parent=1 // pred_region
      %s3690 = ssub.s32 1024, 1024
      %3691 = vsyncadd [#allocation5], %s3690
      %s3692 = sshll.u32 [#allocation4], 4
      %s3693 = int_to_ptr.vmem [resolvable:$true] %s3692
      %3698 = dma.vmem_to_hbm [thread:$0]  %s3693, 1024, %s12, [#allocation5], 128, 128, 8
    $region49: #{_device_forward.1} parent=1 // pred_fallthru
      _
    // Predicated region
    $region50: #{_device_forward.1} parent=1 // pred_check
      _
    $region51: #{_device_forward.1} parent=1 // pred_check_branch
      %3700 = sbr.rel (0) target = $region53
    $region52: #{_device_forward.1} parent=1 // pred_region
      %3701 = dma.done [#allocation5], 1024
    $region53: #{_device_forward.1} parent=1 // pred_fallthru
      _
    %3702 = vsyncpa [#allocation5], 1

</llo_original>
